<compile_context>
chip_gen: v7x
topology: tpu7x:2x2x1
jax: 0.10.0
libtpu: 0.0.40
codegen_flags: <defaults>
</compile_context>

<pallas_src>
import numpy as np

import jax
import jax.numpy as jnp
from jax import lax
from jax.experimental import pallas as pl
from jax.experimental.pallas import tpu as pltpu

# ---------------- configuration (small, consistent with the module) ---------
N_QUANTIZE = 32
N_AUX = 8
N_RESCH = 16
N_SKIPCH = 16
DILATION_DEPTH = 3
DILATION_REPEAT = 2
DILATIONS = [2 ** i for i in range(DILATION_DEPTH)] * DILATION_REPEAT
N_LAYERS = len(DILATIONS)

B = 2
T = 16
M = B * T


def _dot(a, w):
    return jnp.dot(a, w, preferred_element_type=jnp.float32)


# ---------------- fused Pallas kernel ----------------------------------------
def _fused_kernel(
    ids_ref, h_ref, cw_ref, cb_ref,                  # OneHot ids / aux / causal conv
    w_gf_ref, b_gf_ref,                              # merged gate|filter (per layer)
    w_sk_ref, b_sk_ref, w_re_ref, b_re_ref,          # skip / residual 1x1 (per layer)
    wp1_ref, bp1_ref, wp2_ref, bp2_ref,              # post-process
    o_ref,                                           # output logits (T, Q)
):
    t_blk = ids_ref.shape[0]

    # -- OneHot (x % depth) built in-kernel from the int ids (no HBM slab) ----
    lane = lax.broadcasted_iota(jnp.int32, (t_blk, N_QUANTIZE), 1)
    oh = (lane == ids_ref[...]).astype(jnp.float32)              # (T, Q)

    # -- causal / dilated shift within one batch: XLU roll + VPU row mask -----
    def shift(v, d):
        row = lax.broadcasted_iota(jnp.int32, v.shape, 0)
        return jnp.where(row >= d, pltpu.roll(v, shift=d, axis=0), 0.0)

    # -- causal input conv (kernel_size=2): both taps merged into one K=64 push
    x = _dot(jnp.concatenate([shift(oh, 1), oh], axis=-1), cw_ref[...]) + cb_ref[...]

    h = h_ref[...]                                               # (T, A)
    skip = jnp.zeros((t_blk, N_SKIPCH), jnp.float32)

    # -- residual layers, fully unrolled inside one kernel invocation ---------
    for li, d in enumerate(DILATIONS):
        xs = shift(x, d)                                         # dilated causal shift
        pre = (_dot(jnp.concatenate([xs, x, h], axis=-1), w_gf_ref[li])
               + b_gf_ref[li])                                   # (T, 2R), one MXU push
        z = jax.nn.sigmoid(pre[:, :N_RESCH]) * jnp.tanh(pre[:, N_RESCH:])
        skip = skip + _dot(z, w_sk_ref[li]) + b_sk_ref[li]
        x = x + _dot(z, w_re_ref[li]) + b_re_ref[li]

    # -- postprocess: relu -> conv_post_1 -> relu -> conv_post_2 --------------
    s = jnp.maximum(skip, 0.0)
    y = jnp.maximum(_dot(s, wp1_ref[...]) + bp1_ref[...], 0.0)
    o_ref[...] = _dot(y, wp2_ref[...]) + bp2_ref[...]


# ---------------- parameter init (deterministic, synthetic) -----------------
def _conv_taps(key, in_ch, out_ch, k_taps):
    kw, kb = jax.random.split(key)
    scale = 1.0 / np.sqrt(in_ch * k_taps)
    w = jax.random.normal(kw, (k_taps, in_ch, out_ch), jnp.float32) * scale
    b = jax.random.normal(kb, (1, out_ch), jnp.float32) * scale
    return [w[i] for i in range(k_taps)], b


def init_params(key):
    keys = iter(jax.random.split(key, 3 + 6 * N_LAYERS))
    params = {}

    (cw0, cw1), cb = _conv_taps(next(keys), N_QUANTIZE, N_RESCH, 2)
    params["causal"] = (cw0, cw1, cb)

    layers = []
    for _ in range(N_LAYERS):
        (wds0, wds1), bds = _conv_taps(next(keys), N_RESCH, N_RESCH, 2)
        (wdt0, wdt1), bdt = _conv_taps(next(keys), N_RESCH, N_RESCH, 2)
        (was,), bas = _conv_taps(next(keys), N_AUX, N_RESCH, 1)
        (wat,), bat = _conv_taps(next(keys), N_AUX, N_RESCH, 1)
        (wsk,), bsk = _conv_taps(next(keys), N_RESCH, N_SKIPCH, 1)
        (wre,), bre = _conv_taps(next(keys), N_RESCH, N_RESCH, 1)
        layers.append((wds0, wds1, bds, wdt0, wdt1, bdt,
                       was, bas, wat, bat, wsk, bsk, wre, bre))
    params["layers"] = layers

    (wp1,), bp1 = _conv_taps(next(keys), N_SKIPCH, N_SKIPCH, 1)
    (wp2,), bp2 = _conv_taps(next(keys), N_SKIPCH, N_QUANTIZE, 1)
    params["post"] = (wp1, bp1, wp2, bp2)
    return params


# ---------------- host-side weight stacking ----------------------------------
def _stack_layer_params(layers):
    """Merge gate|filter into one (2R+A, 2R) weight per layer; stack over layers."""
    w_gf, b_gf, w_sk, b_sk, w_re, b_re = [], [], [], [], [], []
    for (wds0, wds1, bds, wdt0, wdt1, bdt,
         was, bas, wat, bat, wsk, bsk, wre, bre) in layers:
        w0 = jnp.concatenate([wds0, wdt0], axis=1)               # (R, 2R) shifted tap
        w1 = jnp.concatenate([wds1, wdt1], axis=1)               # (R, 2R) current tap
        wa = jnp.concatenate([was, wat], axis=1)                 # (A, 2R)
        w_gf.append(jnp.concatenate([w0, w1, wa], axis=0))       # (2R+A, 2R)
        b_gf.append(jnp.concatenate([bds + bas, bdt + bat], 1))  # (1, 2R)
        w_sk.append(wsk); b_sk.append(bsk)
        w_re.append(wre); b_re.append(bre)
    return tuple(jnp.stack(a) for a in (w_gf, b_gf, w_sk, b_sk, w_re, b_re))


# ---------------- forward: one fused pallas_call ------------------------------
def wavenet_forward(x_ids, h, params):
    b, t = x_ids.shape
    m = b * t

    ids = (x_ids % N_QUANTIZE).astype(jnp.int32).reshape(m, 1)   # OneHot's x % depth
    h_flat = jnp.transpose(h, (0, 2, 1)).astype(jnp.float32).reshape(m, N_AUX)

    cw0, cw1, cb = params["causal"]
    cw = jnp.concatenate([cw0, cw1], axis=0)                     # (2Q, R): [shifted; current]
    w_gf, b_gf, w_sk, b_sk, w_re, b_re = _stack_layer_params(params["layers"])
    wp1, bp1, wp2, bp2 = params["post"]

    def batch2d(shape):
        return pl.BlockSpec(shape, lambda i: (i, 0))

    def const2d(shape):
        return pl.BlockSpec(shape, lambda i: (0, 0))

    def const3d(shape):
        return pl.BlockSpec(shape, lambda i: (0, 0, 0))

    logits = pl.pallas_call(
        _fused_kernel,
        out_shape=jax.ShapeDtypeStruct((m, N_QUANTIZE), jnp.float32),
        grid_spec=pltpu.PrefetchScalarGridSpec(
            num_scalar_prefetch=0,
            grid=(b,),                                           # batch axis only
            in_specs=[
                batch2d((t, 1)),                                 # ids
                batch2d((t, N_AUX)),                             # aux features
                const2d((2 * N_QUANTIZE, N_RESCH)),              # merged causal conv
                const2d((1, N_RESCH)),                           # causal bias
                const3d((N_LAYERS, 2 * N_RESCH + N_AUX, 2 * N_RESCH)),  # w_gf
                const3d((N_LAYERS, 1, 2 * N_RESCH)),                    # b_gf
                const3d((N_LAYERS, N_RESCH, N_SKIPCH)),                 # w_skip
                const3d((N_LAYERS, 1, N_SKIPCH)),                       # b_skip
                const3d((N_LAYERS, N_RESCH, N_RESCH)),                  # w_res
                const3d((N_LAYERS, 1, N_RESCH)),                        # b_res
                const2d((N_SKIPCH, N_SKIPCH)),                   # wp1
                const2d((1, N_SKIPCH)),                          # bp1
                const2d((N_SKIPCH, N_QUANTIZE)),                 # wp2
                const2d((1, N_QUANTIZE)),                        # bp2
            ],
            out_specs=pl.BlockSpec((t, N_QUANTIZE), lambda i: (i, 0)),
        ),
        compiler_params=pltpu.CompilerParams(
            dimension_semantics=("parallel",)),                  # 2nd TC on v7x
    )(ids, h_flat, cw, cb, w_gf, b_gf, w_sk, b_sk, w_re, b_re, wp1, bp1, wp2, bp2)

    return logits.reshape(b, t, N_QUANTIZE)


# ---------------- pure-JAX reference (for a sanity check) -------------------
def _shift_ref(x_btc, d):
    return jnp.pad(x_btc, ((0, 0), (d, 0), (0, 0)))[:, : x_btc.shape[1], :]


def wavenet_forward_ref(x_ids, h, params):
    x_oh = jax.nn.one_hot(x_ids % N_QUANTIZE, N_QUANTIZE, dtype=jnp.float32)
    h_btc = jnp.transpose(h, (0, 2, 1)).astype(jnp.float32)

    cw0, cw1, cb = params["causal"]
    out = _shift_ref(x_oh, 1) @ cw0 + x_oh @ cw1 + cb

    skip_sum = 0.0
    for layer, d in zip(params["layers"], DILATIONS):
        (wds0, wds1, bds, wdt0, wdt1, bdt,
         was, bas, wat, bat, wsk, bsk, wre, bre) = layer
        xs = _shift_ref(out, d)
        pre_s = xs @ wds0 + out @ wds1 + bds + h_btc @ was + bas
        pre_t = xs @ wdt0 + out @ wdt1 + bdt + h_btc @ wat + bat
        z = jax.nn.sigmoid(pre_s) * jnp.tanh(pre_t)
        skip_sum = skip_sum + z @ wsk + bsk
        out = z @ wre + bre + out

    wp1, bp1, wp2, bp2 = params["post"]
    y = jnp.maximum(jnp.maximum(skip_sum, 0.0) @ wp1 + bp1, 0.0)
    return y @ wp2 + bp2


# ---------------- main -------------------------------------------------------
if __name__ == "__main__":
    key = jax.random.PRNGKey(0)
    k_x, k_h, k_p = jax.random.split(key, 3)

    x_ids = jax.random.randint(k_x, (B, T), 0, N_QUANTIZE, dtype=jnp.int32)  # (B, T)
    h = jax.random.normal(k_h, (B, N_AUX, T), jnp.float32)                   # (B, n_aux, T)
    params = init_params(k_p)

    out = jax.block_until_ready(wavenet_forward(x_ids, h, params))
    ref = jax.block_until_ready(wavenet_forward_ref(x_ids, h, params))

    assert out.shape == (B, T, N_QUANTIZE)
    np.testing.assert_allclose(np.asarray(out), np.asarray(ref), rtol=1e-2, atol=1e-2)

    print("KERNEL_OK")
</pallas_src>

<mosaic_0001>
module attributes {stable_mosaic.version = 11 : i64} {
  func.func @_fused_kernel(%arg0: i32, %arg1: memref<16x1xi32, #tpu.memory_space<vmem>>, %arg2: memref<16x8xf32, #tpu.memory_space<vmem>>, %arg3: memref<64x16xf32, #tpu.memory_space<vmem>>, %arg4: memref<1x16xf32, #tpu.memory_space<vmem>>, %arg5: memref<6x40x32xf32, #tpu.memory_space<vmem>>, %arg6: memref<6x1x32xf32, #tpu.memory_space<vmem>>, %arg7: memref<6x16x16xf32, #tpu.memory_space<vmem>>, %arg8: memref<6x1x16xf32, #tpu.memory_space<vmem>>, %arg9: memref<6x16x16xf32, #tpu.memory_space<vmem>>, %arg10: memref<6x1x16xf32, #tpu.memory_space<vmem>>, %arg11: memref<16x16xf32, #tpu.memory_space<vmem>>, %arg12: memref<1x16xf32, #tpu.memory_space<vmem>>, %arg13: memref<16x32xf32, #tpu.memory_space<vmem>>, %arg14: memref<1x32xf32, #tpu.memory_space<vmem>>, %arg15: memref<16x32xf32, #tpu.memory_space<vmem>>) attributes {dimension_semantics = [#tpu.dimension_semantics<parallel>], iteration_bounds = array<i64: 2>, scalar_prefetch = 0 : i64, scratch_operands = 0 : i64, tpu.core_type = #tpu.core_type<tc>, window_params = [{transform_indices = @transform_0, window_bounds = array<i64: 16, 1>}, {transform_indices = @transform_1, window_bounds = array<i64: 16, 8>}, {pipeline_mode = #tpu.pipeline_mode<synchronous>, transform_indices = @transform_2, window_bounds = array<i64: 64, 16>}, {pipeline_mode = #tpu.pipeline_mode<synchronous>, transform_indices = @transform_3, window_bounds = array<i64: 1, 16>}, {pipeline_mode = #tpu.pipeline_mode<synchronous>, transform_indices = @transform_4, window_bounds = array<i64: 6, 40, 32>}, {pipeline_mode = #tpu.pipeline_mode<synchronous>, transform_indices = @transform_5, window_bounds = array<i64: 6, 1, 32>}, {pipeline_mode = #tpu.pipeline_mode<synchronous>, transform_indices = @transform_6, window_bounds = array<i64: 6, 16, 16>}, {pipeline_mode = #tpu.pipeline_mode<synchronous>, transform_indices = @transform_7, window_bounds = array<i64: 6, 1, 16>}, {pipeline_mode = #tpu.pipeline_mode<synchronous>, transform_indices = @transform_8, window_bounds = array<i64: 6, 16, 16>}, {pipeline_mode = #tpu.pipeline_mode<synchronous>, transform_indices = @transform_9, window_bounds = array<i64: 6, 1, 16>}, {pipeline_mode = #tpu.pipeline_mode<synchronous>, transform_indices = @transform_10, window_bounds = array<i64: 16, 16>}, {pipeline_mode = #tpu.pipeline_mode<synchronous>, transform_indices = @transform_11, window_bounds = array<i64: 1, 16>}, {pipeline_mode = #tpu.pipeline_mode<synchronous>, transform_indices = @transform_12, window_bounds = array<i64: 16, 32>}, {pipeline_mode = #tpu.pipeline_mode<synchronous>, transform_indices = @transform_13, window_bounds = array<i64: 1, 32>}, {transform_indices = @transform_14, window_bounds = array<i64: 16, 32>}]} {
    %0 = tpu.iota {dimensions = array<i32: 1>} : vector<16x32xi32>
    %c0 = arith.constant 0 : index
    %c0_0 = arith.constant 0 : index
    %1 = vector.load %arg1[%c0, %c0_0] : memref<16x1xi32, #tpu.memory_space<vmem>>, vector<16x1xi32>
    %2 = vector.broadcast %1 : vector<16x1xi32> to vector<16x32xi32>
    %3 = arith.cmpi eq, %0, %2 : vector<16x32xi32>
    %4 = arith.extui %3 : vector<16x32xi1> to vector<16x32xi32>
    %5 = arith.sitofp %4 : vector<16x32xi32> to vector<16x32xf32>
    %6 = tpu.iota {dimensions = array<i32: 0>} : vector<16x32xi32>
    %c1_i32 = arith.constant 1 : i32
    %7 = vector.broadcast %c1_i32 : i32 to vector<16x32xi32>
    %8 = arith.cmpi sge, %6, %7 : vector<16x32xi32>
    %c1_i32_1 = arith.constant 1 : i32
    %9 = tpu.dynamic_rotate %5 by %c1_i32_1 dim 0 : vector<16x32xf32>, i32 -> vector<16x32xf32>
    %cst = arith.constant 0.000000e+00 : f32
    %10 = vector.broadcast %cst : f32 to vector<16x32xf32>
    %11 = arith.select %8, %9, %10 : vector<16x32xi1>, vector<16x32xf32>
    %12 = tpu.concatenate %11, %5 in 1 : vector<16x32xf32>, vector<16x32xf32> -> vector<16x64xf32>
    %c0_2 = arith.constant 0 : index
    %c0_3 = arith.constant 0 : index
    %13 = vector.load %arg3[%c0_2, %c0_3] : memref<64x16xf32, #tpu.memory_space<vmem>>, vector<64x16xf32>
    %cst_4 = arith.constant dense<0.000000e+00> : vector<16x16xf32>
    %14 = tpu.matmul %12, %13, %cst_4 {dimension_numbers = #tpu.dot_dimension_numbers<[1], [0], [0], [1], [0, 0, 1, 1], [], []>} : vector<16x64xf32>, vector<64x16xf32>, vector<16x16xf32> -> vector<16x16xf32>
    %c0_5 = arith.constant 0 : index
    %c0_6 = arith.constant 0 : index
    %15 = vector.load %arg4[%c0_5, %c0_6] : memref<1x16xf32, #tpu.memory_space<vmem>>, vector<1x16xf32>
    %16 = vector.broadcast %15 : vector<1x16xf32> to vector<16x16xf32>
    %17 = arith.addf %14, %16 : vector<16x16xf32>
    %c0_7 = arith.constant 0 : index
    %c0_8 = arith.constant 0 : index
    %18 = vector.load %arg2[%c0_7, %c0_8] : memref<16x8xf32, #tpu.memory_space<vmem>>, vector<16x8xf32>
    %cst_9 = arith.constant 0.000000e+00 : f32
    %19 = vector.broadcast %cst_9 : f32 to vector<16x16xf32>
    %20 = tpu.iota {dimensions = array<i32: 0>} : vector<16x16xi32>
    %c1_i32_10 = arith.constant 1 : i32
    %21 = vector.broadcast %c1_i32_10 : i32 to vector<16x16xi32>
    %22 = arith.cmpi sge, %20, %21 : vector<16x16xi32>
    %c1_i32_11 = arith.constant 1 : i32
    %23 = tpu.dynamic_rotate %17 by %c1_i32_11 dim 0 : vector<16x16xf32>, i32 -> vector<16x16xf32>
    %cst_12 = arith.constant 0.000000e+00 : f32
    %24 = vector.broadcast %cst_12 : f32 to vector<16x16xf32>
    %25 = arith.select %22, %23, %24 : vector<16x16xi1>, vector<16x16xf32>
    %26 = tpu.concatenate %25, %17, %18 in 1 : vector<16x16xf32>, vector<16x16xf32>, vector<16x8xf32> -> vector<16x40xf32>
    %c0_13 = arith.constant 0 : index
    %c0_14 = arith.constant 0 : index
    %c0_15 = arith.constant 0 : index
    %27 = vector.load %arg5[%c0_13, %c0_14, %c0_15] : memref<6x40x32xf32, #tpu.memory_space<vmem>>, vector<1x40x32xf32>
    %28 = vector.shape_cast %27 : vector<1x40x32xf32> to vector<40x32xf32>
    %cst_16 = arith.constant dense<0.000000e+00> : vector<16x32xf32>
    %29 = tpu.matmul %26, %28, %cst_16 {dimension_numbers = #tpu.dot_dimension_numbers<[1], [0], [0], [1], [0, 0, 1, 1], [], []>} : vector<16x40xf32>, vector<40x32xf32>, vector<16x32xf32> -> vector<16x32xf32>
    %c0_17 = arith.constant 0 : index
    %c0_18 = arith.constant 0 : index
    %c0_19 = arith.constant 0 : index
    %30 = vector.load %arg6[%c0_17, %c0_18, %c0_19] : memref<6x1x32xf32, #tpu.memory_space<vmem>>, vector<1x1x32xf32>
    %31 = vector.shape_cast %30 : vector<1x1x32xf32> to vector<1x32xf32>
    %32 = vector.broadcast %31 : vector<1x32xf32> to vector<16x32xf32>
    %33 = arith.addf %29, %32 : vector<16x32xf32>
    %34 = vector.extract_strided_slice %33 {offsets = [0, 0], sizes = [16, 16], strides = [1, 1]} : vector<16x32xf32> to vector<16x16xf32>
    %35 = arith.negf %34 : vector<16x16xf32>
    %36 = math.exp %35 : vector<16x16xf32>
    %cst_20 = arith.constant 1.000000e+00 : f32
    %37 = vector.broadcast %cst_20 : f32 to vector<16x16xf32>
    %38 = arith.addf %37, %36 : vector<16x16xf32>
    %39 = arith.divf %37, %38 : vector<16x16xf32>
    %40 = vector.extract_strided_slice %33 {offsets = [0, 16], sizes = [16, 16], strides = [1, 1]} : vector<16x32xf32> to vector<16x16xf32>
    %41 = math.tanh %40 : vector<16x16xf32>
    %42 = arith.mulf %39, %41 : vector<16x16xf32>
    %c0_21 = arith.constant 0 : index
    %c0_22 = arith.constant 0 : index
    %c0_23 = arith.constant 0 : index
    %43 = vector.load %arg7[%c0_21, %c0_22, %c0_23] : memref<6x16x16xf32, #tpu.memory_space<vmem>>, vector<1x16x16xf32>
    %44 = vector.shape_cast %43 : vector<1x16x16xf32> to vector<16x16xf32>
    %cst_24 = arith.constant dense<0.000000e+00> : vector<16x16xf32>
    %45 = tpu.matmul %42, %44, %cst_24 {dimension_numbers = #tpu.dot_dimension_numbers<[1], [0], [0], [1], [0, 0, 1, 1], [], []>} : vector<16x16xf32>, vector<16x16xf32>, vector<16x16xf32> -> vector<16x16xf32>
    %46 = arith.addf %19, %45 : vector<16x16xf32>
    %c0_25 = arith.constant 0 : index
    %c0_26 = arith.constant 0 : index
    %c0_27 = arith.constant 0 : index
    %47 = vector.load %arg8[%c0_25, %c0_26, %c0_27] : memref<6x1x16xf32, #tpu.memory_space<vmem>>, vector<1x1x16xf32>
    %48 = vector.shape_cast %47 : vector<1x1x16xf32> to vector<1x16xf32>
    %49 = vector.broadcast %48 : vector<1x16xf32> to vector<16x16xf32>
    %50 = arith.addf %46, %49 : vector<16x16xf32>
    %c0_28 = arith.constant 0 : index
    %c0_29 = arith.constant 0 : index
    %c0_30 = arith.constant 0 : index
    %51 = vector.load %arg9[%c0_28, %c0_29, %c0_30] : memref<6x16x16xf32, #tpu.memory_space<vmem>>, vector<1x16x16xf32>
    %52 = vector.shape_cast %51 : vector<1x16x16xf32> to vector<16x16xf32>
    %cst_31 = arith.constant dense<0.000000e+00> : vector<16x16xf32>
    %53 = tpu.matmul %42, %52, %cst_31 {dimension_numbers = #tpu.dot_dimension_numbers<[1], [0], [0], [1], [0, 0, 1, 1], [], []>} : vector<16x16xf32>, vector<16x16xf32>, vector<16x16xf32> -> vector<16x16xf32>
    %54 = arith.addf %17, %53 : vector<16x16xf32>
    %c0_32 = arith.constant 0 : index
    %c0_33 = arith.constant 0 : index
    %c0_34 = arith.constant 0 : index
    %55 = vector.load %arg10[%c0_32, %c0_33, %c0_34] : memref<6x1x16xf32, #tpu.memory_space<vmem>>, vector<1x1x16xf32>
    %56 = vector.shape_cast %55 : vector<1x1x16xf32> to vector<1x16xf32>
    %57 = vector.broadcast %56 : vector<1x16xf32> to vector<16x16xf32>
    %58 = arith.addf %54, %57 : vector<16x16xf32>
    %59 = tpu.iota {dimensions = array<i32: 0>} : vector<16x16xi32>
    %c2_i32 = arith.constant 2 : i32
    %60 = vector.broadcast %c2_i32 : i32 to vector<16x16xi32>
    %61 = arith.cmpi sge, %59, %60 : vector<16x16xi32>
    %c2_i32_35 = arith.constant 2 : i32
    %62 = tpu.dynamic_rotate %58 by %c2_i32_35 dim 0 : vector<16x16xf32>, i32 -> vector<16x16xf32>
    %cst_36 = arith.constant 0.000000e+00 : f32
    %63 = vector.broadcast %cst_36 : f32 to vector<16x16xf32>
    %64 = arith.select %61, %62, %63 : vector<16x16xi1>, vector<16x16xf32>
    %65 = tpu.concatenate %64, %58, %18 in 1 : vector<16x16xf32>, vector<16x16xf32>, vector<16x8xf32> -> vector<16x40xf32>
    %c1 = arith.constant 1 : index
    %c0_37 = arith.constant 0 : index
    %c0_38 = arith.constant 0 : index
    %66 = vector.load %arg5[%c1, %c0_37, %c0_38] : memref<6x40x32xf32, #tpu.memory_space<vmem>>, vector<1x40x32xf32>
    %67 = vector.shape_cast %66 : vector<1x40x32xf32> to vector<40x32xf32>
    %cst_39 = arith.constant dense<0.000000e+00> : vector<16x32xf32>
    %68 = tpu.matmul %65, %67, %cst_39 {dimension_numbers = #tpu.dot_dimension_numbers<[1], [0], [0], [1], [0, 0, 1, 1], [], []>} : vector<16x40xf32>, vector<40x32xf32>, vector<16x32xf32> -> vector<16x32xf32>
    %c1_40 = arith.constant 1 : index
    %c0_41 = arith.constant 0 : index
    %c0_42 = arith.constant 0 : index
    %69 = vector.load %arg6[%c1_40, %c0_41, %c0_42] : memref<6x1x32xf32, #tpu.memory_space<vmem>>, vector<1x1x32xf32>
    %70 = vector.shape_cast %69 : vector<1x1x32xf32> to vector<1x32xf32>
    %71 = vector.broadcast %70 : vector<1x32xf32> to vector<16x32xf32>
    %72 = arith.addf %68, %71 : vector<16x32xf32>
    %73 = vector.extract_strided_slice %72 {offsets = [0, 0], sizes = [16, 16], strides = [1, 1]} : vector<16x32xf32> to vector<16x16xf32>
    %74 = arith.negf %73 : vector<16x16xf32>
    %75 = math.exp %74 : vector<16x16xf32>
    %cst_43 = arith.constant 1.000000e+00 : f32
    %76 = vector.broadcast %cst_43 : f32 to vector<16x16xf32>
    %77 = arith.addf %76, %75 : vector<16x16xf32>
    %78 = arith.divf %76, %77 : vector<16x16xf32>
    %79 = vector.extract_strided_slice %72 {offsets = [0, 16], sizes = [16, 16], strides = [1, 1]} : vector<16x32xf32> to vector<16x16xf32>
    %80 = math.tanh %79 : vector<16x16xf32>
    %81 = arith.mulf %78, %80 : vector<16x16xf32>
    %c1_44 = arith.constant 1 : index
    %c0_45 = arith.constant 0 : index
    %c0_46 = arith.constant 0 : index
    %82 = vector.load %arg7[%c1_44, %c0_45, %c0_46] : memref<6x16x16xf32, #tpu.memory_space<vmem>>, vector<1x16x16xf32>
    %83 = vector.shape_cast %82 : vector<1x16x16xf32> to vector<16x16xf32>
    %cst_47 = arith.constant dense<0.000000e+00> : vector<16x16xf32>
    %84 = tpu.matmul %81, %83, %cst_47 {dimension_numbers = #tpu.dot_dimension_numbers<[1], [0], [0], [1], [0, 0, 1, 1], [], []>} : vector<16x16xf32>, vector<16x16xf32>, vector<16x16xf32> -> vector<16x16xf32>
    %85 = arith.addf %50, %84 : vector<16x16xf32>
    %c1_48 = arith.constant 1 : index
    %c0_49 = arith.constant 0 : index
    %c0_50 = arith.constant 0 : index
    %86 = vector.load %arg8[%c1_48, %c0_49, %c0_50] : memref<6x1x16xf32, #tpu.memory_space<vmem>>, vector<1x1x16xf32>
    %87 = vector.shape_cast %86 : vector<1x1x16xf32> to vector<1x16xf32>
    %88 = vector.broadcast %87 : vector<1x16xf32> to vector<16x16xf32>
    %89 = arith.addf %85, %88 : vector<16x16xf32>
    %c1_51 = arith.constant 1 : index
    %c0_52 = arith.constant 0 : index
    %c0_53 = arith.constant 0 : index
    %90 = vector.load %arg9[%c1_51, %c0_52, %c0_53] : memref<6x16x16xf32, #tpu.memory_space<vmem>>, vector<1x16x16xf32>
    %91 = vector.shape_cast %90 : vector<1x16x16xf32> to vector<16x16xf32>
    %cst_54 = arith.constant dense<0.000000e+00> : vector<16x16xf32>
    %92 = tpu.matmul %81, %91, %cst_54 {dimension_numbers = #tpu.dot_dimension_numbers<[1], [0], [0], [1], [0, 0, 1, 1], [], []>} : vector<16x16xf32>, vector<16x16xf32>, vector<16x16xf32> -> vector<16x16xf32>
    %93 = arith.addf %58, %92 : vector<16x16xf32>
    %c1_55 = arith.constant 1 : index
    %c0_56 = arith.constant 0 : index
    %c0_57 = arith.constant 0 : index
    %94 = vector.load %arg10[%c1_55, %c0_56, %c0_57] : memref<6x1x16xf32, #tpu.memory_space<vmem>>, vector<1x1x16xf32>
    %95 = vector.shape_cast %94 : vector<1x1x16xf32> to vector<1x16xf32>
    %96 = vector.broadcast %95 : vector<1x16xf32> to vector<16x16xf32>
    %97 = arith.addf %93, %96 : vector<16x16xf32>
    %98 = tpu.iota {dimensions = array<i32: 0>} : vector<16x16xi32>
    %c4_i32 = arith.constant 4 : i32
    %99 = vector.broadcast %c4_i32 : i32 to vector<16x16xi32>
    %100 = arith.cmpi sge, %98, %99 : vector<16x16xi32>
    %c4_i32_58 = arith.constant 4 : i32
    %101 = tpu.dynamic_rotate %97 by %c4_i32_58 dim 0 : vector<16x16xf32>, i32 -> vector<16x16xf32>
    %cst_59 = arith.constant 0.000000e+00 : f32
    %102 = vector.broadcast %cst_59 : f32 to vector<16x16xf32>
    %103 = arith.select %100, %101, %102 : vector<16x16xi1>, vector<16x16xf32>
    %104 = tpu.concatenate %103, %97, %18 in 1 : vector<16x16xf32>, vector<16x16xf32>, vector<16x8xf32> -> vector<16x40xf32>
    %c2 = arith.constant 2 : index
    %c0_60 = arith.constant 0 : index
    %c0_61 = arith.constant 0 : index
    %105 = vector.load %arg5[%c2, %c0_60, %c0_61] : memref<6x40x32xf32, #tpu.memory_space<vmem>>, vector<1x40x32xf32>
    %106 = vector.shape_cast %105 : vector<1x40x32xf32> to vector<40x32xf32>
    %cst_62 = arith.constant dense<0.000000e+00> : vector<16x32xf32>
    %107 = tpu.matmul %104, %106, %cst_62 {dimension_numbers = #tpu.dot_dimension_numbers<[1], [0], [0], [1], [0, 0, 1, 1], [], []>} : vector<16x40xf32>, vector<40x32xf32>, vector<16x32xf32> -> vector<16x32xf32>
    %c2_63 = arith.constant 2 : index
    %c0_64 = arith.constant 0 : index
    %c0_65 = arith.constant 0 : index
    %108 = vector.load %arg6[%c2_63, %c0_64, %c0_65] : memref<6x1x32xf32, #tpu.memory_space<vmem>>, vector<1x1x32xf32>
    %109 = vector.shape_cast %108 : vector<1x1x32xf32> to vector<1x32xf32>
    %110 = vector.broadcast %109 : vector<1x32xf32> to vector<16x32xf32>
    %111 = arith.addf %107, %110 : vector<16x32xf32>
    %112 = vector.extract_strided_slice %111 {offsets = [0, 0], sizes = [16, 16], strides = [1, 1]} : vector<16x32xf32> to vector<16x16xf32>
    %113 = arith.negf %112 : vector<16x16xf32>
    %114 = math.exp %113 : vector<16x16xf32>
    %cst_66 = arith.constant 1.000000e+00 : f32
    %115 = vector.broadcast %cst_66 : f32 to vector<16x16xf32>
    %116 = arith.addf %115, %114 : vector<16x16xf32>
    %117 = arith.divf %115, %116 : vector<16x16xf32>
    %118 = vector.extract_strided_slice %111 {offsets = [0, 16], sizes = [16, 16], strides = [1, 1]} : vector<16x32xf32> to vector<16x16xf32>
    %119 = math.tanh %118 : vector<16x16xf32>
    %120 = arith.mulf %117, %119 : vector<16x16xf32>
    %c2_67 = arith.constant 2 : index
    %c0_68 = arith.constant 0 : index
    %c0_69 = arith.constant 0 : index
    %121 = vector.load %arg7[%c2_67, %c0_68, %c0_69] : memref<6x16x16xf32, #tpu.memory_space<vmem>>, vector<1x16x16xf32>
    %122 = vector.shape_cast %121 : vector<1x16x16xf32> to vector<16x16xf32>
    %cst_70 = arith.constant dense<0.000000e+00> : vector<16x16xf32>
    %123 = tpu.matmul %120, %122, %cst_70 {dimension_numbers = #tpu.dot_dimension_numbers<[1], [0], [0], [1], [0, 0, 1, 1], [], []>} : vector<16x16xf32>, vector<16x16xf32>, vector<16x16xf32> -> vector<16x16xf32>
    %124 = arith.addf %89, %123 : vector<16x16xf32>
    %c2_71 = arith.constant 2 : index
    %c0_72 = arith.constant 0 : index
    %c0_73 = arith.constant 0 : index
    %125 = vector.load %arg8[%c2_71, %c0_72, %c0_73] : memref<6x1x16xf32, #tpu.memory_space<vmem>>, vector<1x1x16xf32>
    %126 = vector.shape_cast %125 : vector<1x1x16xf32> to vector<1x16xf32>
    %127 = vector.broadcast %126 : vector<1x16xf32> to vector<16x16xf32>
    %128 = arith.addf %124, %127 : vector<16x16xf32>
    %c2_74 = arith.constant 2 : index
    %c0_75 = arith.constant 0 : index
    %c0_76 = arith.constant 0 : index
    %129 = vector.load %arg9[%c2_74, %c0_75, %c0_76] : memref<6x16x16xf32, #tpu.memory_space<vmem>>, vector<1x16x16xf32>
    %130 = vector.shape_cast %129 : vector<1x16x16xf32> to vector<16x16xf32>
    %cst_77 = arith.constant dense<0.000000e+00> : vector<16x16xf32>
    %131 = tpu.matmul %120, %130, %cst_77 {dimension_numbers = #tpu.dot_dimension_numbers<[1], [0], [0], [1], [0, 0, 1, 1], [], []>} : vector<16x16xf32>, vector<16x16xf32>, vector<16x16xf32> -> vector<16x16xf32>
    %132 = arith.addf %97, %131 : vector<16x16xf32>
    %c2_78 = arith.constant 2 : index
    %c0_79 = arith.constant 0 : index
    %c0_80 = arith.constant 0 : index
    %133 = vector.load %arg10[%c2_78, %c0_79, %c0_80] : memref<6x1x16xf32, #tpu.memory_space<vmem>>, vector<1x1x16xf32>
    %134 = vector.shape_cast %133 : vector<1x1x16xf32> to vector<1x16xf32>
    %135 = vector.broadcast %134 : vector<1x16xf32> to vector<16x16xf32>
    %136 = arith.addf %132, %135 : vector<16x16xf32>
    %137 = tpu.iota {dimensions = array<i32: 0>} : vector<16x16xi32>
    %c1_i32_81 = arith.constant 1 : i32
    %138 = vector.broadcast %c1_i32_81 : i32 to vector<16x16xi32>
    %139 = arith.cmpi sge, %137, %138 : vector<16x16xi32>
    %c1_i32_82 = arith.constant 1 : i32
    %140 = tpu.dynamic_rotate %136 by %c1_i32_82 dim 0 : vector<16x16xf32>, i32 -> vector<16x16xf32>
    %cst_83 = arith.constant 0.000000e+00 : f32
    %141 = vector.broadcast %cst_83 : f32 to vector<16x16xf32>
    %142 = arith.select %139, %140, %141 : vector<16x16xi1>, vector<16x16xf32>
    %143 = tpu.concatenate %142, %136, %18 in 1 : vector<16x16xf32>, vector<16x16xf32>, vector<16x8xf32> -> vector<16x40xf32>
    %c3 = arith.constant 3 : index
    %c0_84 = arith.constant 0 : index
    %c0_85 = arith.constant 0 : index
    %144 = vector.load %arg5[%c3, %c0_84, %c0_85] : memref<6x40x32xf32, #tpu.memory_space<vmem>>, vector<1x40x32xf32>
    %145 = vector.shape_cast %144 : vector<1x40x32xf32> to vector<40x32xf32>
    %cst_86 = arith.constant dense<0.000000e+00> : vector<16x32xf32>
    %146 = tpu.matmul %143, %145, %cst_86 {dimension_numbers = #tpu.dot_dimension_numbers<[1], [0], [0], [1], [0, 0, 1, 1], [], []>} : vector<16x40xf32>, vector<40x32xf32>, vector<16x32xf32> -> vector<16x32xf32>
    %c3_87 = arith.constant 3 : index
    %c0_88 = arith.constant 0 : index
    %c0_89 = arith.constant 0 : index
    %147 = vector.load %arg6[%c3_87, %c0_88, %c0_89] : memref<6x1x32xf32, #tpu.memory_space<vmem>>, vector<1x1x32xf32>
    %148 = vector.shape_cast %147 : vector<1x1x32xf32> to vector<1x32xf32>
    %149 = vector.broadcast %148 : vector<1x32xf32> to vector<16x32xf32>
    %150 = arith.addf %146, %149 : vector<16x32xf32>
    %151 = vector.extract_strided_slice %150 {offsets = [0, 0], sizes = [16, 16], strides = [1, 1]} : vector<16x32xf32> to vector<16x16xf32>
    %152 = arith.negf %151 : vector<16x16xf32>
    %153 = math.exp %152 : vector<16x16xf32>
    %cst_90 = arith.constant 1.000000e+00 : f32
    %154 = vector.broadcast %cst_90 : f32 to vector<16x16xf32>
    %155 = arith.addf %154, %153 : vector<16x16xf32>
    %156 = arith.divf %154, %155 : vector<16x16xf32>
    %157 = vector.extract_strided_slice %150 {offsets = [0, 16], sizes = [16, 16], strides = [1, 1]} : vector<16x32xf32> to vector<16x16xf32>
    %158 = math.tanh %157 : vector<16x16xf32>
    %159 = arith.mulf %156, %158 : vector<16x16xf32>
    %c3_91 = arith.constant 3 : index
    %c0_92 = arith.constant 0 : index
    %c0_93 = arith.constant 0 : index
    %160 = vector.load %arg7[%c3_91, %c0_92, %c0_93] : memref<6x16x16xf32, #tpu.memory_space<vmem>>, vector<1x16x16xf32>
    %161 = vector.shape_cast %160 : vector<1x16x16xf32> to vector<16x16xf32>
    %cst_94 = arith.constant dense<0.000000e+00> : vector<16x16xf32>
    %162 = tpu.matmul %159, %161, %cst_94 {dimension_numbers = #tpu.dot_dimension_numbers<[1], [0], [0], [1], [0, 0, 1, 1], [], []>} : vector<16x16xf32>, vector<16x16xf32>, vector<16x16xf32> -> vector<16x16xf32>
    %163 = arith.addf %128, %162 : vector<16x16xf32>
    %c3_95 = arith.constant 3 : index
    %c0_96 = arith.constant 0 : index
    %c0_97 = arith.constant 0 : index
    %164 = vector.load %arg8[%c3_95, %c0_96, %c0_97] : memref<6x1x16xf32, #tpu.memory_space<vmem>>, vector<1x1x16xf32>
    %165 = vector.shape_cast %164 : vector<1x1x16xf32> to vector<1x16xf32>
    %166 = vector.broadcast %165 : vector<1x16xf32> to vector<16x16xf32>
    %167 = arith.addf %163, %166 : vector<16x16xf32>
    %c3_98 = arith.constant 3 : index
    %c0_99 = arith.constant 0 : index
    %c0_100 = arith.constant 0 : index
    %168 = vector.load %arg9[%c3_98, %c0_99, %c0_100] : memref<6x16x16xf32, #tpu.memory_space<vmem>>, vector<1x16x16xf32>
    %169 = vector.shape_cast %168 : vector<1x16x16xf32> to vector<16x16xf32>
    %cst_101 = arith.constant dense<0.000000e+00> : vector<16x16xf32>
    %170 = tpu.matmul %159, %169, %cst_101 {dimension_numbers = #tpu.dot_dimension_numbers<[1], [0], [0], [1], [0, 0, 1, 1], [], []>} : vector<16x16xf32>, vector<16x16xf32>, vector<16x16xf32> -> vector<16x16xf32>
    %171 = arith.addf %136, %170 : vector<16x16xf32>
    %c3_102 = arith.constant 3 : index
    %c0_103 = arith.constant 0 : index
    %c0_104 = arith.constant 0 : index
    %172 = vector.load %arg10[%c3_102, %c0_103, %c0_104] : memref<6x1x16xf32, #tpu.memory_space<vmem>>, vector<1x1x16xf32>
    %173 = vector.shape_cast %172 : vector<1x1x16xf32> to vector<1x16xf32>
    %174 = vector.broadcast %173 : vector<1x16xf32> to vector<16x16xf32>
    %175 = arith.addf %171, %174 : vector<16x16xf32>
    %176 = tpu.iota {dimensions = array<i32: 0>} : vector<16x16xi32>
    %c2_i32_105 = arith.constant 2 : i32
    %177 = vector.broadcast %c2_i32_105 : i32 to vector<16x16xi32>
    %178 = arith.cmpi sge, %176, %177 : vector<16x16xi32>
    %c2_i32_106 = arith.constant 2 : i32
    %179 = tpu.dynamic_rotate %175 by %c2_i32_106 dim 0 : vector<16x16xf32>, i32 -> vector<16x16xf32>
    %cst_107 = arith.constant 0.000000e+00 : f32
    %180 = vector.broadcast %cst_107 : f32 to vector<16x16xf32>
    %181 = arith.select %178, %179, %180 : vector<16x16xi1>, vector<16x16xf32>
    %182 = tpu.concatenate %181, %175, %18 in 1 : vector<16x16xf32>, vector<16x16xf32>, vector<16x8xf32> -> vector<16x40xf32>
    %c4 = arith.constant 4 : index
    %c0_108 = arith.constant 0 : index
    %c0_109 = arith.constant 0 : index
    %183 = vector.load %arg5[%c4, %c0_108, %c0_109] : memref<6x40x32xf32, #tpu.memory_space<vmem>>, vector<1x40x32xf32>
    %184 = vector.shape_cast %183 : vector<1x40x32xf32> to vector<40x32xf32>
    %cst_110 = arith.constant dense<0.000000e+00> : vector<16x32xf32>
    %185 = tpu.matmul %182, %184, %cst_110 {dimension_numbers = #tpu.dot_dimension_numbers<[1], [0], [0], [1], [0, 0, 1, 1], [], []>} : vector<16x40xf32>, vector<40x32xf32>, vector<16x32xf32> -> vector<16x32xf32>
    %c4_111 = arith.constant 4 : index
    %c0_112 = arith.constant 0 : index
    %c0_113 = arith.constant 0 : index
    %186 = vector.load %arg6[%c4_111, %c0_112, %c0_113] : memref<6x1x32xf32, #tpu.memory_space<vmem>>, vector<1x1x32xf32>
    %187 = vector.shape_cast %186 : vector<1x1x32xf32> to vector<1x32xf32>
    %188 = vector.broadcast %187 : vector<1x32xf32> to vector<16x32xf32>
    %189 = arith.addf %185, %188 : vector<16x32xf32>
    %190 = vector.extract_strided_slice %189 {offsets = [0, 0], sizes = [16, 16], strides = [1, 1]} : vector<16x32xf32> to vector<16x16xf32>
    %191 = arith.negf %190 : vector<16x16xf32>
    %192 = math.exp %191 : vector<16x16xf32>
    %cst_114 = arith.constant 1.000000e+00 : f32
    %193 = vector.broadcast %cst_114 : f32 to vector<16x16xf32>
    %194 = arith.addf %193, %192 : vector<16x16xf32>
    %195 = arith.divf %193, %194 : vector<16x16xf32>
    %196 = vector.extract_strided_slice %189 {offsets = [0, 16], sizes = [16, 16], strides = [1, 1]} : vector<16x32xf32> to vector<16x16xf32>
    %197 = math.tanh %196 : vector<16x16xf32>
    %198 = arith.mulf %195, %197 : vector<16x16xf32>
    %c4_115 = arith.constant 4 : index
    %c0_116 = arith.constant 0 : index
    %c0_117 = arith.constant 0 : index
    %199 = vector.load %arg7[%c4_115, %c0_116, %c0_117] : memref<6x16x16xf32, #tpu.memory_space<vmem>>, vector<1x16x16xf32>
    %200 = vector.shape_cast %199 : vector<1x16x16xf32> to vector<16x16xf32>
    %cst_118 = arith.constant dense<0.000000e+00> : vector<16x16xf32>
    %201 = tpu.matmul %198, %200, %cst_118 {dimension_numbers = #tpu.dot_dimension_numbers<[1], [0], [0], [1], [0, 0, 1, 1], [], []>} : vector<16x16xf32>, vector<16x16xf32>, vector<16x16xf32> -> vector<16x16xf32>
    %202 = arith.addf %167, %201 : vector<16x16xf32>
    %c4_119 = arith.constant 4 : index
    %c0_120 = arith.constant 0 : index
    %c0_121 = arith.constant 0 : index
    %203 = vector.load %arg8[%c4_119, %c0_120, %c0_121] : memref<6x1x16xf32, #tpu.memory_space<vmem>>, vector<1x1x16xf32>
    %204 = vector.shape_cast %203 : vector<1x1x16xf32> to vector<1x16xf32>
    %205 = vector.broadcast %204 : vector<1x16xf32> to vector<16x16xf32>
    %206 = arith.addf %202, %205 : vector<16x16xf32>
    %c4_122 = arith.constant 4 : index
    %c0_123 = arith.constant 0 : index
    %c0_124 = arith.constant 0 : index
    %207 = vector.load %arg9[%c4_122, %c0_123, %c0_124] : memref<6x16x16xf32, #tpu.memory_space<vmem>>, vector<1x16x16xf32>
    %208 = vector.shape_cast %207 : vector<1x16x16xf32> to vector<16x16xf32>
    %cst_125 = arith.constant dense<0.000000e+00> : vector<16x16xf32>
    %209 = tpu.matmul %198, %208, %cst_125 {dimension_numbers = #tpu.dot_dimension_numbers<[1], [0], [0], [1], [0, 0, 1, 1], [], []>} : vector<16x16xf32>, vector<16x16xf32>, vector<16x16xf32> -> vector<16x16xf32>
    %210 = arith.addf %175, %209 : vector<16x16xf32>
    %c4_126 = arith.constant 4 : index
    %c0_127 = arith.constant 0 : index
    %c0_128 = arith.constant 0 : index
    %211 = vector.load %arg10[%c4_126, %c0_127, %c0_128] : memref<6x1x16xf32, #tpu.memory_space<vmem>>, vector<1x1x16xf32>
    %212 = vector.shape_cast %211 : vector<1x1x16xf32> to vector<1x16xf32>
    %213 = vector.broadcast %212 : vector<1x16xf32> to vector<16x16xf32>
    %214 = arith.addf %210, %213 : vector<16x16xf32>
    %215 = tpu.iota {dimensions = array<i32: 0>} : vector<16x16xi32>
    %c4_i32_129 = arith.constant 4 : i32
    %216 = vector.broadcast %c4_i32_129 : i32 to vector<16x16xi32>
    %217 = arith.cmpi sge, %215, %216 : vector<16x16xi32>
    %c4_i32_130 = arith.constant 4 : i32
    %218 = tpu.dynamic_rotate %214 by %c4_i32_130 dim 0 : vector<16x16xf32>, i32 -> vector<16x16xf32>
    %cst_131 = arith.constant 0.000000e+00 : f32
    %219 = vector.broadcast %cst_131 : f32 to vector<16x16xf32>
    %220 = arith.select %217, %218, %219 : vector<16x16xi1>, vector<16x16xf32>
    %221 = tpu.concatenate %220, %214, %18 in 1 : vector<16x16xf32>, vector<16x16xf32>, vector<16x8xf32> -> vector<16x40xf32>
    %c5 = arith.constant 5 : index
    %c0_132 = arith.constant 0 : index
    %c0_133 = arith.constant 0 : index
    %222 = vector.load %arg5[%c5, %c0_132, %c0_133] : memref<6x40x32xf32, #tpu.memory_space<vmem>>, vector<1x40x32xf32>
    %223 = vector.shape_cast %222 : vector<1x40x32xf32> to vector<40x32xf32>
    %cst_134 = arith.constant dense<0.000000e+00> : vector<16x32xf32>
    %224 = tpu.matmul %221, %223, %cst_134 {dimension_numbers = #tpu.dot_dimension_numbers<[1], [0], [0], [1], [0, 0, 1, 1], [], []>} : vector<16x40xf32>, vector<40x32xf32>, vector<16x32xf32> -> vector<16x32xf32>
    %c5_135 = arith.constant 5 : index
    %c0_136 = arith.constant 0 : index
    %c0_137 = arith.constant 0 : index
    %225 = vector.load %arg6[%c5_135, %c0_136, %c0_137] : memref<6x1x32xf32, #tpu.memory_space<vmem>>, vector<1x1x32xf32>
    %226 = vector.shape_cast %225 : vector<1x1x32xf32> to vector<1x32xf32>
    %227 = vector.broadcast %226 : vector<1x32xf32> to vector<16x32xf32>
    %228 = arith.addf %224, %227 : vector<16x32xf32>
    %229 = vector.extract_strided_slice %228 {offsets = [0, 0], sizes = [16, 16], strides = [1, 1]} : vector<16x32xf32> to vector<16x16xf32>
    %230 = arith.negf %229 : vector<16x16xf32>
    %231 = math.exp %230 : vector<16x16xf32>
    %cst_138 = arith.constant 1.000000e+00 : f32
    %232 = vector.broadcast %cst_138 : f32 to vector<16x16xf32>
    %233 = arith.addf %232, %231 : vector<16x16xf32>
    %234 = arith.divf %232, %233 : vector<16x16xf32>
    %235 = vector.extract_strided_slice %228 {offsets = [0, 16], sizes = [16, 16], strides = [1, 1]} : vector<16x32xf32> to vector<16x16xf32>
    %236 = math.tanh %235 : vector<16x16xf32>
    %237 = arith.mulf %234, %236 : vector<16x16xf32>
    %c5_139 = arith.constant 5 : index
    %c0_140 = arith.constant 0 : index
    %c0_141 = arith.constant 0 : index
    %238 = vector.load %arg7[%c5_139, %c0_140, %c0_141] : memref<6x16x16xf32, #tpu.memory_space<vmem>>, vector<1x16x16xf32>
    %239 = vector.shape_cast %238 : vector<1x16x16xf32> to vector<16x16xf32>
    %cst_142 = arith.constant dense<0.000000e+00> : vector<16x16xf32>
    %240 = tpu.matmul %237, %239, %cst_142 {dimension_numbers = #tpu.dot_dimension_numbers<[1], [0], [0], [1], [0, 0, 1, 1], [], []>} : vector<16x16xf32>, vector<16x16xf32>, vector<16x16xf32> -> vector<16x16xf32>
    %241 = arith.addf %206, %240 : vector<16x16xf32>
    %c5_143 = arith.constant 5 : index
    %c0_144 = arith.constant 0 : index
    %c0_145 = arith.constant 0 : index
    %242 = vector.load %arg8[%c5_143, %c0_144, %c0_145] : memref<6x1x16xf32, #tpu.memory_space<vmem>>, vector<1x1x16xf32>
    %243 = vector.shape_cast %242 : vector<1x1x16xf32> to vector<1x16xf32>
    %244 = vector.broadcast %243 : vector<1x16xf32> to vector<16x16xf32>
    %245 = arith.addf %241, %244 : vector<16x16xf32>
    %cst_146 = arith.constant 0.000000e+00 : f32
    %246 = vector.broadcast %cst_146 : f32 to vector<16x16xf32>
    %247 = arith.maximumf %245, %246 : vector<16x16xf32>
    %c0_147 = arith.constant 0 : index
    %c0_148 = arith.constant 0 : index
    %248 = vector.load %arg11[%c0_147, %c0_148] : memref<16x16xf32, #tpu.memory_space<vmem>>, vector<16x16xf32>
    %cst_149 = arith.constant dense<0.000000e+00> : vector<16x16xf32>
    %249 = tpu.matmul %247, %248, %cst_149 {dimension_numbers = #tpu.dot_dimension_numbers<[1], [0], [0], [1], [0, 0, 1, 1], [], []>} : vector<16x16xf32>, vector<16x16xf32>, vector<16x16xf32> -> vector<16x16xf32>
    %c0_150 = arith.constant 0 : index
    %c0_151 = arith.constant 0 : index
    %250 = vector.load %arg12[%c0_150, %c0_151] : memref<1x16xf32, #tpu.memory_space<vmem>>, vector<1x16xf32>
    %251 = vector.broadcast %250 : vector<1x16xf32> to vector<16x16xf32>
    %252 = arith.addf %249, %251 : vector<16x16xf32>
    %cst_152 = arith.constant 0.000000e+00 : f32
    %253 = vector.broadcast %cst_152 : f32 to vector<16x16xf32>
    %254 = arith.maximumf %252, %253 : vector<16x16xf32>
    %c0_153 = arith.constant 0 : index
    %c0_154 = arith.constant 0 : index
    %255 = vector.load %arg13[%c0_153, %c0_154] : memref<16x32xf32, #tpu.memory_space<vmem>>, vector<16x32xf32>
    %cst_155 = arith.constant dense<0.000000e+00> : vector<16x32xf32>
    %256 = tpu.matmul %254, %255, %cst_155 {dimension_numbers = #tpu.dot_dimension_numbers<[1], [0], [0], [1], [0, 0, 1, 1], [], []>} : vector<16x16xf32>, vector<16x32xf32>, vector<16x32xf32> -> vector<16x32xf32>
    %c0_156 = arith.constant 0 : index
    %c0_157 = arith.constant 0 : index
    %257 = vector.load %arg14[%c0_156, %c0_157] : memref<1x32xf32, #tpu.memory_space<vmem>>, vector<1x32xf32>
    %258 = vector.broadcast %257 : vector<1x32xf32> to vector<16x32xf32>
    %259 = arith.addf %256, %258 : vector<16x32xf32>
    %c0_158 = arith.constant 0 : index
    %c0_159 = arith.constant 0 : index
    %260 = vector.load %arg15[%c0_158, %c0_159] : memref<16x32xf32, #tpu.memory_space<vmem>>, vector<16x32xf32>
    tpu.vector_store %arg15[%c0_158, %c0_159], %259 {strides = array<i32>} : memref<16x32xf32, #tpu.memory_space<vmem>>, vector<16x32xf32>,
    return
  }
  func.func @transform_0(%arg0: i32) -> (i32, i32) {
    %c0_i32 = arith.constant 0 : i32
    %c0_i32_0 = arith.constant 0 : i32
    return %arg0, %c0_i32 : i32, i32
  }
  func.func @transform_1(%arg0: i32) -> (i32, i32) {
    %c0_i32 = arith.constant 0 : i32
    %c0_i32_0 = arith.constant 0 : i32
    return %arg0, %c0_i32 : i32, i32
  }
  func.func @transform_2(%arg0: i32) -> (i32, i32) {
    %c0_i32 = arith.constant 0 : i32
    %c0_i32_0 = arith.constant 0 : i32
    %c0_i32_1 = arith.constant 0 : i32
    return %c0_i32, %c0_i32_0 : i32, i32
  }
  func.func @transform_3(%arg0: i32) -> (i32, i32) {
    %c0_i32 = arith.constant 0 : i32
    %c0_i32_0 = arith.constant 0 : i32
    %c0_i32_1 = arith.constant 0 : i32
    return %c0_i32, %c0_i32_0 : i32, i32
  }
  func.func @transform_4(%arg0: i32) -> (i32, i32, i32) {
    %c0_i32 = arith.constant 0 : i32
    %c0_i32_0 = arith.constant 0 : i32
    %c0_i32_1 = arith.constant 0 : i32
    %c0_i32_2 = arith.constant 0 : i32
    return %c0_i32, %c0_i32_0, %c0_i32_1 : i32, i32, i32
  }
  func.func @transform_5(%arg0: i32) -> (i32, i32, i32) {
    %c0_i32 = arith.constant 0 : i32
    %c0_i32_0 = arith.constant 0 : i32
    %c0_i32_1 = arith.constant 0 : i32
    %c0_i32_2 = arith.constant 0 : i32
    return %c0_i32, %c0_i32_0, %c0_i32_1 : i32, i32, i32
  }
  func.func @transform_6(%arg0: i32) -> (i32, i32, i32) {
    %c0_i32 = arith.constant 0 : i32
    %c0_i32_0 = arith.constant 0 : i32
    %c0_i32_1 = arith.constant 0 : i32
    %c0_i32_2 = arith.constant 0 : i32
    return %c0_i32, %c0_i32_0, %c0_i32_1 : i32, i32, i32
  }
  func.func @transform_7(%arg0: i32) -> (i32, i32, i32) {
    %c0_i32 = arith.constant 0 : i32
    %c0_i32_0 = arith.constant 0 : i32
    %c0_i32_1 = arith.constant 0 : i32
    %c0_i32_2 = arith.constant 0 : i32
    return %c0_i32, %c0_i32_0, %c0_i32_1 : i32, i32, i32
  }
  func.func @transform_8(%arg0: i32) -> (i32, i32, i32) {
    %c0_i32 = arith.constant 0 : i32
    %c0_i32_0 = arith.constant 0 : i32
    %c0_i32_1 = arith.constant 0 : i32
    %c0_i32_2 = arith.constant 0 : i32
    return %c0_i32, %c0_i32_0, %c0_i32_1 : i32, i32, i32
  }
  func.func @transform_9(%arg0: i32) -> (i32, i32, i32) {
    %c0_i32 = arith.constant 0 : i32
    %c0_i32_0 = arith.constant 0 : i32
    %c0_i32_1 = arith.constant 0 : i32
    %c0_i32_2 = arith.constant 0 : i32
    return %c0_i32, %c0_i32_0, %c0_i32_1 : i32, i32, i32
  }
  func.func @transform_10(%arg0: i32) -> (i32, i32) {
    %c0_i32 = arith.constant 0 : i32
    %c0_i32_0 = arith.constant 0 : i32
    %c0_i32_1 = arith.constant 0 : i32
    return %c0_i32, %c0_i32_0 : i32, i32
  }
  func.func @transform_11(%arg0: i32) -> (i32, i32) {
    %c0_i32 = arith.constant 0 : i32
    %c0_i32_0 = arith.constant 0 : i32
    %c0_i32_1 = arith.constant 0 : i32
    return %c0_i32, %c0_i32_0 : i32, i32
  }
  func.func @transform_12(%arg0: i32) -> (i32, i32) {
    %c0_i32 = arith.constant 0 : i32
    %c0_i32_0 = arith.constant 0 : i32
    %c0_i32_1 = arith.constant 0 : i32
    return %c0_i32, %c0_i32_0 : i32, i32
  }
  func.func @transform_13(%arg0: i32) -> (i32, i32) {
    %c0_i32 = arith.constant 0 : i32
    %c0_i32_0 = arith.constant 0 : i32
    %c0_i32_1 = arith.constant 0 : i32
    return %c0_i32, %c0_i32_0 : i32, i32
  }
  func.func @transform_14(%arg0: i32) -> (i32, i32) {
    %c0_i32 = arith.constant 0 : i32
    %c0_i32_0 = arith.constant 0 : i32
    return %arg0, %c0_i32 : i32, i32
  }
}

</mosaic_0001>

<llo_original>
// kernel: tpu_custom_call.1
$region0: #{tpu_custom_call.1}
  #allocation0 [shape = 'u32[]', space=smem, size = 0x4, offset = 0x4, fixed_abs, tag = 'smem constant byte address 0x4 - core index']
  #allocation1 [shape = 'u32[144,128]{1,0:T(1,128)}', space=vmem, size = 0x12000, scoped, tag = 'internal scratch']
  %s0 = inlined_call_operand.vmem [shape: s32[32,1], index: 0, kind: input, shape index: {}]
  %s1 = inlined_call_operand.vmem [shape: f32[32,8], index: 1, kind: input, shape index: {}]
  %s2 = inlined_call_operand.vmem [shape: f32[64,16], index: 2, kind: input, shape index: {}]
  %s3 = inlined_call_operand.vmem [shape: f32[1,16], index: 3, kind: input, shape index: {}]
  %s4 = inlined_call_operand.vmem [shape: f32[6,40,32], index: 4, kind: input, shape index: {}]
  %s5 = inlined_call_operand.vmem [shape: f32[6,1,32], index: 5, kind: input, shape index: {}]
  %s6 = inlined_call_operand.vmem [shape: f32[6,16,16], index: 6, kind: input, shape index: {}]
  %s7 = inlined_call_operand.vmem [shape: f32[6,1,16], index: 7, kind: input, shape index: {}]
  %s8 = inlined_call_operand.vmem [shape: f32[6,16,16], index: 8, kind: input, shape index: {}]
  %s9 = inlined_call_operand.vmem [shape: f32[6,1,16], index: 9, kind: input, shape index: {}]
  %s10 = inlined_call_operand.vmem [shape: f32[16,16], index: 10, kind: input, shape index: {}]
  %s11 = inlined_call_operand.vmem [shape: f32[1,16], index: 11, kind: input, shape index: {}]
  %s12 = inlined_call_operand.vmem [shape: f32[16,32], index: 12, kind: input, shape index: {}]
  %s13 = inlined_call_operand.vmem [shape: f32[1,32], index: 13, kind: input, shape index: {}]
  %s14 = inlined_call_operand.hbm [shape: f32[32,32], index: 14, kind: output, shape index: {}]
  %s15 = sld [smem:[#allocation0]]
  $region89: #{tpu_custom_call.1} parent=0
    _
  %s17 = ssub.s32 1, %s15
  %s18 = scalar_select 0, %s17, %s15
  $region1: #{tpu_custom_call.1} parent=0
    #allocation2 [shape = 'u8[16384]{0}', space=vmem, size = 0x4000, scoped, tag = 'output window, operand 0']
    #allocation3 [shape = 's32[2]{0}', space=sflag, size = 0x8, scoped, tag = 'scoped memory for tpu_custom_call.1']
    %19 = vsyncpa [#allocation3], 0
    %s20 = scalar_lea.sflag [#allocation3], 1
    %21 = vsyncpa %s20, 0
    loop: start=0, step=1, limit=4
    $region2: #{tpu_custom_call.1} parent=1 // loop_pre_header
      _
    $region3: #{tpu_custom_call.1} parent=1 // loop_header
      %s23 = sphi 0, %s27
      %p24 = scmp.ge.s32.totalorder %s23, 4
      %s33 = sphi 0, %s35
      %s36 = sphi 0, %s33
      %s37 = sphi 0, %s36
      %s53 = sphi 0, %s37
      %s59 = sphi 0, %s61
      %s62 = sphi 0, %s59
      %s63 = sphi 0, %s62
      %s79 = sphi 0, %s63
      %s83 = sphi 0, %s83
      %s85 = sphi 0, %s83
      %s86 = sphi 0, %s85
      %s100 = sphi 0, %s86
      %s104 = sphi 0, %s104
      %s106 = sphi 0, %s104
      %s107 = sphi 0, %s106
      %s121 = sphi 0, %s107
      %s125 = sphi 0, %s125
      %s127 = sphi 0, %s125
      %s128 = sphi 0, %s127
      %s142 = sphi 0, %s128
      %s146 = sphi 0, %s146
      %s148 = sphi 0, %s146
      %s149 = sphi 0, %s148
      %s163 = sphi 0, %s149
      %s167 = sphi 0, %s167
      %s169 = sphi 0, %s167
      %s170 = sphi 0, %s169
      %s184 = sphi 0, %s170
      %s188 = sphi 0, %s188
      %s190 = sphi 0, %s188
      %s191 = sphi 0, %s190
      %s205 = sphi 0, %s191
      %s209 = sphi 0, %s209
      %s211 = sphi 0, %s209
      %s212 = sphi 0, %s211
      %s226 = sphi 0, %s212
      %s230 = sphi 0, %s230
      %s232 = sphi 0, %s230
      %s233 = sphi 0, %s232
      %s247 = sphi 0, %s233
      %s251 = sphi 0, %s251
      %s253 = sphi 0, %s251
      %s254 = sphi 0, %s253
      %s268 = sphi 0, %s254
      %s272 = sphi 0, %s272
      %s274 = sphi 0, %s272
      %s275 = sphi 0, %s274
      %s289 = sphi 0, %s275
      %s293 = sphi 0, %s293
      %s295 = sphi 0, %s293
      %s296 = sphi 0, %s295
      %s310 = sphi 0, %s296
      %s314 = sphi 0, %s314
      %s316 = sphi 0, %s314
      %s317 = sphi 0, %s316
      %s331 = sphi 0, %s317
      %s337 = sphi 0, %s339
      %s340 = sphi 0, %s337
      %s341 = sphi 0, %s340
      %s357 = sphi 0, %s341
    $region4: #{tpu_custom_call.1} parent=1 // loop_header_branch
      %26 = sbr.rel (%p24) target = $region8
    $region5: #{tpu_custom_call.1} parent=1 // loop_body
      %s28 = ssub.s32 %s23, 1
      %s29 = ssub.s32 %s23, 2
      %s30 = sadd.s32 %s23, 1
      %s31 = ssub.s32 %s23, %s30
      %p32 = scmp.eq.s32.totalorder %s31, 0
      %s34 = sadd.s32 %s33, 1
      %s35 = scalar_select %p32, %s33, %s34
      %p38 = pneg %p32
      %p39 = scmp.eq.s32.totalorder %s23, 1
      %p40 = por %p38, %p39
      %p41 = scmp.ne.s32.totalorder %s33, %s36
      %p42 = scmp.eq.s32.totalorder %s23, 0
      %p43 = por %p41, %p42
      %p44 = scmp.ne.s32.totalorder %s33, %s36
      %p45 = scmp.eq.s32.totalorder %s28, 1
      %p46 = por %p44, %p45
      %p47 = scmp.ne.s32.totalorder %s36, %s37
      %p48 = scmp.eq.s32.totalorder %s28, 0
      %p49 = por %p47, %p48
      %p50 = scmp.ne.s32.totalorder %s36, %s37
      %p51 = scmp.eq.s32.totalorder %s29, 1
      %p52 = por %p50, %p51
      %p54 = scmp.ne.s32.totalorder %s37, %s53
      %p55 = scmp.eq.s32.totalorder %s29, 0
      %p56 = por %p54, %p55
      %s57 = ssub.s32 %s23, %s30
      %p58 = scmp.eq.s32.totalorder %s57, 0
      %s60 = sadd.s32 %s59, 1
      %s61 = scalar_select %p58, %s59, %s60
      %p64 = pneg %p58
      %p65 = scmp.eq.s32.totalorder %s23, 1
      %p66 = por %p64, %p65
      %p67 = scmp.ne.s32.totalorder %s59, %s62
      %p68 = scmp.eq.s32.totalorder %s23, 0
      %p69 = por %p67, %p68
      %p70 = scmp.ne.s32.totalorder %s59, %s62
      %p71 = scmp.eq.s32.totalorder %s28, 1
      %p72 = por %p70, %p71
      %p73 = scmp.ne.s32.totalorder %s62, %s63
      %p74 = scmp.eq.s32.totalorder %s28, 0
      %p75 = por %p73, %p74
      %p76 = scmp.ne.s32.totalorder %s62, %s63
      %p77 = scmp.eq.s32.totalorder %s29, 1
      %p78 = por %p76, %p77
      %p80 = scmp.ne.s32.totalorder %s63, %s79
      %p81 = scmp.eq.s32.totalorder %s29, 0
      %p82 = por %p80, %p81
      %s84 = sadd.s32 %s83, 1
      %p87 = scmp.eq.s32.totalorder %s23, 1
      %p88 = scmp.ne.s32.totalorder %s83, %s85
      %p89 = scmp.eq.s32.totalorder %s23, 0
      %p90 = por %p88, %p89
      %p91 = scmp.ne.s32.totalorder %s83, %s85
      %p92 = scmp.eq.s32.totalorder %s28, 1
      %p93 = por %p91, %p92
      %p94 = scmp.ne.s32.totalorder %s85, %s86
      %p95 = scmp.eq.s32.totalorder %s28, 0
      %p96 = por %p94, %p95
      %p97 = scmp.ne.s32.totalorder %s85, %s86
      %p98 = scmp.eq.s32.totalorder %s29, 1
      %p99 = por %p97, %p98
      %p101 = scmp.ne.s32.totalorder %s86, %s100
      %p102 = scmp.eq.s32.totalorder %s29, 0
      %p103 = por %p101, %p102
      %s105 = sadd.s32 %s104, 1
      %p108 = scmp.eq.s32.totalorder %s23, 1
      %p109 = scmp.ne.s32.totalorder %s104, %s106
      %p110 = scmp.eq.s32.totalorder %s23, 0
      %p111 = por %p109, %p110
      %p112 = scmp.ne.s32.totalorder %s104, %s106
      %p113 = scmp.eq.s32.totalorder %s28, 1
      %p114 = por %p112, %p113
      %p115 = scmp.ne.s32.totalorder %s106, %s107
      %p116 = scmp.eq.s32.totalorder %s28, 0
      %p117 = por %p115, %p116
      %p118 = scmp.ne.s32.totalorder %s106, %s107
      %p119 = scmp.eq.s32.totalorder %s29, 1
      %p120 = por %p118, %p119
      %p122 = scmp.ne.s32.totalorder %s107, %s121
      %p123 = scmp.eq.s32.totalorder %s29, 0
      %p124 = por %p122, %p123
      %s126 = sadd.s32 %s125, 1
      %p129 = scmp.eq.s32.totalorder %s23, 1
      %p130 = scmp.ne.s32.totalorder %s125, %s127
      %p131 = scmp.eq.s32.totalorder %s23, 0
      %p132 = por %p130, %p131
      %p133 = scmp.ne.s32.totalorder %s125, %s127
      %p134 = scmp.eq.s32.totalorder %s28, 1
      %p135 = por %p133, %p134
      %p136 = scmp.ne.s32.totalorder %s127, %s128
      %p137 = scmp.eq.s32.totalorder %s28, 0
      %p138 = por %p136, %p137
      %p139 = scmp.ne.s32.totalorder %s127, %s128
      %p140 = scmp.eq.s32.totalorder %s29, 1
      %p141 = por %p139, %p140
      %p143 = scmp.ne.s32.totalorder %s128, %s142
      %p144 = scmp.eq.s32.totalorder %s29, 0
      %p145 = por %p143, %p144
      %s147 = sadd.s32 %s146, 1
      %p150 = scmp.eq.s32.totalorder %s23, 1
      %p151 = scmp.ne.s32.totalorder %s146, %s148
      %p152 = scmp.eq.s32.totalorder %s23, 0
      %p153 = por %p151, %p152
      %p154 = scmp.ne.s32.totalorder %s146, %s148
      %p155 = scmp.eq.s32.totalorder %s28, 1
      %p156 = por %p154, %p155
      %p157 = scmp.ne.s32.totalorder %s148, %s149
      %p158 = scmp.eq.s32.totalorder %s28, 0
      %p159 = por %p157, %p158
      %p160 = scmp.ne.s32.totalorder %s148, %s149
      %p161 = scmp.eq.s32.totalorder %s29, 1
      %p162 = por %p160, %p161
      %p164 = scmp.ne.s32.totalorder %s149, %s163
      %p165 = scmp.eq.s32.totalorder %s29, 0
      %p166 = por %p164, %p165
      %s168 = sadd.s32 %s167, 1
      %p171 = scmp.eq.s32.totalorder %s23, 1
      %p172 = scmp.ne.s32.totalorder %s167, %s169
      %p173 = scmp.eq.s32.totalorder %s23, 0
      %p174 = por %p172, %p173
      %p175 = scmp.ne.s32.totalorder %s167, %s169
      %p176 = scmp.eq.s32.totalorder %s28, 1
      %p177 = por %p175, %p176
      %p178 = scmp.ne.s32.totalorder %s169, %s170
      %p179 = scmp.eq.s32.totalorder %s28, 0
      %p180 = por %p178, %p179
      %p181 = scmp.ne.s32.totalorder %s169, %s170
      %p182 = scmp.eq.s32.totalorder %s29, 1
      %p183 = por %p181, %p182
      %p185 = scmp.ne.s32.totalorder %s170, %s184
      %p186 = scmp.eq.s32.totalorder %s29, 0
      %p187 = por %p185, %p186
      %s189 = sadd.s32 %s188, 1
      %p192 = scmp.eq.s32.totalorder %s23, 1
      %p193 = scmp.ne.s32.totalorder %s188, %s190
      %p194 = scmp.eq.s32.totalorder %s23, 0
      %p195 = por %p193, %p194
      %p196 = scmp.ne.s32.totalorder %s188, %s190
      %p197 = scmp.eq.s32.totalorder %s28, 1
      %p198 = por %p196, %p197
      %p199 = scmp.ne.s32.totalorder %s190, %s191
      %p200 = scmp.eq.s32.totalorder %s28, 0
      %p201 = por %p199, %p200
      %p202 = scmp.ne.s32.totalorder %s190, %s191
      %p203 = scmp.eq.s32.totalorder %s29, 1
      %p204 = por %p202, %p203
      %p206 = scmp.ne.s32.totalorder %s191, %s205
      %p207 = scmp.eq.s32.totalorder %s29, 0
      %p208 = por %p206, %p207
      %s210 = sadd.s32 %s209, 1
      %p213 = scmp.eq.s32.totalorder %s23, 1
      %p214 = scmp.ne.s32.totalorder %s209, %s211
      %p215 = scmp.eq.s32.totalorder %s23, 0
      %p216 = por %p214, %p215
      %p217 = scmp.ne.s32.totalorder %s209, %s211
      %p218 = scmp.eq.s32.totalorder %s28, 1
      %p219 = por %p217, %p218
      %p220 = scmp.ne.s32.totalorder %s211, %s212
      %p221 = scmp.eq.s32.totalorder %s28, 0
      %p222 = por %p220, %p221
      %p223 = scmp.ne.s32.totalorder %s211, %s212
      %p224 = scmp.eq.s32.totalorder %s29, 1
      %p225 = por %p223, %p224
      %p227 = scmp.ne.s32.totalorder %s212, %s226
      %p228 = scmp.eq.s32.totalorder %s29, 0
      %p229 = por %p227, %p228
      %s231 = sadd.s32 %s230, 1
      %p234 = scmp.eq.s32.totalorder %s23, 1
      %p235 = scmp.ne.s32.totalorder %s230, %s232
      %p236 = scmp.eq.s32.totalorder %s23, 0
      %p237 = por %p235, %p236
      %p238 = scmp.ne.s32.totalorder %s230, %s232
      %p239 = scmp.eq.s32.totalorder %s28, 1
      %p240 = por %p238, %p239
      %p241 = scmp.ne.s32.totalorder %s232, %s233
      %p242 = scmp.eq.s32.totalorder %s28, 0
      %p243 = por %p241, %p242
      %p244 = scmp.ne.s32.totalorder %s232, %s233
      %p245 = scmp.eq.s32.totalorder %s29, 1
      %p246 = por %p244, %p245
      %p248 = scmp.ne.s32.totalorder %s233, %s247
      %p249 = scmp.eq.s32.totalorder %s29, 0
      %p250 = por %p248, %p249
      %s252 = sadd.s32 %s251, 1
      %p255 = scmp.eq.s32.totalorder %s23, 1
      %p256 = scmp.ne.s32.totalorder %s251, %s253
      %p257 = scmp.eq.s32.totalorder %s23, 0
      %p258 = por %p256, %p257
      %p259 = scmp.ne.s32.totalorder %s251, %s253
      %p260 = scmp.eq.s32.totalorder %s28, 1
      %p261 = por %p259, %p260
      %p262 = scmp.ne.s32.totalorder %s253, %s254
      %p263 = scmp.eq.s32.totalorder %s28, 0
      %p264 = por %p262, %p263
      %p265 = scmp.ne.s32.totalorder %s253, %s254
      %p266 = scmp.eq.s32.totalorder %s29, 1
      %p267 = por %p265, %p266
      %p269 = scmp.ne.s32.totalorder %s254, %s268
      %p270 = scmp.eq.s32.totalorder %s29, 0
      %p271 = por %p269, %p270
      %s273 = sadd.s32 %s272, 1
      %p276 = scmp.eq.s32.totalorder %s23, 1
      %p277 = scmp.ne.s32.totalorder %s272, %s274
      %p278 = scmp.eq.s32.totalorder %s23, 0
      %p279 = por %p277, %p278
      %p280 = scmp.ne.s32.totalorder %s272, %s274
      %p281 = scmp.eq.s32.totalorder %s28, 1
      %p282 = por %p280, %p281
      %p283 = scmp.ne.s32.totalorder %s274, %s275
      %p284 = scmp.eq.s32.totalorder %s28, 0
      %p285 = por %p283, %p284
      %p286 = scmp.ne.s32.totalorder %s274, %s275
      %p287 = scmp.eq.s32.totalorder %s29, 1
      %p288 = por %p286, %p287
      %p290 = scmp.ne.s32.totalorder %s275, %s289
      %p291 = scmp.eq.s32.totalorder %s29, 0
      %p292 = por %p290, %p291
      %s294 = sadd.s32 %s293, 1
      %p297 = scmp.eq.s32.totalorder %s23, 1
      %p298 = scmp.ne.s32.totalorder %s293, %s295
      %p299 = scmp.eq.s32.totalorder %s23, 0
      %p300 = por %p298, %p299
      %p301 = scmp.ne.s32.totalorder %s293, %s295
      %p302 = scmp.eq.s32.totalorder %s28, 1
      %p303 = por %p301, %p302
      %p304 = scmp.ne.s32.totalorder %s295, %s296
      %p305 = scmp.eq.s32.totalorder %s28, 0
      %p306 = por %p304, %p305
      %p307 = scmp.ne.s32.totalorder %s295, %s296
      %p308 = scmp.eq.s32.totalorder %s29, 1
      %p309 = por %p307, %p308
      %p311 = scmp.ne.s32.totalorder %s296, %s310
      %p312 = scmp.eq.s32.totalorder %s29, 0
      %p313 = por %p311, %p312
      %s315 = sadd.s32 %s314, 1
      %p318 = scmp.eq.s32.totalorder %s23, 1
      %p319 = scmp.ne.s32.totalorder %s314, %s316
      %p320 = scmp.eq.s32.totalorder %s23, 0
      %p321 = por %p319, %p320
      %p322 = scmp.ne.s32.totalorder %s314, %s316
      %p323 = scmp.eq.s32.totalorder %s28, 1
      %p324 = por %p322, %p323
      %p325 = scmp.ne.s32.totalorder %s316, %s317
      %p326 = scmp.eq.s32.totalorder %s28, 0
      %p327 = por %p325, %p326
      %p328 = scmp.ne.s32.totalorder %s316, %s317
      %p329 = scmp.eq.s32.totalorder %s29, 1
      %p330 = por %p328, %p329
      %p332 = scmp.ne.s32.totalorder %s317, %s331
      %p333 = scmp.eq.s32.totalorder %s29, 0
      %p334 = por %p332, %p333
      %s335 = ssub.s32 %s23, %s30
      %p336 = scmp.eq.s32.totalorder %s335, 0
      %s338 = sadd.s32 %s337, 1
      %s339 = scalar_select %p336, %s337, %s338
      %p342 = pneg %p336
      %p343 = scmp.eq.s32.totalorder %s23, 1
      %p344 = por %p342, %p343
      %p345 = scmp.ne.s32.totalorder %s337, %s340
      %p346 = scmp.eq.s32.totalorder %s23, 0
      %p347 = por %p345, %p346
      %p348 = scmp.ne.s32.totalorder %s337, %s340
      %p349 = scmp.eq.s32.totalorder %s28, 1
      %p350 = por %p348, %p349
      %p351 = scmp.ne.s32.totalorder %s340, %s341
      %p352 = scmp.eq.s32.totalorder %s28, 0
      %p353 = por %p351, %p352
      %p354 = scmp.ne.s32.totalorder %s340, %s341
      %p355 = scmp.eq.s32.totalorder %s29, 1
      %p356 = por %p354, %p355
      %p358 = scmp.ne.s32.totalorder %s341, %s357
      %p359 = scmp.eq.s32.totalorder %s29, 0
      %p360 = por %p358, %p359
      %p361 = scmp.le.s32.totalorder 1, %s23
      %p362 = scmp.lt.s32.totalorder %s23, 3
      %p363 = pnand %p361, %p362
      %p364 = pneg %p363
      // Predicated region
      $region9: #{tpu_custom_call.1} parent=5 // pred_check
        _
      $region10: #{tpu_custom_call.1} parent=5 // pred_check_branch
        %366 = sbr.rel (%p363) target = $region12
      $region11: #{tpu_custom_call.1} parent=5 // pred_region
        %s367 = ssub.s32 %s23, 1
        // Predicated region
        $region13: #{tpu_custom_call.1} parent=11 // pred_check
          %p368 = pneg %p96
        $region14: #{tpu_custom_call.1} parent=11 // pred_check_branch
          %370 = sbr.rel (%p368) target = $region16
        $region15: #{tpu_custom_call.1} parent=11 // pred_region
          _
        $region16: #{tpu_custom_call.1} parent=11 // pred_fallthru
          _
        // Predicated region
        $region17: #{tpu_custom_call.1} parent=11 // pred_check
          %p371 = pneg %p117
        $region18: #{tpu_custom_call.1} parent=11 // pred_check_branch
          %373 = sbr.rel (%p371) target = $region20
        $region19: #{tpu_custom_call.1} parent=11 // pred_region
          _
        $region20: #{tpu_custom_call.1} parent=11 // pred_fallthru
          _
        // Predicated region
        $region21: #{tpu_custom_call.1} parent=11 // pred_check
          %p374 = pneg %p138
        $region22: #{tpu_custom_call.1} parent=11 // pred_check_branch
          %376 = sbr.rel (%p374) target = $region24
        $region23: #{tpu_custom_call.1} parent=11 // pred_region
          _
        $region24: #{tpu_custom_call.1} parent=11 // pred_fallthru
          _
        // Predicated region
        $region25: #{tpu_custom_call.1} parent=11 // pred_check
          %p377 = pneg %p159
        $region26: #{tpu_custom_call.1} parent=11 // pred_check_branch
          %379 = sbr.rel (%p377) target = $region28
        $region27: #{tpu_custom_call.1} parent=11 // pred_region
          _
        $region28: #{tpu_custom_call.1} parent=11 // pred_fallthru
          _
        // Predicated region
        $region29: #{tpu_custom_call.1} parent=11 // pred_check
          %p380 = pneg %p180
        $region30: #{tpu_custom_call.1} parent=11 // pred_check_branch
          %382 = sbr.rel (%p380) target = $region32
        $region31: #{tpu_custom_call.1} parent=11 // pred_region
          _
        $region32: #{tpu_custom_call.1} parent=11 // pred_fallthru
          _
        // Predicated region
        $region33: #{tpu_custom_call.1} parent=11 // pred_check
          %p383 = pneg %p201
        $region34: #{tpu_custom_call.1} parent=11 // pred_check_branch
          %385 = sbr.rel (%p383) target = $region36
        $region35: #{tpu_custom_call.1} parent=11 // pred_region
          _
        $region36: #{tpu_custom_call.1} parent=11 // pred_fallthru
          _
        // Predicated region
        $region37: #{tpu_custom_call.1} parent=11 // pred_check
          %p386 = pneg %p222
        $region38: #{tpu_custom_call.1} parent=11 // pred_check_branch
          %388 = sbr.rel (%p386) target = $region40
        $region39: #{tpu_custom_call.1} parent=11 // pred_region
          _
        $region40: #{tpu_custom_call.1} parent=11 // pred_fallthru
          _
        // Predicated region
        $region41: #{tpu_custom_call.1} parent=11 // pred_check
          %p389 = pneg %p243
        $region42: #{tpu_custom_call.1} parent=11 // pred_check_branch
          %391 = sbr.rel (%p389) target = $region44
        $region43: #{tpu_custom_call.1} parent=11 // pred_region
          _
        $region44: #{tpu_custom_call.1} parent=11 // pred_fallthru
          _
        // Predicated region
        $region45: #{tpu_custom_call.1} parent=11 // pred_check
          %p392 = pneg %p264
        $region46: #{tpu_custom_call.1} parent=11 // pred_check_branch
          %394 = sbr.rel (%p392) target = $region48
        $region47: #{tpu_custom_call.1} parent=11 // pred_region
          _
        $region48: #{tpu_custom_call.1} parent=11 // pred_fallthru
          _
        // Predicated region
        $region49: #{tpu_custom_call.1} parent=11 // pred_check
          %p395 = pneg %p285
        $region50: #{tpu_custom_call.1} parent=11 // pred_check_branch
          %397 = sbr.rel (%p395) target = $region52
        $region51: #{tpu_custom_call.1} parent=11 // pred_region
          _
        $region52: #{tpu_custom_call.1} parent=11 // pred_fallthru
          _
        // Predicated region
        $region53: #{tpu_custom_call.1} parent=11 // pred_check
          %p398 = pneg %p306
        $region54: #{tpu_custom_call.1} parent=11 // pred_check_branch
          %400 = sbr.rel (%p398) target = $region56
        $region55: #{tpu_custom_call.1} parent=11 // pred_region
          _
        $region56: #{tpu_custom_call.1} parent=11 // pred_fallthru
          _
        // Predicated region
        $region57: #{tpu_custom_call.1} parent=11 // pred_check
          %p401 = pneg %p327
        $region58: #{tpu_custom_call.1} parent=11 // pred_check_branch
          %403 = sbr.rel (%p401) target = $region60
        $region59: #{tpu_custom_call.1} parent=11 // pred_region
          _
        $region60: #{tpu_custom_call.1} parent=11 // pred_fallthru
          _
      $region12: #{tpu_custom_call.1} parent=5 // pred_fallthru
        _
      %p404 = scmp.lt.s32.totalorder %s23, 2
      // Predicated region
      $region61: #{tpu_custom_call.1} parent=5 // pred_check
        %p405 = pneg %p404
      $region62: #{tpu_custom_call.1} parent=5 // pred_check_branch
        %407 = sbr.rel (%p405) target = $region64
      $region63: #{tpu_custom_call.1} parent=5 // pred_region
        // Predicated region
        $region65: #{tpu_custom_call.1} parent=63 // pred_check
          %p408 = pneg %p43
        $region66: #{tpu_custom_call.1} parent=63 // pred_check_branch
          %410 = sbr.rel (%p408) target = $region68
        $region67: #{tpu_custom_call.1} parent=63 // pred_region
          %s411 = smul.u32 2, %s23
          %p412 = scmp.lt.s32.totalorder %s411, 3
          %s413 = scalar_select %p412, %s411, 3
          %s414 = smul.addr %s413, 8
          %s415 = scalar_lea.vmem %s0, %s414
          %s416 = smul.u32 2, %s23
        $region68: #{tpu_custom_call.1} parent=63 // pred_fallthru
          _
        // Predicated region
        $region69: #{tpu_custom_call.1} parent=63 // pred_check
          %p417 = pneg %p69
        $region70: #{tpu_custom_call.1} parent=63 // pred_check_branch
          %419 = sbr.rel (%p417) target = $region72
        $region71: #{tpu_custom_call.1} parent=63 // pred_region
          %s420 = smul.u32 2, %s23
          %p421 = scmp.lt.s32.totalorder %s420, 3
          %s422 = scalar_select %p421, %s420, 3
          %s423 = smul.addr %s422, 8
          %s424 = scalar_lea.vmem %s1, %s423
          %s425 = smul.u32 2, %s23
        $region72: #{tpu_custom_call.1} parent=63 // pred_fallthru
          _
      $region64: #{tpu_custom_call.1} parent=5 // pred_fallthru
        _
      %p426 = scmp.le.s32.totalorder 1, %s23
      %p427 = scmp.lt.s32.totalorder %s23, 3
      %p428 = pnand %p426, %p427
      %p429 = pneg %p428
      // Predicated region
      $region73: #{tpu_custom_call.1} parent=5 // pred_check
        _
      $region74: #{tpu_custom_call.1} parent=5 // pred_check_branch
        %431 = sbr.rel (%p428) target = $region76
      $region75: #{tpu_custom_call.1} parent=5 // pred_region
        %s432 = ssub.s32 %s23, 1
        %s433 = smul.u32 2, %s28
        %p434 = scmp.lt.s32.totalorder %s433, 3
        %s435 = scalar_select %p434, %s433, 3
        %s436 = smul.addr %s435, 8
        %s437 = scalar_lea.vmem %s0, %s436
        %p438 = pneg %p49
        %p439 = pneg %p46
        %s440 = smul.u32 2, %s28
        %p441 = scmp.lt.s32.totalorder %s440, 3
        %s442 = scalar_select %p441, %s440, 3
        %s443 = smul.addr %s442, 8
        %s444 = scalar_lea.vmem %s1, %s443
        %p445 = pneg %p75
        %p446 = pneg %p72
        %p447 = pneg %p96
        %p448 = pneg %p93
        %p449 = pneg %p117
        %p450 = pneg %p114
        %p451 = pneg %p138
        %p452 = pneg %p135
        %p453 = pneg %p159
        %p454 = pneg %p156
        %p455 = pneg %p180
        %p456 = pneg %p177
        %p457 = pneg %p201
        %p458 = pneg %p198
        %p459 = pneg %p222
        %p460 = pneg %p219
        %p461 = pneg %p243
        %p462 = pneg %p240
        %p463 = pneg %p264
        %p464 = pneg %p261
        %p465 = pneg %p285
        %p466 = pneg %p282
        %p467 = pneg %p306
        %p468 = pneg %p303
        %p469 = pneg %p327
        %p470 = pneg %p324
        %p471 = pneg %p353
        %p472 = pneg %p350
        %s473 = sand.u32 %s340, 1
        %s474 = scalar_lea.sflag [#allocation3], %s473
        %s475 = sand.u32 %s340, 1
        %s476 = smul.addr %s475, 16
        %s477 = scalar_lea.vmem [#allocation2], %s476
        %s478 = smul.u32 2, %s28
        %p479 = scmp.lt.s32.totalorder %s478, 3
        %s480 = scalar_select %p479, %s478, 3
        %s481 = smul.addr %s480, 8
        %s482 = scalar_lea.vmem %s0, %s481
        %s483 = smul.u32 2, %s28
        %s484 = smul.u32 2, %s28
        %p485 = scmp.lt.s32.totalorder %s484, 3
        %s486 = scalar_select %p485, %s484, 3
        %s487 = smul.addr %s486, 8
        %s488 = scalar_lea.vmem %s1, %s487
        %s489 = smul.u32 2, %s28
        %s490 = smul.u32 2, %s28
        %v491 = vlaneseq
        %v492 = vand.u32 %v491, 127
        %v493 = vld [vmem:[%s482] sm:$0xff]
        %v494 = vld [vmem:[%s482 + $0x8] sm:$0xff]
        %495 = vset.pattern.permute.xlu0 0
        %496 = vperm.xlu0 %495, %v493
        %v497 = vpop.permute.xlu0 %496
        %498 = vset.pattern.permute.xlu0 0
        %499 = vperm.xlu0 %498, %v494
        %v500 = vpop.permute.xlu0 %499
        %vm501 = vcmp.eq.s32.totalorder %v492, %v497
        %vm502 = vcmp.eq.s32.totalorder %v492, %v500
        %v503 = vsel %vm501, 1, 0
        %v504 = vsel %vm502, 1, 0
        %v505 = vcvt.s32.f32 %v503
        %v506 = vcvt.s32.f32 %v504
        %v507 = vlaneseq
        %v508 = vshrl.u32 %v507, 7
        %v509 = vadd.s32 %v508, 8
        %vm510 = vcmp.ge.s32.totalorder %v508, 1
        %vm511 = vcmp.ge.s32.totalorder %v509, 1
        %v512 = vrot.slane %v505, 7
        %v513 = vrot.slane %v506, 7
        %vm514 = vcmp.lt.s32.totalorder %v508, 1
        %v515 = vsel %vm514, %v512, %v513
        %v516 = vsel %vm514, %v513, %v512
        %v517 = vsel %vm510, %v516, 0.0
        %v518 = vsel %vm511, %v515, 0.0
        %521 = vrot.lane.b32.xlu0 %v505, 32
        %v522 = vpop.permute.xlu0 %521
        %523 = vrot.lane.b32.xlu0 %v506, 32
        %v524 = vpop.permute.xlu0 %523
        %vm527 = vcmask 261120
        %v528 = vsel %vm527, %v517, %v522
        %v529 = vsel %vm527, %v518, %v524
        %v530 = vld [vmem:[%s2] sm:$0xff]
        %v531 = vld [vmem:[%s2 + $0x8] sm:$0xff]
        %v532 = vld [vmem:[%s2 + $0x10] sm:$0xff]
        %v533 = vld [vmem:[%s2 + $0x18] sm:$0xff]
        %v534 = vld [vmem:[%s2 + $0x20] sm:$0xff]
        %v535 = vld [vmem:[%s2 + $0x28] sm:$0xff]
        %v536 = vld [vmem:[%s2 + $0x30] sm:$0xff]
        %v537 = vld [vmem:[%s2 + $0x38] sm:$0xff]
        %v538 = vld [vmem:[%s3] sm:$0x1]
        %v540 = vlaneseq
        %v541 = vshrl.u32 %v540, 7
        %v542 = vsub.s32 0, %v541
        %v543 = vrot.slane %v538, %v542
        %vm545 = vcmask 523264
        %v547 = vsel %vm545, %v528, 0
        %v550 = vsel %vm545, %v529, 0
        %552 = vmatprep.subr.mxu0 0.0
        %553 = vmatpush1.msra.mxu0 %v530
        %554 = vmatprep.subr.mxu0 0.0
        %555 = vmatpush1.msra.mxu0 %v531
        %556 = vmatprep.subr.mxu0 0.0
        %557 = vmatpush1.msra.mxu0 %v532
        %558 = vmatprep.subr.mxu0 0.0
        %559 = vmatpush1.msra.mxu0 %v533
        %560 = vmatprep.subr.mxu0 0.0
        %561 = vmatpush1.msra.mxu0 %v534
        %562 = vmatprep.subr.mxu0 0.0
        %563 = vmatpush1.msra.mxu0 %v535
        %564 = vmatprep.subr.mxu0 0.0
        %565 = vmatpush1.msra.mxu0 %v536
        %566 = vmatprep.subr.mxu0 0.0
        %567 = vmatpush1.msra.mxu0 %v537
        %568 = vmatprep.subr.mxu0 0.0
        %569 = vmatpush1.msra.mxu0 0.0
        %570 = vmatprep.subr.mxu0 0.0
        %571 = vmatpush1.msra.mxu0 0.0
        %572 = vmatprep.subr.mxu0 0.0
        %573 = vmatpush1.msra.mxu0 0.0
        %574 = vmatprep.subr.mxu0 0.0
        %575 = vmatpush1.msra.mxu0 0.0
        %576 = vmatprep.subr.mxu0 0.0
        %577 = vmatpush1.msra.mxu0 0.0
        %578 = vmatprep.subr.mxu0 0.0
        %579 = vmatpush1.msra.mxu0 0.0
        %580 = vmatprep.subr.mxu0 0.0
        %581 = vmatpush1.msra.mxu0 0.0
        %582 = vmatprep.subr.mxu0 0.0
        %583 = vmatpush1.msra.mxu0 0.0
        %584 = vmatprep.subr.mxu0 0.0
        %585 = vmatpush1.msra.mxu0 0.0
        %586 = vmatprep.subr.mxu0 0.0
        %587 = vmatpush1.msra.mxu0 0.0
        %588 = vmatprep.subr.mxu0 0.0
        %589 = vmatpush1.msra.mxu0 0.0
        %590 = vmatprep.subr.mxu0 0.0
        %591 = vmatpush1.msra.mxu0 0.0
        %592 = vmatprep.subr.mxu0 0.0
        %593 = vmatpush1.msra.mxu0 0.0
        %594 = vmatprep.subr.mxu0 0.0
        %595 = vmatpush1.msra.mxu0 0.0
        %596 = vmatprep.subr.mxu0 0.0
        %597 = vmatpush1.msra.mxu0 0.0
        %598 = vmatprep.subr.mxu0 0.0
        %599 = vmatpush1.msra.mxu0 0.0
        %600 = vmatprep.subr.mxu0 0.0
        %601 = vmatpush1.msra.mxu0 0.0
        %602 = vmatprep.subr.mxu0 0.0
        %603 = vmatpush1.msra.mxu0 0.0
        %604 = vmatprep.subr.mxu0 0.0
        %605 = vmatpush1.msra.mxu0 0.0
        %606 = vmatprep.subr.mxu0 0.0
        %607 = vmatpush1.msra.mxu0 0.0
        %608 = vmatprep.subr.mxu0 0.0
        %609 = vmatpush1.msra.mxu0 0.0
        %610 = vmatprep.subr.mxu0 0.0
        %611 = vmatpush1.msra.mxu0 0.0
        %612 = vmatprep.subr.mxu0 0.0
        %613 = vmatpush1.msra.mxu0 0.0
        %614 = vmatprep.subr.mxu0 0.0
        %615 = vmatpush1.msra.mxu0 0.0
        %616 = vmatprep.mubr.f32.mxu0 0.0
        %617 = vmatmul.mubr.f32.gmra.mrb[0].mxu0 %v547
        %v618 = vpop.f32.mrb[0].mxu0
        %v619 = vadd.f32 %v543, %v618
        %v620 = vpop.f32.mrb[0].mxu0
        %621 = vmatprep.mubr.f32.mxu0 0.0
        %622 = vmatmul.mubr.f32.gmra.mrb[0].mxu0 %v550
        %v623 = vpop.f32.mrb[0].mxu0
        %v624 = vadd.f32 %v543, %v623
        %v625 = vpop.f32.mrb[0].mxu0
        %626 = vdwg.mxu0
        %v627 = vld [vmem:[%s488] sm:$0xff]
        %v628 = vld [vmem:[%s488 + $0x8] sm:$0xff]
        %v629 = vrot.slane %v619, 7
        %v630 = vrot.slane %v624, 7
        %v631 = vsel %vm514, %v629, %v630
        %v632 = vsel %vm514, %v630, %v629
        %v633 = vsel %vm510, %v632, 0.0
        %v634 = vsel %vm511, %v631, 0.0
        %637 = vrot.lane.b32.xlu0 %v619, 16
        %v638 = vpop.permute.xlu0 %637
        %639 = vrot.lane.b32.xlu0 %v624, 16
        %v640 = vpop.permute.xlu0 %639
        %645 = vrot.lane.b32.xlu0 %v627, 32
        %v646 = vpop.permute.xlu0 %645
        %647 = vrot.lane.b32.xlu0 %v628, 32
        %v648 = vpop.permute.xlu0 %647
        %vm651 = vcmask 130048
        %v652 = vsel %vm651, %v633, %v638
        %v653 = vsel %vm651, %v634, %v640
        %v654 = vsel %vm527, %v652, %v646
        %v655 = vsel %vm527, %v653, %v648
        %v656 = vld [vmem:[%s4] sm:$0xff]
        %v657 = vld [vmem:[%s4 + $0x8] sm:$0xff]
        %v658 = vld [vmem:[%s4 + $0x10] sm:$0xff]
        %v659 = vld [vmem:[%s4 + $0x18] sm:$0xff]
        %v660 = vld [vmem:[%s4 + $0x20] sm:$0xff]
        %v661 = vld [vmem:[%s5] sm:$0x1]
        %v663 = vlaneseq
        %v664 = vshrl.u32 %v663, 7
        %v665 = vsub.s32 0, %v664
        %v666 = vrot.slane %v661, %v665
        %vm668 = vcmask 326656
        %v670 = vsel %vm668, %v654, 0
        %v673 = vsel %vm668, %v655, 0
        %675 = vmatprep.subr.mxu0 0.0
        %676 = vmatpush1.msra.mxu0 %v656
        %677 = vmatprep.subr.mxu0 0.0
        %678 = vmatpush1.msra.mxu0 %v657
        %679 = vmatprep.subr.mxu0 0.0
        %680 = vmatpush1.msra.mxu0 %v658
        %681 = vmatprep.subr.mxu0 0.0
        %682 = vmatpush1.msra.mxu0 %v659
        %683 = vmatprep.subr.mxu0 0.0
        %684 = vmatpush1.msra.mxu0 %v660
        %685 = vmatprep.subr.mxu0 0.0
        %686 = vmatpush1.msra.mxu0 0.0
        %687 = vmatprep.subr.mxu0 0.0
        %688 = vmatpush1.msra.mxu0 0.0
        %689 = vmatprep.subr.mxu0 0.0
        %690 = vmatpush1.msra.mxu0 0.0
        %691 = vmatprep.subr.mxu0 0.0
        %692 = vmatpush1.msra.mxu0 0.0
        %693 = vmatprep.subr.mxu0 0.0
        %694 = vmatpush1.msra.mxu0 0.0
        %695 = vmatprep.subr.mxu0 0.0
        %696 = vmatpush1.msra.mxu0 0.0
        %697 = vmatprep.subr.mxu0 0.0
        %698 = vmatpush1.msra.mxu0 0.0
        %699 = vmatprep.subr.mxu0 0.0
        %700 = vmatpush1.msra.mxu0 0.0
        %701 = vmatprep.subr.mxu0 0.0
        %702 = vmatpush1.msra.mxu0 0.0
        %703 = vmatprep.subr.mxu0 0.0
        %704 = vmatpush1.msra.mxu0 0.0
        %705 = vmatprep.subr.mxu0 0.0
        %706 = vmatpush1.msra.mxu0 0.0
        %707 = vmatprep.subr.mxu0 0.0
        %708 = vmatpush1.msra.mxu0 0.0
        %709 = vmatprep.subr.mxu0 0.0
        %710 = vmatpush1.msra.mxu0 0.0
        %711 = vmatprep.subr.mxu0 0.0
        %712 = vmatpush1.msra.mxu0 0.0
        %713 = vmatprep.subr.mxu0 0.0
        %714 = vmatpush1.msra.mxu0 0.0
        %715 = vmatprep.subr.mxu0 0.0
        %716 = vmatpush1.msra.mxu0 0.0
        %717 = vmatprep.subr.mxu0 0.0
        %718 = vmatpush1.msra.mxu0 0.0
        %719 = vmatprep.subr.mxu0 0.0
        %720 = vmatpush1.msra.mxu0 0.0
        %721 = vmatprep.subr.mxu0 0.0
        %722 = vmatpush1.msra.mxu0 0.0
        %723 = vmatprep.subr.mxu0 0.0
        %724 = vmatpush1.msra.mxu0 0.0
        %725 = vmatprep.subr.mxu0 0.0
        %726 = vmatpush1.msra.mxu0 0.0
        %727 = vmatprep.subr.mxu0 0.0
        %728 = vmatpush1.msra.mxu0 0.0
        %729 = vmatprep.subr.mxu0 0.0
        %730 = vmatpush1.msra.mxu0 0.0
        %731 = vmatprep.subr.mxu0 0.0
        %732 = vmatpush1.msra.mxu0 0.0
        %733 = vmatprep.subr.mxu0 0.0
        %734 = vmatpush1.msra.mxu0 0.0
        %735 = vmatprep.subr.mxu0 0.0
        %736 = vmatpush1.msra.mxu0 0.0
        %737 = vmatprep.subr.mxu0 0.0
        %738 = vmatpush1.msra.mxu0 0.0
        %739 = vmatprep.mubr.f32.mxu0 0.0
        %740 = vmatmul.mubr.f32.gmra.mrb[0].mxu0 %v670
        %v741 = vpop.f32.mrb[0].mxu0
        %v742 = vadd.f32 %v666, %v741
        %v743 = vpop.f32.mrb[0].mxu0
        %744 = vmatprep.mubr.f32.mxu0 0.0
        %745 = vmatmul.mubr.f32.gmra.mrb[0].mxu0 %v673
        %v746 = vpop.f32.mrb[0].mxu0
        %v747 = vadd.f32 %v666, %v746
        %v748 = vpop.f32.mrb[0].mxu0
        %749 = vdwg.mxu0
        %v750 = vxor.u32 %v742, 2147483648
        %v751 = vxor.u32 %v747, 2147483648
        %v752 = vmul.f32 %v750, 1.442695
        %v753 = vpow.pop %v752
        %v754 = vmul.f32 %v751, 1.442695
        %v755 = vpow.pop %v754
        %v756 = vadd.f32 %v753, 1.0
        %v757 = vadd.f32 %v755, 1.0
        %v758 = vrcp.pop %v756
        %v759 = vmul.f32 1.0, %v758
        %v760 = vrcp.pop %v757
        %v761 = vmul.f32 1.0, %v760
        %v762 = vtanh.pop %v742
        %v763 = vtanh.pop %v747
        %766 = vrot.lane.b32.xlu0 %v762, 112
        %v767 = vpop.permute.xlu0 %766
        %768 = vrot.lane.b32.xlu0 %v763, 112
        %v769 = vpop.permute.xlu0 %768
        %v772 = vmul.f32 %v759, %v767
        %v773 = vmul.f32 %v761, %v769
        %v774 = vld [vmem:[%s6] sm:$0xff]
        %v775 = vld [vmem:[%s6 + $0x8] sm:$0xff]
        %v776 = vld [vmem:[%s7] sm:$0x1]
        %v778 = vlaneseq
        %v779 = vshrl.u32 %v778, 7
        %v780 = vsub.s32 0, %v779
        %v781 = vrot.slane %v776, %v780
        %v784 = vsel %vm651, %v772, 0
        %v787 = vsel %vm651, %v773, 0
        %789 = vmatprep.subr.mxu0 0.0
        %790 = vmatpush1.msra.mxu0 %v774
        %791 = vmatprep.subr.mxu0 0.0
        %792 = vmatpush1.msra.mxu0 %v775
        %793 = vmatprep.subr.mxu0 0.0
        %794 = vmatpush1.msra.mxu0 0.0
        %795 = vmatprep.subr.mxu0 0.0
        %796 = vmatpush1.msra.mxu0 0.0
        %797 = vmatprep.subr.mxu0 0.0
        %798 = vmatpush1.msra.mxu0 0.0
        %799 = vmatprep.subr.mxu0 0.0
        %800 = vmatpush1.msra.mxu0 0.0
        %801 = vmatprep.subr.mxu0 0.0
        %802 = vmatpush1.msra.mxu0 0.0
        %803 = vmatprep.subr.mxu0 0.0
        %804 = vmatpush1.msra.mxu0 0.0
        %805 = vmatprep.subr.mxu0 0.0
        %806 = vmatpush1.msra.mxu0 0.0
        %807 = vmatprep.subr.mxu0 0.0
        %808 = vmatpush1.msra.mxu0 0.0
        %809 = vmatprep.subr.mxu0 0.0
        %810 = vmatpush1.msra.mxu0 0.0
        %811 = vmatprep.subr.mxu0 0.0
        %812 = vmatpush1.msra.mxu0 0.0
        %813 = vmatprep.subr.mxu0 0.0
        %814 = vmatpush1.msra.mxu0 0.0
        %815 = vmatprep.subr.mxu0 0.0
        %816 = vmatpush1.msra.mxu0 0.0
        %817 = vmatprep.subr.mxu0 0.0
        %818 = vmatpush1.msra.mxu0 0.0
        %819 = vmatprep.subr.mxu0 0.0
        %820 = vmatpush1.msra.mxu0 0.0
        %821 = vmatprep.subr.mxu0 0.0
        %822 = vmatpush1.msra.mxu0 0.0
        %823 = vmatprep.subr.mxu0 0.0
        %824 = vmatpush1.msra.mxu0 0.0
        %825 = vmatprep.subr.mxu0 0.0
        %826 = vmatpush1.msra.mxu0 0.0
        %827 = vmatprep.subr.mxu0 0.0
        %828 = vmatpush1.msra.mxu0 0.0
        %829 = vmatprep.subr.mxu0 0.0
        %830 = vmatpush1.msra.mxu0 0.0
        %831 = vmatprep.subr.mxu0 0.0
        %832 = vmatpush1.msra.mxu0 0.0
        %833 = vmatprep.subr.mxu0 0.0
        %834 = vmatpush1.msra.mxu0 0.0
        %835 = vmatprep.subr.mxu0 0.0
        %836 = vmatpush1.msra.mxu0 0.0
        %837 = vmatprep.subr.mxu0 0.0
        %838 = vmatpush1.msra.mxu0 0.0
        %839 = vmatprep.subr.mxu0 0.0
        %840 = vmatpush1.msra.mxu0 0.0
        %841 = vmatprep.subr.mxu0 0.0
        %842 = vmatpush1.msra.mxu0 0.0
        %843 = vmatprep.subr.mxu0 0.0
        %844 = vmatpush1.msra.mxu0 0.0
        %845 = vmatprep.subr.mxu0 0.0
        %846 = vmatpush1.msra.mxu0 0.0
        %847 = vmatprep.subr.mxu0 0.0
        %848 = vmatpush1.msra.mxu0 0.0
        %849 = vmatprep.subr.mxu0 0.0
        %850 = vmatpush1.msra.mxu0 0.0
        %851 = vmatprep.subr.mxu0 0.0
        %852 = vmatpush1.msra.mxu0 0.0
        %853 = vmatprep.mubr.f32.mxu0 0.0
        %854 = vmatmul.mubr.f32.gmra.mrb[0].mxu0 %v784
        %v855 = vpop.f32.mrb[0].mxu0
        %v856 = vadd.f32 %v781, %v855
        %v857 = vpop.f32.mrb[0].mxu0
        %858 = vmatprep.mubr.f32.mxu0 0.0
        %859 = vmatmul.mubr.f32.gmra.mrb[0].mxu0 %v787
        %v860 = vpop.f32.mrb[0].mxu0
        %v861 = vadd.f32 %v781, %v860
        %v862 = vpop.f32.mrb[0].mxu0
        %863 = vdwg.mxu0
        %v864 = vld [vmem:[%s8] sm:$0xff]
        %v865 = vld [vmem:[%s8 + $0x8] sm:$0xff]
        %866 = vmatprep.subr.mxu0 0.0
        %867 = vmatpush1.msra.mxu0 %v864
        %868 = vmatprep.subr.mxu0 0.0
        %869 = vmatpush1.msra.mxu0 %v865
        %870 = vmatprep.subr.mxu0 0.0
        %871 = vmatpush1.msra.mxu0 0.0
        %872 = vmatprep.subr.mxu0 0.0
        %873 = vmatpush1.msra.mxu0 0.0
        %874 = vmatprep.subr.mxu0 0.0
        %875 = vmatpush1.msra.mxu0 0.0
        %876 = vmatprep.subr.mxu0 0.0
        %877 = vmatpush1.msra.mxu0 0.0
        %878 = vmatprep.subr.mxu0 0.0
        %879 = vmatpush1.msra.mxu0 0.0
        %880 = vmatprep.subr.mxu0 0.0
        %881 = vmatpush1.msra.mxu0 0.0
        %882 = vmatprep.subr.mxu0 0.0
        %883 = vmatpush1.msra.mxu0 0.0
        %884 = vmatprep.subr.mxu0 0.0
        %885 = vmatpush1.msra.mxu0 0.0
        %886 = vmatprep.subr.mxu0 0.0
        %887 = vmatpush1.msra.mxu0 0.0
        %888 = vmatprep.subr.mxu0 0.0
        %889 = vmatpush1.msra.mxu0 0.0
        %890 = vmatprep.subr.mxu0 0.0
        %891 = vmatpush1.msra.mxu0 0.0
        %892 = vmatprep.subr.mxu0 0.0
        %893 = vmatpush1.msra.mxu0 0.0
        %894 = vmatprep.subr.mxu0 0.0
        %895 = vmatpush1.msra.mxu0 0.0
        %896 = vmatprep.subr.mxu0 0.0
        %897 = vmatpush1.msra.mxu0 0.0
        %898 = vmatprep.subr.mxu0 0.0
        %899 = vmatpush1.msra.mxu0 0.0
        %900 = vmatprep.subr.mxu0 0.0
        %901 = vmatpush1.msra.mxu0 0.0
        %902 = vmatprep.subr.mxu0 0.0
        %903 = vmatpush1.msra.mxu0 0.0
        %904 = vmatprep.subr.mxu0 0.0
        %905 = vmatpush1.msra.mxu0 0.0
        %906 = vmatprep.subr.mxu0 0.0
        %907 = vmatpush1.msra.mxu0 0.0
        %908 = vmatprep.subr.mxu0 0.0
        %909 = vmatpush1.msra.mxu0 0.0
        %910 = vmatprep.subr.mxu0 0.0
        %911 = vmatpush1.msra.mxu0 0.0
        %912 = vmatprep.subr.mxu0 0.0
        %913 = vmatpush1.msra.mxu0 0.0
        %914 = vmatprep.subr.mxu0 0.0
        %915 = vmatpush1.msra.mxu0 0.0
        %916 = vmatprep.subr.mxu0 0.0
        %917 = vmatpush1.msra.mxu0 0.0
        %918 = vmatprep.subr.mxu0 0.0
        %919 = vmatpush1.msra.mxu0 0.0
        %920 = vmatprep.subr.mxu0 0.0
        %921 = vmatpush1.msra.mxu0 0.0
        %922 = vmatprep.subr.mxu0 0.0
        %923 = vmatpush1.msra.mxu0 0.0
        %924 = vmatprep.subr.mxu0 0.0
        %925 = vmatpush1.msra.mxu0 0.0
        %926 = vmatprep.subr.mxu0 0.0
        %927 = vmatpush1.msra.mxu0 0.0
        %928 = vmatprep.subr.mxu0 0.0
        %929 = vmatpush1.msra.mxu0 0.0
        %930 = vmatprep.mubr.f32.mxu0 0.0
        %931 = vmatmul.mubr.f32.gmra.mrb[0].mxu0 %v784
        %v932 = vpop.f32.mrb[0].mxu0
        %v933 = vadd.f32 0.0, %v932
        %v934 = vpop.f32.mrb[0].mxu0
        %935 = vmatprep.mubr.f32.mxu0 0.0
        %936 = vmatmul.mubr.f32.gmra.mrb[0].mxu0 %v787
        %v937 = vpop.f32.mrb[0].mxu0
        %v938 = vadd.f32 0.0, %v937
        %v939 = vpop.f32.mrb[0].mxu0
        %940 = vdwg.mxu0
        %v941 = vadd.f32 %v619, %v933
        %v942 = vadd.f32 %v624, %v938
        %v943 = vld [vmem:[%s9] sm:$0x1]
        %v945 = vlaneseq
        %v946 = vshrl.u32 %v945, 7
        %v947 = vsub.s32 0, %v946
        %v948 = vrot.slane %v943, %v947
        %v950 = vadd.f32 %v941, %v948
        %v951 = vadd.f32 %v942, %v948
        %vm952 = vcmp.ge.s32.totalorder %v508, 2
        %vm953 = vcmp.ge.s32.totalorder %v509, 2
        %v954 = vrot.slane %v950, 6
        %v955 = vrot.slane %v951, 6
        %vm956 = vcmp.lt.s32.totalorder %v508, 2
        %v957 = vsel %vm956, %v954, %v955
        %v958 = vsel %vm956, %v955, %v954
        %v959 = vsel %vm952, %v958, 0.0
        %v960 = vsel %vm953, %v957, 0.0
        %963 = vrot.lane.b32.xlu0 %v950, 16
        %v964 = vpop.permute.xlu0 %963
        %965 = vrot.lane.b32.xlu0 %v951, 16
        %v966 = vpop.permute.xlu0 %965
        %v969 = vsel %vm651, %v959, %v964
        %v970 = vsel %vm651, %v960, %v966
        %v971 = vsel %vm527, %v969, %v646
        %v972 = vsel %vm527, %v970, %v648
        %s973 = scalar_lea.vmem %s4, 40
        %v974 = vld [vmem:[%s973] sm:$0xff]
        %v975 = vld [vmem:[%s973 + $0x8] sm:$0xff]
        %v976 = vld [vmem:[%s973 + $0x10] sm:$0xff]
        %v977 = vld [vmem:[%s973 + $0x18] sm:$0xff]
        %v978 = vld [vmem:[%s973 + $0x20] sm:$0xff]
        %s979 = scalar_lea.vmem %s5, 1
        %v980 = vld [vmem:[%s979] sm:$0x1]
        %v982 = vlaneseq
        %v983 = vshrl.u32 %v982, 7
        %v984 = vsub.s32 0, %v983
        %v985 = vrot.slane %v980, %v984
        %v988 = vsel %vm668, %v971, 0
        %v991 = vsel %vm668, %v972, 0
        %993 = vmatprep.subr.mxu0 0.0
        %994 = vmatpush1.msra.mxu0 %v974
        %995 = vmatprep.subr.mxu0 0.0
        %996 = vmatpush1.msra.mxu0 %v975
        %997 = vmatprep.subr.mxu0 0.0
        %998 = vmatpush1.msra.mxu0 %v976
        %999 = vmatprep.subr.mxu0 0.0
        %1000 = vmatpush1.msra.mxu0 %v977
        %1001 = vmatprep.subr.mxu0 0.0
        %1002 = vmatpush1.msra.mxu0 %v978
        %1003 = vmatprep.subr.mxu0 0.0
        %1004 = vmatpush1.msra.mxu0 0.0
        %1005 = vmatprep.subr.mxu0 0.0
        %1006 = vmatpush1.msra.mxu0 0.0
        %1007 = vmatprep.subr.mxu0 0.0
        %1008 = vmatpush1.msra.mxu0 0.0
        %1009 = vmatprep.subr.mxu0 0.0
        %1010 = vmatpush1.msra.mxu0 0.0
        %1011 = vmatprep.subr.mxu0 0.0
        %1012 = vmatpush1.msra.mxu0 0.0
        %1013 = vmatprep.subr.mxu0 0.0
        %1014 = vmatpush1.msra.mxu0 0.0
        %1015 = vmatprep.subr.mxu0 0.0
        %1016 = vmatpush1.msra.mxu0 0.0
        %1017 = vmatprep.subr.mxu0 0.0
        %1018 = vmatpush1.msra.mxu0 0.0
        %1019 = vmatprep.subr.mxu0 0.0
        %1020 = vmatpush1.msra.mxu0 0.0
        %1021 = vmatprep.subr.mxu0 0.0
        %1022 = vmatpush1.msra.mxu0 0.0
        %1023 = vmatprep.subr.mxu0 0.0
        %1024 = vmatpush1.msra.mxu0 0.0
        %1025 = vmatprep.subr.mxu0 0.0
        %1026 = vmatpush1.msra.mxu0 0.0
        %1027 = vmatprep.subr.mxu0 0.0
        %1028 = vmatpush1.msra.mxu0 0.0
        %1029 = vmatprep.subr.mxu0 0.0
        %1030 = vmatpush1.msra.mxu0 0.0
        %1031 = vmatprep.subr.mxu0 0.0
        %1032 = vmatpush1.msra.mxu0 0.0
        %1033 = vmatprep.subr.mxu0 0.0
        %1034 = vmatpush1.msra.mxu0 0.0
        %1035 = vmatprep.subr.mxu0 0.0
        %1036 = vmatpush1.msra.mxu0 0.0
        %1037 = vmatprep.subr.mxu0 0.0
        %1038 = vmatpush1.msra.mxu0 0.0
        %1039 = vmatprep.subr.mxu0 0.0
        %1040 = vmatpush1.msra.mxu0 0.0
        %1041 = vmatprep.subr.mxu0 0.0
        %1042 = vmatpush1.msra.mxu0 0.0
        %1043 = vmatprep.subr.mxu0 0.0
        %1044 = vmatpush1.msra.mxu0 0.0
        %1045 = vmatprep.subr.mxu0 0.0
        %1046 = vmatpush1.msra.mxu0 0.0
        %1047 = vmatprep.subr.mxu0 0.0
        %1048 = vmatpush1.msra.mxu0 0.0
        %1049 = vmatprep.subr.mxu0 0.0
        %1050 = vmatpush1.msra.mxu0 0.0
        %1051 = vmatprep.subr.mxu0 0.0
        %1052 = vmatpush1.msra.mxu0 0.0
        %1053 = vmatprep.subr.mxu0 0.0
        %1054 = vmatpush1.msra.mxu0 0.0
        %1055 = vmatprep.subr.mxu0 0.0
        %1056 = vmatpush1.msra.mxu0 0.0
        %1057 = vmatprep.mubr.f32.mxu0 0.0
        %1058 = vmatmul.mubr.f32.gmra.mrb[0].mxu0 %v988
        %v1059 = vpop.f32.mrb[0].mxu0
        %v1060 = vadd.f32 %v985, %v1059
        %v1061 = vpop.f32.mrb[0].mxu0
        %1062 = vmatprep.mubr.f32.mxu0 0.0
        %1063 = vmatmul.mubr.f32.gmra.mrb[0].mxu0 %v991
        %v1064 = vpop.f32.mrb[0].mxu0
        %v1065 = vadd.f32 %v985, %v1064
        %v1066 = vpop.f32.mrb[0].mxu0
        %1067 = vdwg.mxu0
        %v1068 = vxor.u32 %v1060, 2147483648
        %v1069 = vxor.u32 %v1065, 2147483648
        %v1070 = vmul.f32 %v1068, 1.442695
        %v1071 = vpow.pop %v1070
        %v1072 = vmul.f32 %v1069, 1.442695
        %v1073 = vpow.pop %v1072
        %v1074 = vadd.f32 %v1071, 1.0
        %v1075 = vadd.f32 %v1073, 1.0
        %v1076 = vrcp.pop %v1074
        %v1077 = vmul.f32 1.0, %v1076
        %v1078 = vrcp.pop %v1075
        %v1079 = vmul.f32 1.0, %v1078
        %v1080 = vtanh.pop %v1060
        %v1081 = vtanh.pop %v1065
        %1084 = vrot.lane.b32.xlu0 %v1080, 112
        %v1085 = vpop.permute.xlu0 %1084
        %1086 = vrot.lane.b32.xlu0 %v1081, 112
        %v1087 = vpop.permute.xlu0 %1086
        %v1090 = vmul.f32 %v1077, %v1085
        %v1091 = vmul.f32 %v1079, %v1087
        %s1092 = scalar_lea.vmem %s6, 16
        %v1093 = vld [vmem:[%s1092] sm:$0xff]
        %v1094 = vld [vmem:[%s1092 + $0x8] sm:$0xff]
        %v1096 = vsel %vm651, %v1090, 0
        %v1099 = vsel %vm651, %v1091, 0
        %1101 = vmatprep.subr.mxu0 0.0
        %1102 = vmatpush1.msra.mxu0 %v1093
        %1103 = vmatprep.subr.mxu0 0.0
        %1104 = vmatpush1.msra.mxu0 %v1094
        %1105 = vmatprep.subr.mxu0 0.0
        %1106 = vmatpush1.msra.mxu0 0.0
        %1107 = vmatprep.subr.mxu0 0.0
        %1108 = vmatpush1.msra.mxu0 0.0
        %1109 = vmatprep.subr.mxu0 0.0
        %1110 = vmatpush1.msra.mxu0 0.0
        %1111 = vmatprep.subr.mxu0 0.0
        %1112 = vmatpush1.msra.mxu0 0.0
        %1113 = vmatprep.subr.mxu0 0.0
        %1114 = vmatpush1.msra.mxu0 0.0
        %1115 = vmatprep.subr.mxu0 0.0
        %1116 = vmatpush1.msra.mxu0 0.0
        %1117 = vmatprep.subr.mxu0 0.0
        %1118 = vmatpush1.msra.mxu0 0.0
        %1119 = vmatprep.subr.mxu0 0.0
        %1120 = vmatpush1.msra.mxu0 0.0
        %1121 = vmatprep.subr.mxu0 0.0
        %1122 = vmatpush1.msra.mxu0 0.0
        %1123 = vmatprep.subr.mxu0 0.0
        %1124 = vmatpush1.msra.mxu0 0.0
        %1125 = vmatprep.subr.mxu0 0.0
        %1126 = vmatpush1.msra.mxu0 0.0
        %1127 = vmatprep.subr.mxu0 0.0
        %1128 = vmatpush1.msra.mxu0 0.0
        %1129 = vmatprep.subr.mxu0 0.0
        %1130 = vmatpush1.msra.mxu0 0.0
        %1131 = vmatprep.subr.mxu0 0.0
        %1132 = vmatpush1.msra.mxu0 0.0
        %1133 = vmatprep.subr.mxu0 0.0
        %1134 = vmatpush1.msra.mxu0 0.0
        %1135 = vmatprep.subr.mxu0 0.0
        %1136 = vmatpush1.msra.mxu0 0.0
        %1137 = vmatprep.subr.mxu0 0.0
        %1138 = vmatpush1.msra.mxu0 0.0
        %1139 = vmatprep.subr.mxu0 0.0
        %1140 = vmatpush1.msra.mxu0 0.0
        %1141 = vmatprep.subr.mxu0 0.0
        %1142 = vmatpush1.msra.mxu0 0.0
        %1143 = vmatprep.subr.mxu0 0.0
        %1144 = vmatpush1.msra.mxu0 0.0
        %1145 = vmatprep.subr.mxu0 0.0
        %1146 = vmatpush1.msra.mxu0 0.0
        %1147 = vmatprep.subr.mxu0 0.0
        %1148 = vmatpush1.msra.mxu0 0.0
        %1149 = vmatprep.subr.mxu0 0.0
        %1150 = vmatpush1.msra.mxu0 0.0
        %1151 = vmatprep.subr.mxu0 0.0
        %1152 = vmatpush1.msra.mxu0 0.0
        %1153 = vmatprep.subr.mxu0 0.0
        %1154 = vmatpush1.msra.mxu0 0.0
        %1155 = vmatprep.subr.mxu0 0.0
        %1156 = vmatpush1.msra.mxu0 0.0
        %1157 = vmatprep.subr.mxu0 0.0
        %1158 = vmatpush1.msra.mxu0 0.0
        %1159 = vmatprep.subr.mxu0 0.0
        %1160 = vmatpush1.msra.mxu0 0.0
        %1161 = vmatprep.subr.mxu0 0.0
        %1162 = vmatpush1.msra.mxu0 0.0
        %1163 = vmatprep.subr.mxu0 0.0
        %1164 = vmatpush1.msra.mxu0 0.0
        %1165 = vmatprep.mubr.f32.mxu0 0.0
        %1166 = vmatmul.mubr.f32.gmra.mrb[0].mxu0 %v1096
        %v1167 = vpop.f32.mrb[0].mxu0
        %v1168 = vadd.f32 0.0, %v1167
        %v1169 = vpop.f32.mrb[0].mxu0
        %1170 = vmatprep.mubr.f32.mxu0 0.0
        %1171 = vmatmul.mubr.f32.gmra.mrb[0].mxu0 %v1099
        %v1172 = vpop.f32.mrb[0].mxu0
        %v1173 = vadd.f32 0.0, %v1172
        %v1174 = vpop.f32.mrb[0].mxu0
        %1175 = vdwg.mxu0
        %v1176 = vadd.f32 %v856, %v1168
        %v1177 = vadd.f32 %v861, %v1173
        %s1178 = scalar_lea.vmem %s7, 1
        %v1179 = vld [vmem:[%s1178] sm:$0x1]
        %v1181 = vlaneseq
        %v1182 = vshrl.u32 %v1181, 7
        %v1183 = vsub.s32 0, %v1182
        %v1184 = vrot.slane %v1179, %v1183
        %v1186 = vadd.f32 %v1176, %v1184
        %v1187 = vadd.f32 %v1177, %v1184
        %s1188 = scalar_lea.vmem %s8, 16
        %v1189 = vld [vmem:[%s1188] sm:$0xff]
        %v1190 = vld [vmem:[%s1188 + $0x8] sm:$0xff]
        %1191 = vmatprep.subr.mxu0 0.0
        %1192 = vmatpush1.msra.mxu0 %v1189
        %1193 = vmatprep.subr.mxu0 0.0
        %1194 = vmatpush1.msra.mxu0 %v1190
        %1195 = vmatprep.subr.mxu0 0.0
        %1196 = vmatpush1.msra.mxu0 0.0
        %1197 = vmatprep.subr.mxu0 0.0
        %1198 = vmatpush1.msra.mxu0 0.0
        %1199 = vmatprep.subr.mxu0 0.0
        %1200 = vmatpush1.msra.mxu0 0.0
        %1201 = vmatprep.subr.mxu0 0.0
        %1202 = vmatpush1.msra.mxu0 0.0
        %1203 = vmatprep.subr.mxu0 0.0
        %1204 = vmatpush1.msra.mxu0 0.0
        %1205 = vmatprep.subr.mxu0 0.0
        %1206 = vmatpush1.msra.mxu0 0.0
        %1207 = vmatprep.subr.mxu0 0.0
        %1208 = vmatpush1.msra.mxu0 0.0
        %1209 = vmatprep.subr.mxu0 0.0
        %1210 = vmatpush1.msra.mxu0 0.0
        %1211 = vmatprep.subr.mxu0 0.0
        %1212 = vmatpush1.msra.mxu0 0.0
        %1213 = vmatprep.subr.mxu0 0.0
        %1214 = vmatpush1.msra.mxu0 0.0
        %1215 = vmatprep.subr.mxu0 0.0
        %1216 = vmatpush1.msra.mxu0 0.0
        %1217 = vmatprep.subr.mxu0 0.0
        %1218 = vmatpush1.msra.mxu0 0.0
        %1219 = vmatprep.subr.mxu0 0.0
        %1220 = vmatpush1.msra.mxu0 0.0
        %1221 = vmatprep.subr.mxu0 0.0
        %1222 = vmatpush1.msra.mxu0 0.0
        %1223 = vmatprep.subr.mxu0 0.0
        %1224 = vmatpush1.msra.mxu0 0.0
        %1225 = vmatprep.subr.mxu0 0.0
        %1226 = vmatpush1.msra.mxu0 0.0
        %1227 = vmatprep.subr.mxu0 0.0
        %1228 = vmatpush1.msra.mxu0 0.0
        %1229 = vmatprep.subr.mxu0 0.0
        %1230 = vmatpush1.msra.mxu0 0.0
        %1231 = vmatprep.subr.mxu0 0.0
        %1232 = vmatpush1.msra.mxu0 0.0
        %1233 = vmatprep.subr.mxu0 0.0
        %1234 = vmatpush1.msra.mxu0 0.0
        %1235 = vmatprep.subr.mxu0 0.0
        %1236 = vmatpush1.msra.mxu0 0.0
        %1237 = vmatprep.subr.mxu0 0.0
        %1238 = vmatpush1.msra.mxu0 0.0
        %1239 = vmatprep.subr.mxu0 0.0
        %1240 = vmatpush1.msra.mxu0 0.0
        %1241 = vmatprep.subr.mxu0 0.0
        %1242 = vmatpush1.msra.mxu0 0.0
        %1243 = vmatprep.subr.mxu0 0.0
        %1244 = vmatpush1.msra.mxu0 0.0
        %1245 = vmatprep.subr.mxu0 0.0
        %1246 = vmatpush1.msra.mxu0 0.0
        %1247 = vmatprep.subr.mxu0 0.0
        %1248 = vmatpush1.msra.mxu0 0.0
        %1249 = vmatprep.subr.mxu0 0.0
        %1250 = vmatpush1.msra.mxu0 0.0
        %1251 = vmatprep.subr.mxu0 0.0
        %1252 = vmatpush1.msra.mxu0 0.0
        %1253 = vmatprep.subr.mxu0 0.0
        %1254 = vmatpush1.msra.mxu0 0.0
        %1255 = vmatprep.mubr.f32.mxu0 0.0
        %1256 = vmatmul.mubr.f32.gmra.mrb[0].mxu0 %v1096
        %v1257 = vpop.f32.mrb[0].mxu0
        %v1258 = vadd.f32 0.0, %v1257
        %v1259 = vpop.f32.mrb[0].mxu0
        %1260 = vmatprep.mubr.f32.mxu0 0.0
        %1261 = vmatmul.mubr.f32.gmra.mrb[0].mxu0 %v1099
        %v1262 = vpop.f32.mrb[0].mxu0
        %v1263 = vadd.f32 0.0, %v1262
        %v1264 = vpop.f32.mrb[0].mxu0
        %1265 = vdwg.mxu0
        %v1266 = vadd.f32 %v950, %v1258
        %v1267 = vadd.f32 %v951, %v1263
        %s1268 = scalar_lea.vmem %s9, 1
        %v1269 = vld [vmem:[%s1268] sm:$0x1]
        %v1271 = vlaneseq
        %v1272 = vshrl.u32 %v1271, 7
        %v1273 = vsub.s32 0, %v1272
        %v1274 = vrot.slane %v1269, %v1273
        %v1276 = vadd.f32 %v1266, %v1274
        %v1277 = vadd.f32 %v1267, %v1274
        %vm1278 = vcmp.ge.s32.totalorder %v508, 4
        %vm1279 = vcmp.ge.s32.totalorder %v509, 4
        %v1280 = vrot.slane %v1276, 4
        %v1281 = vrot.slane %v1277, 4
        %vm1282 = vcmp.lt.s32.totalorder %v508, 4
        %v1283 = vsel %vm1282, %v1280, %v1281
        %v1284 = vsel %vm1282, %v1281, %v1280
        %v1285 = vsel %vm1278, %v1284, 0.0
        %v1286 = vsel %vm1279, %v1283, 0.0
        %1289 = vrot.lane.b32.xlu0 %v1276, 16
        %v1290 = vpop.permute.xlu0 %1289
        %1291 = vrot.lane.b32.xlu0 %v1277, 16
        %v1292 = vpop.permute.xlu0 %1291
        %v1295 = vsel %vm651, %v1285, %v1290
        %v1296 = vsel %vm651, %v1286, %v1292
        %v1297 = vsel %vm527, %v1295, %v646
        %v1298 = vsel %vm527, %v1296, %v648
        %s1299 = scalar_lea.vmem %s4, 80
        %v1300 = vld [vmem:[%s1299] sm:$0xff]
        %v1301 = vld [vmem:[%s1299 + $0x8] sm:$0xff]
        %v1302 = vld [vmem:[%s1299 + $0x10] sm:$0xff]
        %v1303 = vld [vmem:[%s1299 + $0x18] sm:$0xff]
        %v1304 = vld [vmem:[%s1299 + $0x20] sm:$0xff]
        %s1305 = scalar_lea.vmem %s5, 2
        %v1306 = vld [vmem:[%s1305] sm:$0x1]
        %v1308 = vlaneseq
        %v1309 = vshrl.u32 %v1308, 7
        %v1310 = vsub.s32 0, %v1309
        %v1311 = vrot.slane %v1306, %v1310
        %v1314 = vsel %vm668, %v1297, 0
        %v1317 = vsel %vm668, %v1298, 0
        %1319 = vmatprep.subr.mxu0 0.0
        %1320 = vmatpush1.msra.mxu0 %v1300
        %1321 = vmatprep.subr.mxu0 0.0
        %1322 = vmatpush1.msra.mxu0 %v1301
        %1323 = vmatprep.subr.mxu0 0.0
        %1324 = vmatpush1.msra.mxu0 %v1302
        %1325 = vmatprep.subr.mxu0 0.0
        %1326 = vmatpush1.msra.mxu0 %v1303
        %1327 = vmatprep.subr.mxu0 0.0
        %1328 = vmatpush1.msra.mxu0 %v1304
        %1329 = vmatprep.subr.mxu0 0.0
        %1330 = vmatpush1.msra.mxu0 0.0
        %1331 = vmatprep.subr.mxu0 0.0
        %1332 = vmatpush1.msra.mxu0 0.0
        %1333 = vmatprep.subr.mxu0 0.0
        %1334 = vmatpush1.msra.mxu0 0.0
        %1335 = vmatprep.subr.mxu0 0.0
        %1336 = vmatpush1.msra.mxu0 0.0
        %1337 = vmatprep.subr.mxu0 0.0
        %1338 = vmatpush1.msra.mxu0 0.0
        %1339 = vmatprep.subr.mxu0 0.0
        %1340 = vmatpush1.msra.mxu0 0.0
        %1341 = vmatprep.subr.mxu0 0.0
        %1342 = vmatpush1.msra.mxu0 0.0
        %1343 = vmatprep.subr.mxu0 0.0
        %1344 = vmatpush1.msra.mxu0 0.0
        %1345 = vmatprep.subr.mxu0 0.0
        %1346 = vmatpush1.msra.mxu0 0.0
        %1347 = vmatprep.subr.mxu0 0.0
        %1348 = vmatpush1.msra.mxu0 0.0
        %1349 = vmatprep.subr.mxu0 0.0
        %1350 = vmatpush1.msra.mxu0 0.0
        %1351 = vmatprep.subr.mxu0 0.0
        %1352 = vmatpush1.msra.mxu0 0.0
        %1353 = vmatprep.subr.mxu0 0.0
        %1354 = vmatpush1.msra.mxu0 0.0
        %1355 = vmatprep.subr.mxu0 0.0
        %1356 = vmatpush1.msra.mxu0 0.0
        %1357 = vmatprep.subr.mxu0 0.0
        %1358 = vmatpush1.msra.mxu0 0.0
        %1359 = vmatprep.subr.mxu0 0.0
        %1360 = vmatpush1.msra.mxu0 0.0
        %1361 = vmatprep.subr.mxu0 0.0
        %1362 = vmatpush1.msra.mxu0 0.0
        %1363 = vmatprep.subr.mxu0 0.0
        %1364 = vmatpush1.msra.mxu0 0.0
        %1365 = vmatprep.subr.mxu0 0.0
        %1366 = vmatpush1.msra.mxu0 0.0
        %1367 = vmatprep.subr.mxu0 0.0
        %1368 = vmatpush1.msra.mxu0 0.0
        %1369 = vmatprep.subr.mxu0 0.0
        %1370 = vmatpush1.msra.mxu0 0.0
        %1371 = vmatprep.subr.mxu0 0.0
        %1372 = vmatpush1.msra.mxu0 0.0
        %1373 = vmatprep.subr.mxu0 0.0
        %1374 = vmatpush1.msra.mxu0 0.0
        %1375 = vmatprep.subr.mxu0 0.0
        %1376 = vmatpush1.msra.mxu0 0.0
        %1377 = vmatprep.subr.mxu0 0.0
        %1378 = vmatpush1.msra.mxu0 0.0
        %1379 = vmatprep.subr.mxu0 0.0
        %1380 = vmatpush1.msra.mxu0 0.0
        %1381 = vmatprep.subr.mxu0 0.0
        %1382 = vmatpush1.msra.mxu0 0.0
        %1383 = vmatprep.mubr.f32.mxu0 0.0
        %1384 = vmatmul.mubr.f32.gmra.mrb[0].mxu0 %v1314
        %v1385 = vpop.f32.mrb[0].mxu0
        %v1386 = vadd.f32 %v1311, %v1385
        %v1387 = vpop.f32.mrb[0].mxu0
        %1388 = vmatprep.mubr.f32.mxu0 0.0
        %1389 = vmatmul.mubr.f32.gmra.mrb[0].mxu0 %v1317
        %v1390 = vpop.f32.mrb[0].mxu0
        %v1391 = vadd.f32 %v1311, %v1390
        %v1392 = vpop.f32.mrb[0].mxu0
        %1393 = vdwg.mxu0
        %v1394 = vxor.u32 %v1386, 2147483648
        %v1395 = vxor.u32 %v1391, 2147483648
        %v1396 = vmul.f32 %v1394, 1.442695
        %v1397 = vpow.pop %v1396
        %v1398 = vmul.f32 %v1395, 1.442695
        %v1399 = vpow.pop %v1398
        %v1400 = vadd.f32 %v1397, 1.0
        %v1401 = vadd.f32 %v1399, 1.0
        %v1402 = vrcp.pop %v1400
        %v1403 = vmul.f32 1.0, %v1402
        %v1404 = vrcp.pop %v1401
        %v1405 = vmul.f32 1.0, %v1404
        %v1406 = vtanh.pop %v1386
        %v1407 = vtanh.pop %v1391
        %1410 = vrot.lane.b32.xlu0 %v1406, 112
        %v1411 = vpop.permute.xlu0 %1410
        %1412 = vrot.lane.b32.xlu0 %v1407, 112
        %v1413 = vpop.permute.xlu0 %1412
        %v1416 = vmul.f32 %v1403, %v1411
        %v1417 = vmul.f32 %v1405, %v1413
        %s1418 = scalar_lea.vmem %s6, 32
        %v1419 = vld [vmem:[%s1418] sm:$0xff]
        %v1420 = vld [vmem:[%s1418 + $0x8] sm:$0xff]
        %v1422 = vsel %vm651, %v1416, 0
        %v1425 = vsel %vm651, %v1417, 0
        %1427 = vmatprep.subr.mxu0 0.0
        %1428 = vmatpush1.msra.mxu0 %v1419
        %1429 = vmatprep.subr.mxu0 0.0
        %1430 = vmatpush1.msra.mxu0 %v1420
        %1431 = vmatprep.subr.mxu0 0.0
        %1432 = vmatpush1.msra.mxu0 0.0
        %1433 = vmatprep.subr.mxu0 0.0
        %1434 = vmatpush1.msra.mxu0 0.0
        %1435 = vmatprep.subr.mxu0 0.0
        %1436 = vmatpush1.msra.mxu0 0.0
        %1437 = vmatprep.subr.mxu0 0.0
        %1438 = vmatpush1.msra.mxu0 0.0
        %1439 = vmatprep.subr.mxu0 0.0
        %1440 = vmatpush1.msra.mxu0 0.0
        %1441 = vmatprep.subr.mxu0 0.0
        %1442 = vmatpush1.msra.mxu0 0.0
        %1443 = vmatprep.subr.mxu0 0.0
        %1444 = vmatpush1.msra.mxu0 0.0
        %1445 = vmatprep.subr.mxu0 0.0
        %1446 = vmatpush1.msra.mxu0 0.0
        %1447 = vmatprep.subr.mxu0 0.0
        %1448 = vmatpush1.msra.mxu0 0.0
        %1449 = vmatprep.subr.mxu0 0.0
        %1450 = vmatpush1.msra.mxu0 0.0
        %1451 = vmatprep.subr.mxu0 0.0
        %1452 = vmatpush1.msra.mxu0 0.0
        %1453 = vmatprep.subr.mxu0 0.0
        %1454 = vmatpush1.msra.mxu0 0.0
        %1455 = vmatprep.subr.mxu0 0.0
        %1456 = vmatpush1.msra.mxu0 0.0
        %1457 = vmatprep.subr.mxu0 0.0
        %1458 = vmatpush1.msra.mxu0 0.0
        %1459 = vmatprep.subr.mxu0 0.0
        %1460 = vmatpush1.msra.mxu0 0.0
        %1461 = vmatprep.subr.mxu0 0.0
        %1462 = vmatpush1.msra.mxu0 0.0
        %1463 = vmatprep.subr.mxu0 0.0
        %1464 = vmatpush1.msra.mxu0 0.0
        %1465 = vmatprep.subr.mxu0 0.0
        %1466 = vmatpush1.msra.mxu0 0.0
        %1467 = vmatprep.subr.mxu0 0.0
        %1468 = vmatpush1.msra.mxu0 0.0
        %1469 = vmatprep.subr.mxu0 0.0
        %1470 = vmatpush1.msra.mxu0 0.0
        %1471 = vmatprep.subr.mxu0 0.0
        %1472 = vmatpush1.msra.mxu0 0.0
        %1473 = vmatprep.subr.mxu0 0.0
        %1474 = vmatpush1.msra.mxu0 0.0
        %1475 = vmatprep.subr.mxu0 0.0
        %1476 = vmatpush1.msra.mxu0 0.0
        %1477 = vmatprep.subr.mxu0 0.0
        %1478 = vmatpush1.msra.mxu0 0.0
        %1479 = vmatprep.subr.mxu0 0.0
        %1480 = vmatpush1.msra.mxu0 0.0
        %1481 = vmatprep.subr.mxu0 0.0
        %1482 = vmatpush1.msra.mxu0 0.0
        %1483 = vmatprep.subr.mxu0 0.0
        %1484 = vmatpush1.msra.mxu0 0.0
        %1485 = vmatprep.subr.mxu0 0.0
        %1486 = vmatpush1.msra.mxu0 0.0
        %1487 = vmatprep.subr.mxu0 0.0
        %1488 = vmatpush1.msra.mxu0 0.0
        %1489 = vmatprep.subr.mxu0 0.0
        %1490 = vmatpush1.msra.mxu0 0.0
        %1491 = vmatprep.mubr.f32.mxu0 0.0
        %1492 = vmatmul.mubr.f32.gmra.mrb[0].mxu0 %v1422
        %v1493 = vpop.f32.mrb[0].mxu0
        %v1494 = vadd.f32 0.0, %v1493
        %v1495 = vpop.f32.mrb[0].mxu0
        %1496 = vmatprep.mubr.f32.mxu0 0.0
        %1497 = vmatmul.mubr.f32.gmra.mrb[0].mxu0 %v1425
        %v1498 = vpop.f32.mrb[0].mxu0
        %v1499 = vadd.f32 0.0, %v1498
        %v1500 = vpop.f32.mrb[0].mxu0
        %1501 = vdwg.mxu0
        %v1502 = vadd.f32 %v1186, %v1494
        %v1503 = vadd.f32 %v1187, %v1499
        %s1504 = scalar_lea.vmem %s7, 2
        %v1505 = vld [vmem:[%s1504] sm:$0x1]
        %v1507 = vlaneseq
        %v1508 = vshrl.u32 %v1507, 7
        %v1509 = vsub.s32 0, %v1508
        %v1510 = vrot.slane %v1505, %v1509
        %v1512 = vadd.f32 %v1502, %v1510
        %v1513 = vadd.f32 %v1503, %v1510
        %s1514 = scalar_lea.vmem %s8, 32
        %v1515 = vld [vmem:[%s1514] sm:$0xff]
        %v1516 = vld [vmem:[%s1514 + $0x8] sm:$0xff]
        %1517 = vmatprep.subr.mxu0 0.0
        %1518 = vmatpush1.msra.mxu0 %v1515
        %1519 = vmatprep.subr.mxu0 0.0
        %1520 = vmatpush1.msra.mxu0 %v1516
        %1521 = vmatprep.subr.mxu0 0.0
        %1522 = vmatpush1.msra.mxu0 0.0
        %1523 = vmatprep.subr.mxu0 0.0
        %1524 = vmatpush1.msra.mxu0 0.0
        %1525 = vmatprep.subr.mxu0 0.0
        %1526 = vmatpush1.msra.mxu0 0.0
        %1527 = vmatprep.subr.mxu0 0.0
        %1528 = vmatpush1.msra.mxu0 0.0
        %1529 = vmatprep.subr.mxu0 0.0
        %1530 = vmatpush1.msra.mxu0 0.0
        %1531 = vmatprep.subr.mxu0 0.0
        %1532 = vmatpush1.msra.mxu0 0.0
        %1533 = vmatprep.subr.mxu0 0.0
        %1534 = vmatpush1.msra.mxu0 0.0
        %1535 = vmatprep.subr.mxu0 0.0
        %1536 = vmatpush1.msra.mxu0 0.0
        %1537 = vmatprep.subr.mxu0 0.0
        %1538 = vmatpush1.msra.mxu0 0.0
        %1539 = vmatprep.subr.mxu0 0.0
        %1540 = vmatpush1.msra.mxu0 0.0
        %1541 = vmatprep.subr.mxu0 0.0
        %1542 = vmatpush1.msra.mxu0 0.0
        %1543 = vmatprep.subr.mxu0 0.0
        %1544 = vmatpush1.msra.mxu0 0.0
        %1545 = vmatprep.subr.mxu0 0.0
        %1546 = vmatpush1.msra.mxu0 0.0
        %1547 = vmatprep.subr.mxu0 0.0
        %1548 = vmatpush1.msra.mxu0 0.0
        %1549 = vmatprep.subr.mxu0 0.0
        %1550 = vmatpush1.msra.mxu0 0.0
        %1551 = vmatprep.subr.mxu0 0.0
        %1552 = vmatpush1.msra.mxu0 0.0
        %1553 = vmatprep.subr.mxu0 0.0
        %1554 = vmatpush1.msra.mxu0 0.0
        %1555 = vmatprep.subr.mxu0 0.0
        %1556 = vmatpush1.msra.mxu0 0.0
        %1557 = vmatprep.subr.mxu0 0.0
        %1558 = vmatpush1.msra.mxu0 0.0
        %1559 = vmatprep.subr.mxu0 0.0
        %1560 = vmatpush1.msra.mxu0 0.0
        %1561 = vmatprep.subr.mxu0 0.0
        %1562 = vmatpush1.msra.mxu0 0.0
        %1563 = vmatprep.subr.mxu0 0.0
        %1564 = vmatpush1.msra.mxu0 0.0
        %1565 = vmatprep.subr.mxu0 0.0
        %1566 = vmatpush1.msra.mxu0 0.0
        %1567 = vmatprep.subr.mxu0 0.0
        %1568 = vmatpush1.msra.mxu0 0.0
        %1569 = vmatprep.subr.mxu0 0.0
        %1570 = vmatpush1.msra.mxu0 0.0
        %1571 = vmatprep.subr.mxu0 0.0
        %1572 = vmatpush1.msra.mxu0 0.0
        %1573 = vmatprep.subr.mxu0 0.0
        %1574 = vmatpush1.msra.mxu0 0.0
        %1575 = vmatprep.subr.mxu0 0.0
        %1576 = vmatpush1.msra.mxu0 0.0
        %1577 = vmatprep.subr.mxu0 0.0
        %1578 = vmatpush1.msra.mxu0 0.0
        %1579 = vmatprep.subr.mxu0 0.0
        %1580 = vmatpush1.msra.mxu0 0.0
        %1581 = vmatprep.mubr.f32.mxu0 0.0
        %1582 = vmatmul.mubr.f32.gmra.mrb[0].mxu0 %v1422
        %v1583 = vpop.f32.mrb[0].mxu0
        %v1584 = vadd.f32 0.0, %v1583
        %v1585 = vpop.f32.mrb[0].mxu0
        %1586 = vmatprep.mubr.f32.mxu0 0.0
        %1587 = vmatmul.mubr.f32.gmra.mrb[0].mxu0 %v1425
        %v1588 = vpop.f32.mrb[0].mxu0
        %v1589 = vadd.f32 0.0, %v1588
        %v1590 = vpop.f32.mrb[0].mxu0
        %1591 = vdwg.mxu0
        %v1592 = vadd.f32 %v1276, %v1584
        %v1593 = vadd.f32 %v1277, %v1589
        %s1594 = scalar_lea.vmem %s9, 2
        %v1595 = vld [vmem:[%s1594] sm:$0x1]
        %v1597 = vlaneseq
        %v1598 = vshrl.u32 %v1597, 7
        %v1599 = vsub.s32 0, %v1598
        %v1600 = vrot.slane %v1595, %v1599
        %v1602 = vadd.f32 %v1592, %v1600
        %v1603 = vadd.f32 %v1593, %v1600
        %v1604 = vrot.slane %v1602, 7
        %v1605 = vrot.slane %v1603, 7
        %v1606 = vsel %vm514, %v1604, %v1605
        %v1607 = vsel %vm514, %v1605, %v1604
        %v1608 = vsel %vm510, %v1607, 0.0
        %v1609 = vsel %vm511, %v1606, 0.0
        %1612 = vrot.lane.b32.xlu0 %v1602, 16
        %v1613 = vpop.permute.xlu0 %1612
        %1614 = vrot.lane.b32.xlu0 %v1603, 16
        %v1615 = vpop.permute.xlu0 %1614
        %v1618 = vsel %vm651, %v1608, %v1613
        %v1619 = vsel %vm651, %v1609, %v1615
        %v1620 = vsel %vm527, %v1618, %v646
        %v1621 = vsel %vm527, %v1619, %v648
        %s1622 = scalar_lea.vmem %s4, 120
        %v1623 = vld [vmem:[%s1622] sm:$0xff]
        %v1624 = vld [vmem:[%s1622 + $0x8] sm:$0xff]
        %v1625 = vld [vmem:[%s1622 + $0x10] sm:$0xff]
        %v1626 = vld [vmem:[%s1622 + $0x18] sm:$0xff]
        %v1627 = vld [vmem:[%s1622 + $0x20] sm:$0xff]
        %s1628 = scalar_lea.vmem %s5, 3
        %v1629 = vld [vmem:[%s1628] sm:$0x1]
        %v1631 = vlaneseq
        %v1632 = vshrl.u32 %v1631, 7
        %v1633 = vsub.s32 0, %v1632
        %v1634 = vrot.slane %v1629, %v1633
        %v1637 = vsel %vm668, %v1620, 0
        %v1640 = vsel %vm668, %v1621, 0
        %1642 = vmatprep.subr.mxu0 0.0
        %1643 = vmatpush1.msra.mxu0 %v1623
        %1644 = vmatprep.subr.mxu0 0.0
        %1645 = vmatpush1.msra.mxu0 %v1624
        %1646 = vmatprep.subr.mxu0 0.0
        %1647 = vmatpush1.msra.mxu0 %v1625
        %1648 = vmatprep.subr.mxu0 0.0
        %1649 = vmatpush1.msra.mxu0 %v1626
        %1650 = vmatprep.subr.mxu0 0.0
        %1651 = vmatpush1.msra.mxu0 %v1627
        %1652 = vmatprep.subr.mxu0 0.0
        %1653 = vmatpush1.msra.mxu0 0.0
        %1654 = vmatprep.subr.mxu0 0.0
        %1655 = vmatpush1.msra.mxu0 0.0
        %1656 = vmatprep.subr.mxu0 0.0
        %1657 = vmatpush1.msra.mxu0 0.0
        %1658 = vmatprep.subr.mxu0 0.0
        %1659 = vmatpush1.msra.mxu0 0.0
        %1660 = vmatprep.subr.mxu0 0.0
        %1661 = vmatpush1.msra.mxu0 0.0
        %1662 = vmatprep.subr.mxu0 0.0
        %1663 = vmatpush1.msra.mxu0 0.0
        %1664 = vmatprep.subr.mxu0 0.0
        %1665 = vmatpush1.msra.mxu0 0.0
        %1666 = vmatprep.subr.mxu0 0.0
        %1667 = vmatpush1.msra.mxu0 0.0
        %1668 = vmatprep.subr.mxu0 0.0
        %1669 = vmatpush1.msra.mxu0 0.0
        %1670 = vmatprep.subr.mxu0 0.0
        %1671 = vmatpush1.msra.mxu0 0.0
        %1672 = vmatprep.subr.mxu0 0.0
        %1673 = vmatpush1.msra.mxu0 0.0
        %1674 = vmatprep.subr.mxu0 0.0
        %1675 = vmatpush1.msra.mxu0 0.0
        %1676 = vmatprep.subr.mxu0 0.0
        %1677 = vmatpush1.msra.mxu0 0.0
        %1678 = vmatprep.subr.mxu0 0.0
        %1679 = vmatpush1.msra.mxu0 0.0
        %1680 = vmatprep.subr.mxu0 0.0
        %1681 = vmatpush1.msra.mxu0 0.0
        %1682 = vmatprep.subr.mxu0 0.0
        %1683 = vmatpush1.msra.mxu0 0.0
        %1684 = vmatprep.subr.mxu0 0.0
        %1685 = vmatpush1.msra.mxu0 0.0
        %1686 = vmatprep.subr.mxu0 0.0
        %1687 = vmatpush1.msra.mxu0 0.0
        %1688 = vmatprep.subr.mxu0 0.0
        %1689 = vmatpush1.msra.mxu0 0.0
        %1690 = vmatprep.subr.mxu0 0.0
        %1691 = vmatpush1.msra.mxu0 0.0
        %1692 = vmatprep.subr.mxu0 0.0
        %1693 = vmatpush1.msra.mxu0 0.0
        %1694 = vmatprep.subr.mxu0 0.0
        %1695 = vmatpush1.msra.mxu0 0.0
        %1696 = vmatprep.subr.mxu0 0.0
        %1697 = vmatpush1.msra.mxu0 0.0
        %1698 = vmatprep.subr.mxu0 0.0
        %1699 = vmatpush1.msra.mxu0 0.0
        %1700 = vmatprep.subr.mxu0 0.0
        %1701 = vmatpush1.msra.mxu0 0.0
        %1702 = vmatprep.subr.mxu0 0.0
        %1703 = vmatpush1.msra.mxu0 0.0
        %1704 = vmatprep.subr.mxu0 0.0
        %1705 = vmatpush1.msra.mxu0 0.0
        %1706 = vmatprep.mubr.f32.mxu0 0.0
        %1707 = vmatmul.mubr.f32.gmra.mrb[0].mxu0 %v1637
        %v1708 = vpop.f32.mrb[0].mxu0
        %v1709 = vadd.f32 %v1634, %v1708
        %v1710 = vpop.f32.mrb[0].mxu0
        %1711 = vmatprep.mubr.f32.mxu0 0.0
        %1712 = vmatmul.mubr.f32.gmra.mrb[0].mxu0 %v1640
        %v1713 = vpop.f32.mrb[0].mxu0
        %v1714 = vadd.f32 %v1634, %v1713
        %v1715 = vpop.f32.mrb[0].mxu0
        %1716 = vdwg.mxu0
        %v1717 = vxor.u32 %v1709, 2147483648
        %v1718 = vxor.u32 %v1714, 2147483648
        %v1719 = vmul.f32 %v1717, 1.442695
        %v1720 = vpow.pop %v1719
        %v1721 = vmul.f32 %v1718, 1.442695
        %v1722 = vpow.pop %v1721
        %v1723 = vadd.f32 %v1720, 1.0
        %v1724 = vadd.f32 %v1722, 1.0
        %v1725 = vrcp.pop %v1723
        %v1726 = vmul.f32 1.0, %v1725
        %v1727 = vrcp.pop %v1724
        %v1728 = vmul.f32 1.0, %v1727
        %v1729 = vtanh.pop %v1709
        %v1730 = vtanh.pop %v1714
        %1733 = vrot.lane.b32.xlu0 %v1729, 112
        %v1734 = vpop.permute.xlu0 %1733
        %1735 = vrot.lane.b32.xlu0 %v1730, 112
        %v1736 = vpop.permute.xlu0 %1735
        %v1739 = vmul.f32 %v1726, %v1734
        %v1740 = vmul.f32 %v1728, %v1736
        %s1741 = scalar_lea.vmem %s6, 48
        %v1742 = vld [vmem:[%s1741] sm:$0xff]
        %v1743 = vld [vmem:[%s1741 + $0x8] sm:$0xff]
        %v1745 = vsel %vm651, %v1739, 0
        %v1748 = vsel %vm651, %v1740, 0
        %1750 = vmatprep.subr.mxu0 0.0
        %1751 = vmatpush1.msra.mxu0 %v1742
        %1752 = vmatprep.subr.mxu0 0.0
        %1753 = vmatpush1.msra.mxu0 %v1743
        %1754 = vmatprep.subr.mxu0 0.0
        %1755 = vmatpush1.msra.mxu0 0.0
        %1756 = vmatprep.subr.mxu0 0.0
        %1757 = vmatpush1.msra.mxu0 0.0
        %1758 = vmatprep.subr.mxu0 0.0
        %1759 = vmatpush1.msra.mxu0 0.0
        %1760 = vmatprep.subr.mxu0 0.0
        %1761 = vmatpush1.msra.mxu0 0.0
        %1762 = vmatprep.subr.mxu0 0.0
        %1763 = vmatpush1.msra.mxu0 0.0
        %1764 = vmatprep.subr.mxu0 0.0
        %1765 = vmatpush1.msra.mxu0 0.0
        %1766 = vmatprep.subr.mxu0 0.0
        %1767 = vmatpush1.msra.mxu0 0.0
        %1768 = vmatprep.subr.mxu0 0.0
        %1769 = vmatpush1.msra.mxu0 0.0
        %1770 = vmatprep.subr.mxu0 0.0
        %1771 = vmatpush1.msra.mxu0 0.0
        %1772 = vmatprep.subr.mxu0 0.0
        %1773 = vmatpush1.msra.mxu0 0.0
        %1774 = vmatprep.subr.mxu0 0.0
        %1775 = vmatpush1.msra.mxu0 0.0
        %1776 = vmatprep.subr.mxu0 0.0
        %1777 = vmatpush1.msra.mxu0 0.0
        %1778 = vmatprep.subr.mxu0 0.0
        %1779 = vmatpush1.msra.mxu0 0.0
        %1780 = vmatprep.subr.mxu0 0.0
        %1781 = vmatpush1.msra.mxu0 0.0
        %1782 = vmatprep.subr.mxu0 0.0
        %1783 = vmatpush1.msra.mxu0 0.0
        %1784 = vmatprep.subr.mxu0 0.0
        %1785 = vmatpush1.msra.mxu0 0.0
        %1786 = vmatprep.subr.mxu0 0.0
        %1787 = vmatpush1.msra.mxu0 0.0
        %1788 = vmatprep.subr.mxu0 0.0
        %1789 = vmatpush1.msra.mxu0 0.0
        %1790 = vmatprep.subr.mxu0 0.0
        %1791 = vmatpush1.msra.mxu0 0.0
        %1792 = vmatprep.subr.mxu0 0.0
        %1793 = vmatpush1.msra.mxu0 0.0
        %1794 = vmatprep.subr.mxu0 0.0
        %1795 = vmatpush1.msra.mxu0 0.0
        %1796 = vmatprep.subr.mxu0 0.0
        %1797 = vmatpush1.msra.mxu0 0.0
        %1798 = vmatprep.subr.mxu0 0.0
        %1799 = vmatpush1.msra.mxu0 0.0
        %1800 = vmatprep.subr.mxu0 0.0
        %1801 = vmatpush1.msra.mxu0 0.0
        %1802 = vmatprep.subr.mxu0 0.0
        %1803 = vmatpush1.msra.mxu0 0.0
        %1804 = vmatprep.subr.mxu0 0.0
        %1805 = vmatpush1.msra.mxu0 0.0
        %1806 = vmatprep.subr.mxu0 0.0
        %1807 = vmatpush1.msra.mxu0 0.0
        %1808 = vmatprep.subr.mxu0 0.0
        %1809 = vmatpush1.msra.mxu0 0.0
        %1810 = vmatprep.subr.mxu0 0.0
        %1811 = vmatpush1.msra.mxu0 0.0
        %1812 = vmatprep.subr.mxu0 0.0
        %1813 = vmatpush1.msra.mxu0 0.0
        %1814 = vmatprep.mubr.f32.mxu0 0.0
        %1815 = vmatmul.mubr.f32.gmra.mrb[0].mxu0 %v1745
        %v1816 = vpop.f32.mrb[0].mxu0
        %v1817 = vadd.f32 0.0, %v1816
        %v1818 = vpop.f32.mrb[0].mxu0
        %1819 = vmatprep.mubr.f32.mxu0 0.0
        %1820 = vmatmul.mubr.f32.gmra.mrb[0].mxu0 %v1748
        %v1821 = vpop.f32.mrb[0].mxu0
        %v1822 = vadd.f32 0.0, %v1821
        %v1823 = vpop.f32.mrb[0].mxu0
        %1824 = vdwg.mxu0
        %v1825 = vadd.f32 %v1512, %v1817
        %v1826 = vadd.f32 %v1513, %v1822
        %s1827 = scalar_lea.vmem %s7, 3
        %v1828 = vld [vmem:[%s1827] sm:$0x1]
        %v1830 = vlaneseq
        %v1831 = vshrl.u32 %v1830, 7
        %v1832 = vsub.s32 0, %v1831
        %v1833 = vrot.slane %v1828, %v1832
        %v1835 = vadd.f32 %v1825, %v1833
        %v1836 = vadd.f32 %v1826, %v1833
        %s1837 = scalar_lea.vmem %s8, 48
        %v1838 = vld [vmem:[%s1837] sm:$0xff]
        %v1839 = vld [vmem:[%s1837 + $0x8] sm:$0xff]
        %1840 = vmatprep.subr.mxu0 0.0
        %1841 = vmatpush1.msra.mxu0 %v1838
        %1842 = vmatprep.subr.mxu0 0.0
        %1843 = vmatpush1.msra.mxu0 %v1839
        %1844 = vmatprep.subr.mxu0 0.0
        %1845 = vmatpush1.msra.mxu0 0.0
        %1846 = vmatprep.subr.mxu0 0.0
        %1847 = vmatpush1.msra.mxu0 0.0
        %1848 = vmatprep.subr.mxu0 0.0
        %1849 = vmatpush1.msra.mxu0 0.0
        %1850 = vmatprep.subr.mxu0 0.0
        %1851 = vmatpush1.msra.mxu0 0.0
        %1852 = vmatprep.subr.mxu0 0.0
        %1853 = vmatpush1.msra.mxu0 0.0
        %1854 = vmatprep.subr.mxu0 0.0
        %1855 = vmatpush1.msra.mxu0 0.0
        %1856 = vmatprep.subr.mxu0 0.0
        %1857 = vmatpush1.msra.mxu0 0.0
        %1858 = vmatprep.subr.mxu0 0.0
        %1859 = vmatpush1.msra.mxu0 0.0
        %1860 = vmatprep.subr.mxu0 0.0
        %1861 = vmatpush1.msra.mxu0 0.0
        %1862 = vmatprep.subr.mxu0 0.0
        %1863 = vmatpush1.msra.mxu0 0.0
        %1864 = vmatprep.subr.mxu0 0.0
        %1865 = vmatpush1.msra.mxu0 0.0
        %1866 = vmatprep.subr.mxu0 0.0
        %1867 = vmatpush1.msra.mxu0 0.0
        %1868 = vmatprep.subr.mxu0 0.0
        %1869 = vmatpush1.msra.mxu0 0.0
        %1870 = vmatprep.subr.mxu0 0.0
        %1871 = vmatpush1.msra.mxu0 0.0
        %1872 = vmatprep.subr.mxu0 0.0
        %1873 = vmatpush1.msra.mxu0 0.0
        %1874 = vmatprep.subr.mxu0 0.0
        %1875 = vmatpush1.msra.mxu0 0.0
        %1876 = vmatprep.subr.mxu0 0.0
        %1877 = vmatpush1.msra.mxu0 0.0
        %1878 = vmatprep.subr.mxu0 0.0
        %1879 = vmatpush1.msra.mxu0 0.0
        %1880 = vmatprep.subr.mxu0 0.0
        %1881 = vmatpush1.msra.mxu0 0.0
        %1882 = vmatprep.subr.mxu0 0.0
        %1883 = vmatpush1.msra.mxu0 0.0
        %1884 = vmatprep.subr.mxu0 0.0
        %1885 = vmatpush1.msra.mxu0 0.0
        %1886 = vmatprep.subr.mxu0 0.0
        %1887 = vmatpush1.msra.mxu0 0.0
        %1888 = vmatprep.subr.mxu0 0.0
        %1889 = vmatpush1.msra.mxu0 0.0
        %1890 = vmatprep.subr.mxu0 0.0
        %1891 = vmatpush1.msra.mxu0 0.0
        %1892 = vmatprep.subr.mxu0 0.0
        %1893 = vmatpush1.msra.mxu0 0.0
        %1894 = vmatprep.subr.mxu0 0.0
        %1895 = vmatpush1.msra.mxu0 0.0
        %1896 = vmatprep.subr.mxu0 0.0
        %1897 = vmatpush1.msra.mxu0 0.0
        %1898 = vmatprep.subr.mxu0 0.0
        %1899 = vmatpush1.msra.mxu0 0.0
        %1900 = vmatprep.subr.mxu0 0.0
        %1901 = vmatpush1.msra.mxu0 0.0
        %1902 = vmatprep.subr.mxu0 0.0
        %1903 = vmatpush1.msra.mxu0 0.0
        %1904 = vmatprep.mubr.f32.mxu0 0.0
        %1905 = vmatmul.mubr.f32.gmra.mrb[0].mxu0 %v1745
        %v1906 = vpop.f32.mrb[0].mxu0
        %v1907 = vadd.f32 0.0, %v1906
        %v1908 = vpop.f32.mrb[0].mxu0
        %1909 = vmatprep.mubr.f32.mxu0 0.0
        %1910 = vmatmul.mubr.f32.gmra.mrb[0].mxu0 %v1748
        %v1911 = vpop.f32.mrb[0].mxu0
        %v1912 = vadd.f32 0.0, %v1911
        %v1913 = vpop.f32.mrb[0].mxu0
        %1914 = vdwg.mxu0
        %v1915 = vadd.f32 %v1602, %v1907
        %v1916 = vadd.f32 %v1603, %v1912
        %s1917 = scalar_lea.vmem %s9, 3
        %v1918 = vld [vmem:[%s1917] sm:$0x1]
        %v1920 = vlaneseq
        %v1921 = vshrl.u32 %v1920, 7
        %v1922 = vsub.s32 0, %v1921
        %v1923 = vrot.slane %v1918, %v1922
        %v1925 = vadd.f32 %v1915, %v1923
        %v1926 = vadd.f32 %v1916, %v1923
        %v1927 = vrot.slane %v1925, 6
        %v1928 = vrot.slane %v1926, 6
        %v1929 = vsel %vm956, %v1927, %v1928
        %v1930 = vsel %vm956, %v1928, %v1927
        %v1931 = vsel %vm952, %v1930, 0.0
        %v1932 = vsel %vm953, %v1929, 0.0
        %1935 = vrot.lane.b32.xlu0 %v1925, 16
        %v1936 = vpop.permute.xlu0 %1935
        %1937 = vrot.lane.b32.xlu0 %v1926, 16
        %v1938 = vpop.permute.xlu0 %1937
        %v1941 = vsel %vm651, %v1931, %v1936
        %v1942 = vsel %vm651, %v1932, %v1938
        %v1943 = vsel %vm527, %v1941, %v646
        %v1944 = vsel %vm527, %v1942, %v648
        %s1945 = scalar_lea.vmem %s4, 160
        %v1946 = vld [vmem:[%s1945] sm:$0xff]
        %v1947 = vld [vmem:[%s1945 + $0x8] sm:$0xff]
        %v1948 = vld [vmem:[%s1945 + $0x10] sm:$0xff]
        %v1949 = vld [vmem:[%s1945 + $0x18] sm:$0xff]
        %v1950 = vld [vmem:[%s1945 + $0x20] sm:$0xff]
        %s1951 = scalar_lea.vmem %s5, 4
        %v1952 = vld [vmem:[%s1951] sm:$0x1]
        %v1954 = vlaneseq
        %v1955 = vshrl.u32 %v1954, 7
        %v1956 = vsub.s32 0, %v1955
        %v1957 = vrot.slane %v1952, %v1956
        %v1960 = vsel %vm668, %v1943, 0
        %v1963 = vsel %vm668, %v1944, 0
        %1965 = vmatprep.subr.mxu0 0.0
        %1966 = vmatpush1.msra.mxu0 %v1946
        %1967 = vmatprep.subr.mxu0 0.0
        %1968 = vmatpush1.msra.mxu0 %v1947
        %1969 = vmatprep.subr.mxu0 0.0
        %1970 = vmatpush1.msra.mxu0 %v1948
        %1971 = vmatprep.subr.mxu0 0.0
        %1972 = vmatpush1.msra.mxu0 %v1949
        %1973 = vmatprep.subr.mxu0 0.0
        %1974 = vmatpush1.msra.mxu0 %v1950
        %1975 = vmatprep.subr.mxu0 0.0
        %1976 = vmatpush1.msra.mxu0 0.0
        %1977 = vmatprep.subr.mxu0 0.0
        %1978 = vmatpush1.msra.mxu0 0.0
        %1979 = vmatprep.subr.mxu0 0.0
        %1980 = vmatpush1.msra.mxu0 0.0
        %1981 = vmatprep.subr.mxu0 0.0
        %1982 = vmatpush1.msra.mxu0 0.0
        %1983 = vmatprep.subr.mxu0 0.0
        %1984 = vmatpush1.msra.mxu0 0.0
        %1985 = vmatprep.subr.mxu0 0.0
        %1986 = vmatpush1.msra.mxu0 0.0
        %1987 = vmatprep.subr.mxu0 0.0
        %1988 = vmatpush1.msra.mxu0 0.0
        %1989 = vmatprep.subr.mxu0 0.0
        %1990 = vmatpush1.msra.mxu0 0.0
        %1991 = vmatprep.subr.mxu0 0.0
        %1992 = vmatpush1.msra.mxu0 0.0
        %1993 = vmatprep.subr.mxu0 0.0
        %1994 = vmatpush1.msra.mxu0 0.0
        %1995 = vmatprep.subr.mxu0 0.0
        %1996 = vmatpush1.msra.mxu0 0.0
        %1997 = vmatprep.subr.mxu0 0.0
        %1998 = vmatpush1.msra.mxu0 0.0
        %1999 = vmatprep.subr.mxu0 0.0
        %2000 = vmatpush1.msra.mxu0 0.0
        %2001 = vmatprep.subr.mxu0 0.0
        %2002 = vmatpush1.msra.mxu0 0.0
        %2003 = vmatprep.subr.mxu0 0.0
        %2004 = vmatpush1.msra.mxu0 0.0
        %2005 = vmatprep.subr.mxu0 0.0
        %2006 = vmatpush1.msra.mxu0 0.0
        %2007 = vmatprep.subr.mxu0 0.0
        %2008 = vmatpush1.msra.mxu0 0.0
        %2009 = vmatprep.subr.mxu0 0.0
        %2010 = vmatpush1.msra.mxu0 0.0
        %2011 = vmatprep.subr.mxu0 0.0
        %2012 = vmatpush1.msra.mxu0 0.0
        %2013 = vmatprep.subr.mxu0 0.0
        %2014 = vmatpush1.msra.mxu0 0.0
        %2015 = vmatprep.subr.mxu0 0.0
        %2016 = vmatpush1.msra.mxu0 0.0
        %2017 = vmatprep.subr.mxu0 0.0
        %2018 = vmatpush1.msra.mxu0 0.0
        %2019 = vmatprep.subr.mxu0 0.0
        %2020 = vmatpush1.msra.mxu0 0.0
        %2021 = vmatprep.subr.mxu0 0.0
        %2022 = vmatpush1.msra.mxu0 0.0
        %2023 = vmatprep.subr.mxu0 0.0
        %2024 = vmatpush1.msra.mxu0 0.0
        %2025 = vmatprep.subr.mxu0 0.0
        %2026 = vmatpush1.msra.mxu0 0.0
        %2027 = vmatprep.subr.mxu0 0.0
        %2028 = vmatpush1.msra.mxu0 0.0
        %2029 = vmatprep.mubr.f32.mxu0 0.0
        %2030 = vmatmul.mubr.f32.gmra.mrb[0].mxu0 %v1960
        %v2031 = vpop.f32.mrb[0].mxu0
        %v2032 = vadd.f32 %v1957, %v2031
        %v2033 = vpop.f32.mrb[0].mxu0
        %2034 = vmatprep.mubr.f32.mxu0 0.0
        %2035 = vmatmul.mubr.f32.gmra.mrb[0].mxu0 %v1963
        %v2036 = vpop.f32.mrb[0].mxu0
        %v2037 = vadd.f32 %v1957, %v2036
        %v2038 = vpop.f32.mrb[0].mxu0
        %2039 = vdwg.mxu0
        %v2040 = vxor.u32 %v2032, 2147483648
        %v2041 = vxor.u32 %v2037, 2147483648
        %v2042 = vmul.f32 %v2040, 1.442695
        %v2043 = vpow.pop %v2042
        %v2044 = vmul.f32 %v2041, 1.442695
        %v2045 = vpow.pop %v2044
        %v2046 = vadd.f32 %v2043, 1.0
        %v2047 = vadd.f32 %v2045, 1.0
        %v2048 = vrcp.pop %v2046
        %v2049 = vmul.f32 1.0, %v2048
        %v2050 = vrcp.pop %v2047
        %v2051 = vmul.f32 1.0, %v2050
        %v2052 = vtanh.pop %v2032
        %v2053 = vtanh.pop %v2037
        %2056 = vrot.lane.b32.xlu0 %v2052, 112
        %v2057 = vpop.permute.xlu0 %2056
        %2058 = vrot.lane.b32.xlu0 %v2053, 112
        %v2059 = vpop.permute.xlu0 %2058
        %v2062 = vmul.f32 %v2049, %v2057
        %v2063 = vmul.f32 %v2051, %v2059
        %s2064 = scalar_lea.vmem %s6, 64
        %v2065 = vld [vmem:[%s2064] sm:$0xff]
        %v2066 = vld [vmem:[%s2064 + $0x8] sm:$0xff]
        %v2068 = vsel %vm651, %v2062, 0
        %v2071 = vsel %vm651, %v2063, 0
        %2073 = vmatprep.subr.mxu0 0.0
        %2074 = vmatpush1.msra.mxu0 %v2065
        %2075 = vmatprep.subr.mxu0 0.0
        %2076 = vmatpush1.msra.mxu0 %v2066
        %2077 = vmatprep.subr.mxu0 0.0
        %2078 = vmatpush1.msra.mxu0 0.0
        %2079 = vmatprep.subr.mxu0 0.0
        %2080 = vmatpush1.msra.mxu0 0.0
        %2081 = vmatprep.subr.mxu0 0.0
        %2082 = vmatpush1.msra.mxu0 0.0
        %2083 = vmatprep.subr.mxu0 0.0
        %2084 = vmatpush1.msra.mxu0 0.0
        %2085 = vmatprep.subr.mxu0 0.0
        %2086 = vmatpush1.msra.mxu0 0.0
        %2087 = vmatprep.subr.mxu0 0.0
        %2088 = vmatpush1.msra.mxu0 0.0
        %2089 = vmatprep.subr.mxu0 0.0
        %2090 = vmatpush1.msra.mxu0 0.0
        %2091 = vmatprep.subr.mxu0 0.0
        %2092 = vmatpush1.msra.mxu0 0.0
        %2093 = vmatprep.subr.mxu0 0.0
        %2094 = vmatpush1.msra.mxu0 0.0
        %2095 = vmatprep.subr.mxu0 0.0
        %2096 = vmatpush1.msra.mxu0 0.0
        %2097 = vmatprep.subr.mxu0 0.0
        %2098 = vmatpush1.msra.mxu0 0.0
        %2099 = vmatprep.subr.mxu0 0.0
        %2100 = vmatpush1.msra.mxu0 0.0
        %2101 = vmatprep.subr.mxu0 0.0
        %2102 = vmatpush1.msra.mxu0 0.0
        %2103 = vmatprep.subr.mxu0 0.0
        %2104 = vmatpush1.msra.mxu0 0.0
        %2105 = vmatprep.subr.mxu0 0.0
        %2106 = vmatpush1.msra.mxu0 0.0
        %2107 = vmatprep.subr.mxu0 0.0
        %2108 = vmatpush1.msra.mxu0 0.0
        %2109 = vmatprep.subr.mxu0 0.0
        %2110 = vmatpush1.msra.mxu0 0.0
        %2111 = vmatprep.subr.mxu0 0.0
        %2112 = vmatpush1.msra.mxu0 0.0
        %2113 = vmatprep.subr.mxu0 0.0
        %2114 = vmatpush1.msra.mxu0 0.0
        %2115 = vmatprep.subr.mxu0 0.0
        %2116 = vmatpush1.msra.mxu0 0.0
        %2117 = vmatprep.subr.mxu0 0.0
        %2118 = vmatpush1.msra.mxu0 0.0
        %2119 = vmatprep.subr.mxu0 0.0
        %2120 = vmatpush1.msra.mxu0 0.0
        %2121 = vmatprep.subr.mxu0 0.0
        %2122 = vmatpush1.msra.mxu0 0.0
        %2123 = vmatprep.subr.mxu0 0.0
        %2124 = vmatpush1.msra.mxu0 0.0
        %2125 = vmatprep.subr.mxu0 0.0
        %2126 = vmatpush1.msra.mxu0 0.0
        %2127 = vmatprep.subr.mxu0 0.0
        %2128 = vmatpush1.msra.mxu0 0.0
        %2129 = vmatprep.subr.mxu0 0.0
        %2130 = vmatpush1.msra.mxu0 0.0
        %2131 = vmatprep.subr.mxu0 0.0
        %2132 = vmatpush1.msra.mxu0 0.0
        %2133 = vmatprep.subr.mxu0 0.0
        %2134 = vmatpush1.msra.mxu0 0.0
        %2135 = vmatprep.subr.mxu0 0.0
        %2136 = vmatpush1.msra.mxu0 0.0
        %2137 = vmatprep.mubr.f32.mxu0 0.0
        %2138 = vmatmul.mubr.f32.gmra.mrb[0].mxu0 %v2068
        %v2139 = vpop.f32.mrb[0].mxu0
        %v2140 = vadd.f32 0.0, %v2139
        %v2141 = vpop.f32.mrb[0].mxu0
        %2142 = vmatprep.mubr.f32.mxu0 0.0
        %2143 = vmatmul.mubr.f32.gmra.mrb[0].mxu0 %v2071
        %v2144 = vpop.f32.mrb[0].mxu0
        %v2145 = vadd.f32 0.0, %v2144
        %v2146 = vpop.f32.mrb[0].mxu0
        %2147 = vdwg.mxu0
        %v2148 = vadd.f32 %v1835, %v2140
        %v2149 = vadd.f32 %v1836, %v2145
        %s2150 = scalar_lea.vmem %s7, 4
        %v2151 = vld [vmem:[%s2150] sm:$0x1]
        %v2153 = vlaneseq
        %v2154 = vshrl.u32 %v2153, 7
        %v2155 = vsub.s32 0, %v2154
        %v2156 = vrot.slane %v2151, %v2155
        %v2158 = vadd.f32 %v2148, %v2156
        %v2159 = vadd.f32 %v2149, %v2156
        %s2160 = scalar_lea.vmem %s8, 64
        %v2161 = vld [vmem:[%s2160] sm:$0xff]
        %v2162 = vld [vmem:[%s2160 + $0x8] sm:$0xff]
        %2163 = vmatprep.subr.mxu0 0.0
        %2164 = vmatpush1.msra.mxu0 %v2161
        %2165 = vmatprep.subr.mxu0 0.0
        %2166 = vmatpush1.msra.mxu0 %v2162
        %2167 = vmatprep.subr.mxu0 0.0
        %2168 = vmatpush1.msra.mxu0 0.0
        %2169 = vmatprep.subr.mxu0 0.0
        %2170 = vmatpush1.msra.mxu0 0.0
        %2171 = vmatprep.subr.mxu0 0.0
        %2172 = vmatpush1.msra.mxu0 0.0
        %2173 = vmatprep.subr.mxu0 0.0
        %2174 = vmatpush1.msra.mxu0 0.0
        %2175 = vmatprep.subr.mxu0 0.0
        %2176 = vmatpush1.msra.mxu0 0.0
        %2177 = vmatprep.subr.mxu0 0.0
        %2178 = vmatpush1.msra.mxu0 0.0
        %2179 = vmatprep.subr.mxu0 0.0
        %2180 = vmatpush1.msra.mxu0 0.0
        %2181 = vmatprep.subr.mxu0 0.0
        %2182 = vmatpush1.msra.mxu0 0.0
        %2183 = vmatprep.subr.mxu0 0.0
        %2184 = vmatpush1.msra.mxu0 0.0
        %2185 = vmatprep.subr.mxu0 0.0
        %2186 = vmatpush1.msra.mxu0 0.0
        %2187 = vmatprep.subr.mxu0 0.0
        %2188 = vmatpush1.msra.mxu0 0.0
        %2189 = vmatprep.subr.mxu0 0.0
        %2190 = vmatpush1.msra.mxu0 0.0
        %2191 = vmatprep.subr.mxu0 0.0
        %2192 = vmatpush1.msra.mxu0 0.0
        %2193 = vmatprep.subr.mxu0 0.0
        %2194 = vmatpush1.msra.mxu0 0.0
        %2195 = vmatprep.subr.mxu0 0.0
        %2196 = vmatpush1.msra.mxu0 0.0
        %2197 = vmatprep.subr.mxu0 0.0
        %2198 = vmatpush1.msra.mxu0 0.0
        %2199 = vmatprep.subr.mxu0 0.0
        %2200 = vmatpush1.msra.mxu0 0.0
        %2201 = vmatprep.subr.mxu0 0.0
        %2202 = vmatpush1.msra.mxu0 0.0
        %2203 = vmatprep.subr.mxu0 0.0
        %2204 = vmatpush1.msra.mxu0 0.0
        %2205 = vmatprep.subr.mxu0 0.0
        %2206 = vmatpush1.msra.mxu0 0.0
        %2207 = vmatprep.subr.mxu0 0.0
        %2208 = vmatpush1.msra.mxu0 0.0
        %2209 = vmatprep.subr.mxu0 0.0
        %2210 = vmatpush1.msra.mxu0 0.0
        %2211 = vmatprep.subr.mxu0 0.0
        %2212 = vmatpush1.msra.mxu0 0.0
        %2213 = vmatprep.subr.mxu0 0.0
        %2214 = vmatpush1.msra.mxu0 0.0
        %2215 = vmatprep.subr.mxu0 0.0
        %2216 = vmatpush1.msra.mxu0 0.0
        %2217 = vmatprep.subr.mxu0 0.0
        %2218 = vmatpush1.msra.mxu0 0.0
        %2219 = vmatprep.subr.mxu0 0.0
        %2220 = vmatpush1.msra.mxu0 0.0
        %2221 = vmatprep.subr.mxu0 0.0
        %2222 = vmatpush1.msra.mxu0 0.0
        %2223 = vmatprep.subr.mxu0 0.0
        %2224 = vmatpush1.msra.mxu0 0.0
        %2225 = vmatprep.subr.mxu0 0.0
        %2226 = vmatpush1.msra.mxu0 0.0
        %2227 = vmatprep.mubr.f32.mxu0 0.0
        %2228 = vmatmul.mubr.f32.gmra.mrb[0].mxu0 %v2068
        %v2229 = vpop.f32.mrb[0].mxu0
        %v2230 = vadd.f32 0.0, %v2229
        %v2231 = vpop.f32.mrb[0].mxu0
        %2232 = vmatprep.mubr.f32.mxu0 0.0
        %2233 = vmatmul.mubr.f32.gmra.mrb[0].mxu0 %v2071
        %v2234 = vpop.f32.mrb[0].mxu0
        %v2235 = vadd.f32 0.0, %v2234
        %v2236 = vpop.f32.mrb[0].mxu0
        %2237 = vdwg.mxu0
        %v2238 = vadd.f32 %v1925, %v2230
        %v2239 = vadd.f32 %v1926, %v2235
        %s2240 = scalar_lea.vmem %s9, 4
        %v2241 = vld [vmem:[%s2240] sm:$0x1]
        %v2243 = vlaneseq
        %v2244 = vshrl.u32 %v2243, 7
        %v2245 = vsub.s32 0, %v2244
        %v2246 = vrot.slane %v2241, %v2245
        %v2248 = vadd.f32 %v2238, %v2246
        %v2249 = vadd.f32 %v2239, %v2246
        %v2250 = vrot.slane %v2248, 4
        %v2251 = vrot.slane %v2249, 4
        %v2252 = vsel %vm1282, %v2250, %v2251
        %v2253 = vsel %vm1282, %v2251, %v2250
        %v2254 = vsel %vm1278, %v2253, 0.0
        %v2255 = vsel %vm1279, %v2252, 0.0
        %2258 = vrot.lane.b32.xlu0 %v2248, 16
        %v2259 = vpop.permute.xlu0 %2258
        %2260 = vrot.lane.b32.xlu0 %v2249, 16
        %v2261 = vpop.permute.xlu0 %2260
        %v2264 = vsel %vm651, %v2254, %v2259
        %v2265 = vsel %vm651, %v2255, %v2261
        %v2266 = vsel %vm527, %v2264, %v646
        %v2267 = vsel %vm527, %v2265, %v648
        %s2268 = scalar_lea.vmem %s4, 200
        %v2269 = vld [vmem:[%s2268] sm:$0xff]
        %v2270 = vld [vmem:[%s2268 + $0x8] sm:$0xff]
        %v2271 = vld [vmem:[%s2268 + $0x10] sm:$0xff]
        %v2272 = vld [vmem:[%s2268 + $0x18] sm:$0xff]
        %v2273 = vld [vmem:[%s2268 + $0x20] sm:$0xff]
        %s2274 = scalar_lea.vmem %s5, 5
        %v2275 = vld [vmem:[%s2274] sm:$0x1]
        %v2277 = vlaneseq
        %v2278 = vshrl.u32 %v2277, 7
        %v2279 = vsub.s32 0, %v2278
        %v2280 = vrot.slane %v2275, %v2279
        %v2283 = vsel %vm668, %v2266, 0
        %v2286 = vsel %vm668, %v2267, 0
        %2288 = vmatprep.subr.mxu0 0.0
        %2289 = vmatpush1.msra.mxu0 %v2269
        %2290 = vmatprep.subr.mxu0 0.0
        %2291 = vmatpush1.msra.mxu0 %v2270
        %2292 = vmatprep.subr.mxu0 0.0
        %2293 = vmatpush1.msra.mxu0 %v2271
        %2294 = vmatprep.subr.mxu0 0.0
        %2295 = vmatpush1.msra.mxu0 %v2272
        %2296 = vmatprep.subr.mxu0 0.0
        %2297 = vmatpush1.msra.mxu0 %v2273
        %2298 = vmatprep.subr.mxu0 0.0
        %2299 = vmatpush1.msra.mxu0 0.0
        %2300 = vmatprep.subr.mxu0 0.0
        %2301 = vmatpush1.msra.mxu0 0.0
        %2302 = vmatprep.subr.mxu0 0.0
        %2303 = vmatpush1.msra.mxu0 0.0
        %2304 = vmatprep.subr.mxu0 0.0
        %2305 = vmatpush1.msra.mxu0 0.0
        %2306 = vmatprep.subr.mxu0 0.0
        %2307 = vmatpush1.msra.mxu0 0.0
        %2308 = vmatprep.subr.mxu0 0.0
        %2309 = vmatpush1.msra.mxu0 0.0
        %2310 = vmatprep.subr.mxu0 0.0
        %2311 = vmatpush1.msra.mxu0 0.0
        %2312 = vmatprep.subr.mxu0 0.0
        %2313 = vmatpush1.msra.mxu0 0.0
        %2314 = vmatprep.subr.mxu0 0.0
        %2315 = vmatpush1.msra.mxu0 0.0
        %2316 = vmatprep.subr.mxu0 0.0
        %2317 = vmatpush1.msra.mxu0 0.0
        %2318 = vmatprep.subr.mxu0 0.0
        %2319 = vmatpush1.msra.mxu0 0.0
        %2320 = vmatprep.subr.mxu0 0.0
        %2321 = vmatpush1.msra.mxu0 0.0
        %2322 = vmatprep.subr.mxu0 0.0
        %2323 = vmatpush1.msra.mxu0 0.0
        %2324 = vmatprep.subr.mxu0 0.0
        %2325 = vmatpush1.msra.mxu0 0.0
        %2326 = vmatprep.subr.mxu0 0.0
        %2327 = vmatpush1.msra.mxu0 0.0
        %2328 = vmatprep.subr.mxu0 0.0
        %2329 = vmatpush1.msra.mxu0 0.0
        %2330 = vmatprep.subr.mxu0 0.0
        %2331 = vmatpush1.msra.mxu0 0.0
        %2332 = vmatprep.subr.mxu0 0.0
        %2333 = vmatpush1.msra.mxu0 0.0
        %2334 = vmatprep.subr.mxu0 0.0
        %2335 = vmatpush1.msra.mxu0 0.0
        %2336 = vmatprep.subr.mxu0 0.0
        %2337 = vmatpush1.msra.mxu0 0.0
        %2338 = vmatprep.subr.mxu0 0.0
        %2339 = vmatpush1.msra.mxu0 0.0
        %2340 = vmatprep.subr.mxu0 0.0
        %2341 = vmatpush1.msra.mxu0 0.0
        %2342 = vmatprep.subr.mxu0 0.0
        %2343 = vmatpush1.msra.mxu0 0.0
        %2344 = vmatprep.subr.mxu0 0.0
        %2345 = vmatpush1.msra.mxu0 0.0
        %2346 = vmatprep.subr.mxu0 0.0
        %2347 = vmatpush1.msra.mxu0 0.0
        %2348 = vmatprep.subr.mxu0 0.0
        %2349 = vmatpush1.msra.mxu0 0.0
        %2350 = vmatprep.subr.mxu0 0.0
        %2351 = vmatpush1.msra.mxu0 0.0
        %2352 = vmatprep.mubr.f32.mxu0 0.0
        %2353 = vmatmul.mubr.f32.gmra.mrb[0].mxu0 %v2283
        %v2354 = vpop.f32.mrb[0].mxu0
        %v2355 = vadd.f32 %v2280, %v2354
        %v2356 = vpop.f32.mrb[0].mxu0
        %2357 = vmatprep.mubr.f32.mxu0 0.0
        %2358 = vmatmul.mubr.f32.gmra.mrb[0].mxu0 %v2286
        %v2359 = vpop.f32.mrb[0].mxu0
        %v2360 = vadd.f32 %v2280, %v2359
        %v2361 = vpop.f32.mrb[0].mxu0
        %2362 = vdwg.mxu0
        %v2363 = vxor.u32 %v2355, 2147483648
        %v2364 = vxor.u32 %v2360, 2147483648
        %v2365 = vmul.f32 %v2363, 1.442695
        %v2366 = vpow.pop %v2365
        %v2367 = vmul.f32 %v2364, 1.442695
        %v2368 = vpow.pop %v2367
        %v2369 = vadd.f32 %v2366, 1.0
        %v2370 = vadd.f32 %v2368, 1.0
        %v2371 = vrcp.pop %v2369
        %v2372 = vmul.f32 1.0, %v2371
        %v2373 = vrcp.pop %v2370
        %v2374 = vmul.f32 1.0, %v2373
        %v2375 = vtanh.pop %v2355
        %v2376 = vtanh.pop %v2360
        %2379 = vrot.lane.b32.xlu0 %v2375, 112
        %v2380 = vpop.permute.xlu0 %2379
        %2381 = vrot.lane.b32.xlu0 %v2376, 112
        %v2382 = vpop.permute.xlu0 %2381
        %v2385 = vmul.f32 %v2372, %v2380
        %v2386 = vmul.f32 %v2374, %v2382
        %s2387 = scalar_lea.vmem %s6, 80
        %v2388 = vld [vmem:[%s2387] sm:$0xff]
        %v2389 = vld [vmem:[%s2387 + $0x8] sm:$0xff]
        %v2391 = vsel %vm651, %v2385, 0
        %v2394 = vsel %vm651, %v2386, 0
        %2396 = vmatprep.subr.mxu0 0.0
        %2397 = vmatpush1.msra.mxu0 %v2388
        %2398 = vmatprep.subr.mxu0 0.0
        %2399 = vmatpush1.msra.mxu0 %v2389
        %2400 = vmatprep.subr.mxu0 0.0
        %2401 = vmatpush1.msra.mxu0 0.0
        %2402 = vmatprep.subr.mxu0 0.0
        %2403 = vmatpush1.msra.mxu0 0.0
        %2404 = vmatprep.subr.mxu0 0.0
        %2405 = vmatpush1.msra.mxu0 0.0
        %2406 = vmatprep.subr.mxu0 0.0
        %2407 = vmatpush1.msra.mxu0 0.0
        %2408 = vmatprep.subr.mxu0 0.0
        %2409 = vmatpush1.msra.mxu0 0.0
        %2410 = vmatprep.subr.mxu0 0.0
        %2411 = vmatpush1.msra.mxu0 0.0
        %2412 = vmatprep.subr.mxu0 0.0
        %2413 = vmatpush1.msra.mxu0 0.0
        %2414 = vmatprep.subr.mxu0 0.0
        %2415 = vmatpush1.msra.mxu0 0.0
        %2416 = vmatprep.subr.mxu0 0.0
        %2417 = vmatpush1.msra.mxu0 0.0
        %2418 = vmatprep.subr.mxu0 0.0
        %2419 = vmatpush1.msra.mxu0 0.0
        %2420 = vmatprep.subr.mxu0 0.0
        %2421 = vmatpush1.msra.mxu0 0.0
        %2422 = vmatprep.subr.mxu0 0.0
        %2423 = vmatpush1.msra.mxu0 0.0
        %2424 = vmatprep.subr.mxu0 0.0
        %2425 = vmatpush1.msra.mxu0 0.0
        %2426 = vmatprep.subr.mxu0 0.0
        %2427 = vmatpush1.msra.mxu0 0.0
        %2428 = vmatprep.subr.mxu0 0.0
        %2429 = vmatpush1.msra.mxu0 0.0
        %2430 = vmatprep.subr.mxu0 0.0
        %2431 = vmatpush1.msra.mxu0 0.0
        %2432 = vmatprep.subr.mxu0 0.0
        %2433 = vmatpush1.msra.mxu0 0.0
        %2434 = vmatprep.subr.mxu0 0.0
        %2435 = vmatpush1.msra.mxu0 0.0
        %2436 = vmatprep.subr.mxu0 0.0
        %2437 = vmatpush1.msra.mxu0 0.0
        %2438 = vmatprep.subr.mxu0 0.0
        %2439 = vmatpush1.msra.mxu0 0.0
        %2440 = vmatprep.subr.mxu0 0.0
        %2441 = vmatpush1.msra.mxu0 0.0
        %2442 = vmatprep.subr.mxu0 0.0
        %2443 = vmatpush1.msra.mxu0 0.0
        %2444 = vmatprep.subr.mxu0 0.0
        %2445 = vmatpush1.msra.mxu0 0.0
        %2446 = vmatprep.subr.mxu0 0.0
        %2447 = vmatpush1.msra.mxu0 0.0
        %2448 = vmatprep.subr.mxu0 0.0
        %2449 = vmatpush1.msra.mxu0 0.0
        %2450 = vmatprep.subr.mxu0 0.0
        %2451 = vmatpush1.msra.mxu0 0.0
        %2452 = vmatprep.subr.mxu0 0.0
        %2453 = vmatpush1.msra.mxu0 0.0
        %2454 = vmatprep.subr.mxu0 0.0
        %2455 = vmatpush1.msra.mxu0 0.0
        %2456 = vmatprep.subr.mxu0 0.0
        %2457 = vmatpush1.msra.mxu0 0.0
        %2458 = vmatprep.subr.mxu0 0.0
        %2459 = vmatpush1.msra.mxu0 0.0
        %2460 = vmatprep.mubr.f32.mxu0 0.0
        %2461 = vmatmul.mubr.f32.gmra.mrb[0].mxu0 %v2391
        %v2462 = vpop.f32.mrb[0].mxu0
        %v2463 = vadd.f32 0.0, %v2462
        %v2464 = vpop.f32.mrb[0].mxu0
        %2465 = vmatprep.mubr.f32.mxu0 0.0
        %2466 = vmatmul.mubr.f32.gmra.mrb[0].mxu0 %v2394
        %v2467 = vpop.f32.mrb[0].mxu0
        %v2468 = vadd.f32 0.0, %v2467
        %v2469 = vpop.f32.mrb[0].mxu0
        %2470 = vdwg.mxu0
        %v2471 = vadd.f32 %v2158, %v2463
        %v2472 = vadd.f32 %v2159, %v2468
        %s2473 = scalar_lea.vmem %s7, 5
        %v2474 = vld [vmem:[%s2473] sm:$0x1]
        %v2476 = vlaneseq
        %v2477 = vshrl.u32 %v2476, 7
        %v2478 = vsub.s32 0, %v2477
        %v2479 = vrot.slane %v2474, %v2478
        %v2481 = vadd.f32 %v2471, %v2479
        %v2482 = vadd.f32 %v2472, %v2479
        %v2483 = vmax.f32 %v2481, 0.0
        %v2484 = vmax.f32 %v2482, 0.0
        %v2485 = vld [vmem:[%s10] sm:$0xff]
        %v2486 = vld [vmem:[%s10 + $0x8] sm:$0xff]
        %v2487 = vld [vmem:[%s11] sm:$0x1]
        %v2489 = vlaneseq
        %v2490 = vshrl.u32 %v2489, 7
        %v2491 = vsub.s32 0, %v2490
        %v2492 = vrot.slane %v2487, %v2491
        %v2495 = vsel %vm651, %v2483, 0
        %v2498 = vsel %vm651, %v2484, 0
        %2500 = vmatprep.subr.mxu0 0.0
        %2501 = vmatpush1.msra.mxu0 %v2485
        %2502 = vmatprep.subr.mxu0 0.0
        %2503 = vmatpush1.msra.mxu0 %v2486
        %2504 = vmatprep.subr.mxu0 0.0
        %2505 = vmatpush1.msra.mxu0 0.0
        %2506 = vmatprep.subr.mxu0 0.0
        %2507 = vmatpush1.msra.mxu0 0.0
        %2508 = vmatprep.subr.mxu0 0.0
        %2509 = vmatpush1.msra.mxu0 0.0
        %2510 = vmatprep.subr.mxu0 0.0
        %2511 = vmatpush1.msra.mxu0 0.0
        %2512 = vmatprep.subr.mxu0 0.0
        %2513 = vmatpush1.msra.mxu0 0.0
        %2514 = vmatprep.subr.mxu0 0.0
        %2515 = vmatpush1.msra.mxu0 0.0
        %2516 = vmatprep.subr.mxu0 0.0
        %2517 = vmatpush1.msra.mxu0 0.0
        %2518 = vmatprep.subr.mxu0 0.0
        %2519 = vmatpush1.msra.mxu0 0.0
        %2520 = vmatprep.subr.mxu0 0.0
        %2521 = vmatpush1.msra.mxu0 0.0
        %2522 = vmatprep.subr.mxu0 0.0
        %2523 = vmatpush1.msra.mxu0 0.0
        %2524 = vmatprep.subr.mxu0 0.0
        %2525 = vmatpush1.msra.mxu0 0.0
        %2526 = vmatprep.subr.mxu0 0.0
        %2527 = vmatpush1.msra.mxu0 0.0
        %2528 = vmatprep.subr.mxu0 0.0
        %2529 = vmatpush1.msra.mxu0 0.0
        %2530 = vmatprep.subr.mxu0 0.0
        %2531 = vmatpush1.msra.mxu0 0.0
        %2532 = vmatprep.subr.mxu0 0.0
        %2533 = vmatpush1.msra.mxu0 0.0
        %2534 = vmatprep.subr.mxu0 0.0
        %2535 = vmatpush1.msra.mxu0 0.0
        %2536 = vmatprep.subr.mxu0 0.0
        %2537 = vmatpush1.msra.mxu0 0.0
        %2538 = vmatprep.subr.mxu0 0.0
        %2539 = vmatpush1.msra.mxu0 0.0
        %2540 = vmatprep.subr.mxu0 0.0
        %2541 = vmatpush1.msra.mxu0 0.0
        %2542 = vmatprep.subr.mxu0 0.0
        %2543 = vmatpush1.msra.mxu0 0.0
        %2544 = vmatprep.subr.mxu0 0.0
        %2545 = vmatpush1.msra.mxu0 0.0
        %2546 = vmatprep.subr.mxu0 0.0
        %2547 = vmatpush1.msra.mxu0 0.0
        %2548 = vmatprep.subr.mxu0 0.0
        %2549 = vmatpush1.msra.mxu0 0.0
        %2550 = vmatprep.subr.mxu0 0.0
        %2551 = vmatpush1.msra.mxu0 0.0
        %2552 = vmatprep.subr.mxu0 0.0
        %2553 = vmatpush1.msra.mxu0 0.0
        %2554 = vmatprep.subr.mxu0 0.0
        %2555 = vmatpush1.msra.mxu0 0.0
        %2556 = vmatprep.subr.mxu0 0.0
        %2557 = vmatpush1.msra.mxu0 0.0
        %2558 = vmatprep.subr.mxu0 0.0
        %2559 = vmatpush1.msra.mxu0 0.0
        %2560 = vmatprep.subr.mxu0 0.0
        %2561 = vmatpush1.msra.mxu0 0.0
        %2562 = vmatprep.subr.mxu0 0.0
        %2563 = vmatpush1.msra.mxu0 0.0
        %2564 = vmatprep.mubr.f32.mxu0 0.0
        %2565 = vmatmul.mubr.f32.gmra.mrb[0].mxu0 %v2495
        %v2566 = vpop.f32.mrb[0].mxu0
        %v2567 = vadd.f32 %v2492, %v2566
        %v2568 = vpop.f32.mrb[0].mxu0
        %2569 = vmatprep.mubr.f32.mxu0 0.0
        %2570 = vmatmul.mubr.f32.gmra.mrb[0].mxu0 %v2498
        %v2571 = vpop.f32.mrb[0].mxu0
        %v2572 = vadd.f32 %v2492, %v2571
        %v2573 = vpop.f32.mrb[0].mxu0
        %2574 = vdwg.mxu0
        %v2575 = vmax.f32 %v2567, 0.0
        %v2576 = vmax.f32 %v2572, 0.0
        %v2577 = vld [vmem:[%s12] sm:$0xff]
        %v2578 = vld [vmem:[%s12 + $0x8] sm:$0xff]
        %v2579 = vld [vmem:[%s13] sm:$0x1]
        %v2581 = vlaneseq
        %v2582 = vshrl.u32 %v2581, 7
        %v2583 = vsub.s32 0, %v2582
        %v2584 = vrot.slane %v2579, %v2583
        %v2587 = vsel %vm651, %v2575, 0
        %v2590 = vsel %vm651, %v2576, 0
        %2592 = vmatprep.subr.mxu0 0.0
        %2593 = vmatpush1.msra.mxu0 %v2577
        %2594 = vmatprep.subr.mxu0 0.0
        %2595 = vmatpush1.msra.mxu0 %v2578
        %2596 = vmatprep.subr.mxu0 0.0
        %2597 = vmatpush1.msra.mxu0 0.0
        %2598 = vmatprep.subr.mxu0 0.0
        %2599 = vmatpush1.msra.mxu0 0.0
        %2600 = vmatprep.subr.mxu0 0.0
        %2601 = vmatpush1.msra.mxu0 0.0
        %2602 = vmatprep.subr.mxu0 0.0
        %2603 = vmatpush1.msra.mxu0 0.0
        %2604 = vmatprep.subr.mxu0 0.0
        %2605 = vmatpush1.msra.mxu0 0.0
        %2606 = vmatprep.subr.mxu0 0.0
        %2607 = vmatpush1.msra.mxu0 0.0
        %2608 = vmatprep.subr.mxu0 0.0
        %2609 = vmatpush1.msra.mxu0 0.0
        %2610 = vmatprep.subr.mxu0 0.0
        %2611 = vmatpush1.msra.mxu0 0.0
        %2612 = vmatprep.subr.mxu0 0.0
        %2613 = vmatpush1.msra.mxu0 0.0
        %2614 = vmatprep.subr.mxu0 0.0
        %2615 = vmatpush1.msra.mxu0 0.0
        %2616 = vmatprep.subr.mxu0 0.0
        %2617 = vmatpush1.msra.mxu0 0.0
        %2618 = vmatprep.subr.mxu0 0.0
        %2619 = vmatpush1.msra.mxu0 0.0
        %2620 = vmatprep.subr.mxu0 0.0
        %2621 = vmatpush1.msra.mxu0 0.0
        %2622 = vmatprep.subr.mxu0 0.0
        %2623 = vmatpush1.msra.mxu0 0.0
        %2624 = vmatprep.subr.mxu0 0.0
        %2625 = vmatpush1.msra.mxu0 0.0
        %2626 = vmatprep.subr.mxu0 0.0
        %2627 = vmatpush1.msra.mxu0 0.0
        %2628 = vmatprep.subr.mxu0 0.0
        %2629 = vmatpush1.msra.mxu0 0.0
        %2630 = vmatprep.subr.mxu0 0.0
        %2631 = vmatpush1.msra.mxu0 0.0
        %2632 = vmatprep.subr.mxu0 0.0
        %2633 = vmatpush1.msra.mxu0 0.0
        %2634 = vmatprep.subr.mxu0 0.0
        %2635 = vmatpush1.msra.mxu0 0.0
        %2636 = vmatprep.subr.mxu0 0.0
        %2637 = vmatpush1.msra.mxu0 0.0
        %2638 = vmatprep.subr.mxu0 0.0
        %2639 = vmatpush1.msra.mxu0 0.0
        %2640 = vmatprep.subr.mxu0 0.0
        %2641 = vmatpush1.msra.mxu0 0.0
        %2642 = vmatprep.subr.mxu0 0.0
        %2643 = vmatpush1.msra.mxu0 0.0
        %2644 = vmatprep.subr.mxu0 0.0
        %2645 = vmatpush1.msra.mxu0 0.0
        %2646 = vmatprep.subr.mxu0 0.0
        %2647 = vmatpush1.msra.mxu0 0.0
        %2648 = vmatprep.subr.mxu0 0.0
        %2649 = vmatpush1.msra.mxu0 0.0
        %2650 = vmatprep.subr.mxu0 0.0
        %2651 = vmatpush1.msra.mxu0 0.0
        %2652 = vmatprep.subr.mxu0 0.0
        %2653 = vmatpush1.msra.mxu0 0.0
        %2654 = vmatprep.subr.mxu0 0.0
        %2655 = vmatpush1.msra.mxu0 0.0
        %2656 = vmatprep.mubr.f32.mxu0 0.0
        %2657 = vmatmul.mubr.f32.gmra.mrb[0].mxu0 %v2587
        %v2658 = vpop.f32.mrb[0].mxu0
        %v2659 = vadd.f32 %v2584, %v2658
        %v2660 = vpop.f32.mrb[0].mxu0
        %2661 = vmatprep.mubr.f32.mxu0 0.0
        %2662 = vmatmul.mubr.f32.gmra.mrb[0].mxu0 %v2590
        %v2663 = vpop.f32.mrb[0].mxu0
        %v2664 = vadd.f32 %v2584, %v2663
        %v2665 = vpop.f32.mrb[0].mxu0
        %2666 = vdwg.mxu0
        %2667 = vst.msk [vmem:[%s477] sm:$0xff] %vm527, %v2659
        %2668 = vst.msk [vmem:[%s477 + $0x8] sm:$0xff] %vm527, %v2664
        %s2669 = sand.u32 %s340, 1
        %s2670 = scalar_lea.sflag [#allocation3], %s2669
        %s2671 = sand.u32 %s340, 1
        %s2672 = smul.addr %s2671, 16
        %s2673 = scalar_lea.vmem [#allocation2], %s2672
        // Predicated region
        $region77: #{tpu_custom_call.1} parent=75 // pred_check
          %p2674 = pneg %p350
        $region78: #{tpu_custom_call.1} parent=75 // pred_check_branch
          %2676 = sbr.rel (%p2674) target = $region80
        $region79: #{tpu_custom_call.1} parent=75 // pred_region
          %s2677 = smul.u32 2, %s28
          %s2679 = ssub.s32 256, 256
          %2680 = vsyncadd %s2670, %s2679
          %s2681 = smul.addr %s2677, 128
          %s2682 = scalar_lea.hbm %s14, %s2681
          %s2683 = sshll.u32 %s2673, 4
          %s2684 = int_to_ptr.vmem [resolvable:$true] %s2683
          %2689 = dma.vmem_to_hbm [thread:$0]  %s2684, 256, %s2682, %s2670, 128, 128, 8
        $region80: #{tpu_custom_call.1} parent=75 // pred_fallthru
          _
      $region76: #{tpu_custom_call.1} parent=5 // pred_fallthru
        _
      %p2690 = scmp.le.s32.totalorder 2, %s23
      // Predicated region
      $region81: #{tpu_custom_call.1} parent=5 // pred_check
        %p2691 = pneg %p2690
      $region82: #{tpu_custom_call.1} parent=5 // pred_check_branch
        %2693 = sbr.rel (%p2691) target = $region84
      $region83: #{tpu_custom_call.1} parent=5 // pred_region
        %s2694 = ssub.s32 %s23, 2
        // Predicated region
        $region85: #{tpu_custom_call.1} parent=83 // pred_check
          %p2695 = pneg %p356
        $region86: #{tpu_custom_call.1} parent=83 // pred_check_branch
          %2697 = sbr.rel (%p2695) target = $region88
        $region87: #{tpu_custom_call.1} parent=83 // pred_region
          %s2698 = sand.u32 %s341, 1
          %s2699 = scalar_lea.sflag [#allocation3], %s2698
          %s2700 = sand.u32 %s341, 1
          %s2701 = smul.addr %s2700, 16
          %s2702 = scalar_lea.vmem [#allocation2], %s2701
          %2703 = dma.done %s2699, 256
        $region88: #{tpu_custom_call.1} parent=83 // pred_fallthru
          _
      $region84: #{tpu_custom_call.1} parent=5 // pred_fallthru
        _
    $region6: #{tpu_custom_call.1} parent=1 // loop_footer
      %s27 = sadd.s32 1, %s23
    $region7: #{tpu_custom_call.1} parent=1 // loop_footer_branch
      %22 = sbr.rel target = $region3
    $region8: #{tpu_custom_call.1} parent=1 // loop_exit
      _
    %2704 = vsyncpa [#allocation3], 1
    %s2705 = scalar_lea.sflag [#allocation3], 1
    %2706 = vsyncpa %s2705, 1

</llo_original>
